<compile_context>
chip_gen: v5e
topology: v5e:2x2
jax: 0.10.0
libtpu: 0.0.40
codegen_flags: <defaults>
</compile_context>

<pallas_src>
import functools

import jax
import jax.numpy as jnp
from jax import lax
from jax.experimental import pallas as pl
from jax.experimental.pallas import tpu as pltpu


def _round_up(x, m):
    return (x + m - 1) // m * m


def _pick_time_chunk(T, B_pad, H_pad, vmem_budget_bytes=8 << 20, max_chunk=16):
    # Double-buffered input chunk: 2 * Tc * B_pad * 3*H_pad * 4 bytes.
    bytes_per_step = B_pad * 3 * H_pad * 4
    tc = max(1, vmem_budget_bytes // (2 * bytes_per_step))
    return int(min(tc, T, max_chunk))


# ----------------------------------------------------------------------------
# Fused multi-layer GRU kernel.
#   grid axis 0 = time chunks (sequential recurrence -> "arbitrary")
#   per-layer hidden-state carries live in a VMEM scratch across grid steps
# ----------------------------------------------------------------------------
def fused_gru_kernel(num_layers, H, xproj_ref, len_ref, *args):
    # args = [whh_0, bhh_0, (wih_l, bih_l, whh_l, bhh_l) for l = 1..L-1,
    #         out_ref, h_scratch]
    n_w = 2 + 4 * (num_layers - 1)
    w_refs = args[:n_w]
    out_ref = args[n_w]
    h_ref = args[n_w + 1]                      # VMEM scratch (L, B, H)

    Tc = xproj_ref.shape[0]
    chunk = pl.program_id(0)

    @pl.when(chunk == 0)
    def _init():
        h_ref[...] = jnp.zeros_like(h_ref)

    lens = len_ref[...]                        # (B, 1) int32
    t_base = chunk * Tc

    # Hoist all weight loads out of the recurrent loop.
    whh = [w_refs[0][...]]
    bhh = [w_refs[1][...]]
    wih = [None]
    bih = [None]
    i = 2
    for _ in range(1, num_layers):
        wih.append(w_refs[i][...])
        bih.append(w_refs[i + 1][...])
        whh.append(w_refs[i + 2][...])
        bhh.append(w_refs[i + 3][...])
        i += 4

    def gru_cell(gx, h, l):
        # gx already contains x @ W_ih + b_ih for the packed [r|z|n] slab.
        gh = jnp.dot(h, whh[l], preferred_element_type=jnp.float32) + bhh[l]
        r = jax.nn.sigmoid(gx[:, :H] + gh[:, :H])
        z = jax.nn.sigmoid(gx[:, H:2 * H] + gh[:, H:2 * H])
        n = jnp.tanh(gx[:, 2 * H:] + r * gh[:, 2 * H:])
        return (1.0 - z) * n + z * h

    def step(t, hs):
        # Packed-sequence semantics: carries stop updating once t >= length,
        # so after the loop each carry equals the hidden state at t = len - 1,
        # i.e. exactly torch.gather(padded, 1, lengths - 1).
        valid = (t_base + t) < lens            # (B, 1) bool
        gx0 = xproj_ref[t]                     # (B, 3H) layer-0 slab (bias incl.)
        x_in = gru_cell(gx0, hs[0], 0)
        new_hs = [jnp.where(valid, x_in, hs[0])]
        for l in range(1, num_layers):
            gxl = jnp.dot(x_in, wih[l],
                          preferred_element_type=jnp.float32) + bih[l]
            h_new = gru_cell(gxl, hs[l], l)
            new_hs.append(jnp.where(valid, h_new, hs[l]))
            x_in = h_new
        return tuple(new_hs)

    init = tuple(h_ref[l] for l in range(num_layers))
    final = lax.fori_loop(0, Tc, step, init, unroll=True)

    for l in range(num_layers):
        h_ref[l] = final[l]

    @pl.when(chunk == pl.num_programs(0) - 1)
    def _finalize():
        h_last = final[num_layers - 1]
        ssq = jnp.sum(h_last * h_last, axis=1, keepdims=True)
        # Matches torch l2norm exactly (no epsilon): zero rows -> NaN, as in torch.
        out_ref[...] = h_last * lax.rsqrt(ssq)


# ----------------------------------------------------------------------------
# Wrapper: embedding lookup + hoisted layer-0 projection in XLA, then one
# pallas_call for the whole stacked GRU.
# ----------------------------------------------------------------------------
def encoder_text_forward(params, token_ids, lengths, use_abs=False,
                         time_chunk=None):
    layers = params["gru"]
    num_layers = len(layers)
    B, T = token_ids.shape
    H = layers[0][1].shape[-1]                 # whh: (3, H, H)
    D = layers[0][0].shape[1]                  # wih0: (3, D, H)

    H_pad = _round_up(H, 128)                  # lane-dense gate slabs
    B_pad = _round_up(B, 8)                    # sublane-dense batch
    Tc = time_chunk if time_chunk else _pick_time_chunk(T, B_pad, H_pad)
    Tc = max(1, min(Tc, T))
    T_pad = _round_up(T, Tc)
    n_chunks = T_pad // Tc

    # Embedding lookup (XLA gather) + time-major layout.
    emb = jnp.take(params["embed"], token_ids, axis=0)            # (B, T, D)
    x = jnp.transpose(emb, (1, 0, 2)).astype(jnp.float32)         # (T, B, D)

    def pack_w(w):   # (3, Hin, H) -> (Hin_pad, 3*H_pad), per-gate zero padding
        w = jnp.pad(w, ((0, 0), (0, H_pad - w.shape[1]), (0, H_pad - w.shape[2])))
        return jnp.transpose(w, (1, 0, 2)).reshape(H_pad, 3 * H_pad)

    def pack_w_in0(w):   # (3, D, H) -> (D, 3*H_pad)  (layer-0 input projection)
        w = jnp.pad(w, ((0, 0), (0, 0), (0, H_pad - w.shape[2])))
        return jnp.transpose(w, (1, 0, 2)).reshape(w.shape[1], 3 * H_pad)

    def pack_b(b):   # (3, H) -> (1, 3*H_pad)
        b = jnp.pad(b, ((0, 0), (0, H_pad - b.shape[1])))
        return b.reshape(1, 3 * H_pad)

    # Hoisted layer-0 input projection: one flat MXU matmul, gates packed [r|z|n].
    wih0, whh0, bih0, bhh0 = layers[0]
    xp = x.reshape(T * B, D) @ pack_w_in0(wih0) + pack_b(bih0)    # (T*B, 3*H_pad)
    xp = xp.reshape(T, B, 3 * H_pad)
    xp = jnp.pad(xp, ((0, T_pad - T), (0, B_pad - B), (0, 0))).astype(jnp.float32)

    lens = jnp.pad(lengths.astype(jnp.int32), (0, B_pad - B),
                   constant_values=1).reshape(B_pad, 1)

    weight_args = [pack_w(whh0), pack_b(bhh0)]
    for l in range(1, num_layers):
        wih, whh, bih, bhh = layers[l]
        weight_args += [pack_w(wih), pack_b(bih), pack_w(whh), pack_b(bhh)]
    # TODO(synk): for production v6e/v7x sizes, cast packed weights (and xp) to
    # bfloat16 for full-rate MXU and halved VMEM; accumulation stays f32 via
    # preferred_element_type. Kept f32 here to match the f32 reference tightly.

    kernel = functools.partial(fused_gru_kernel, num_layers, H_pad)

    in_specs = [
        pl.BlockSpec((Tc, B_pad, 3 * H_pad), lambda c: (c, 0, 0)),
        pl.BlockSpec((B_pad, 1), lambda c: (0, 0)),
    ] + [pl.BlockSpec(w.shape, lambda c: (0, 0)) for w in weight_args]

    out = pl.pallas_call(
        kernel,
        grid=(n_chunks,),
        in_specs=in_specs,
        out_specs=pl.BlockSpec((B_pad, H_pad), lambda c: (0, 0)),
        out_shape=jax.ShapeDtypeStruct((B_pad, H_pad), jnp.float32),
        scratch_shapes=[pltpu.VMEM((num_layers, B_pad, H_pad), jnp.float32)],
        compiler_params=pltpu.CompilerParams(
            dimension_semantics=("arbitrary",)),
    )(xp, lens, *weight_args)

    out = out[:B, :H]
    if use_abs:
        out = jnp.abs(out)
    return out


# ----------------------------------------------------------------------------
# Parameter init (shapes matching the torch module: uniform(-0.1,0.1) embedding,
# U(-1/sqrt(H), 1/sqrt(H)) GRU weights).
# ----------------------------------------------------------------------------
def init_params(key, vocab_size, word_dim, embed_size, num_layers):
    keys = jax.random.split(key, 1 + 4 * num_layers)
    params = {"embed": jax.random.uniform(
        keys[0], (vocab_size, word_dim), jnp.float32, -0.1, 0.1)}
    k = 1.0 / jnp.sqrt(embed_size)
    layers = []
    for l in range(num_layers):
        din = word_dim if l == 0 else embed_size
        kw = keys[1 + 4 * l: 1 + 4 * (l + 1)]
        wih = jax.random.uniform(kw[0], (3, din, embed_size), jnp.float32, -k, k)
        whh = jax.random.uniform(kw[1], (3, embed_size, embed_size), jnp.float32, -k, k)
        bih = jax.random.uniform(kw[2], (3, embed_size), jnp.float32, -k, k)
        bhh = jax.random.uniform(kw[3], (3, embed_size), jnp.float32, -k, k)
        layers.append((wih, whh, bih, bhh))
    params["gru"] = layers
    return params


# ----------------------------------------------------------------------------
# Pure-JAX reference (same math) for correctness checking.
# ----------------------------------------------------------------------------
def reference_forward(params, token_ids, lengths, use_abs=False):
    emb = jnp.take(params["embed"], token_ids, axis=0)
    x = jnp.transpose(emb, (1, 0, 2)).astype(jnp.float32)     # (T, B, D)
    lens = lengths.astype(jnp.int32).reshape(-1, 1)
    T = x.shape[0]
    last = None
    for (wih, whh, bih, bhh) in params["gru"]:
        B = x.shape[1]
        H = whh.shape[-1]
        h = jnp.zeros((B, H), jnp.float32)
        outs = []
        for t in range(T):
            x_t = x[t]
            r = jax.nn.sigmoid(x_t @ wih[0] + bih[0] + h @ whh[0] + bhh[0])
            z = jax.nn.sigmoid(x_t @ wih[1] + bih[1] + h @ whh[1] + bhh[1])
            n = jnp.tanh(x_t @ wih[2] + bih[2] + r * (h @ whh[2] + bhh[2]))
            h_new = (1.0 - z) * n + z * h
            outs.append(h_new)
            h = jnp.where(t < lens, h_new, h)
        x = jnp.stack(outs, axis=0)
        last = h
    norm = jnp.sqrt(jnp.sum(last * last, axis=1, keepdims=True))
    out = last / norm
    if use_abs:
        out = jnp.abs(out)
    return out


if __name__ == "__main__":
    # Small shapes: batch=2, seq=8, vocab=50, word_dim=32, embed_size=32, layers=2.
    vocab_size, word_dim, embed_size, num_layers = 50, 32, 32, 2
    B, T = 2, 8

    key = jax.random.PRNGKey(0)
    pkey, xkey = jax.random.split(key)
    params = init_params(pkey, vocab_size, word_dim, embed_size, num_layers)

    token_ids = jax.random.randint(xkey, (B, T), 0, vocab_size, dtype=jnp.int32)
    lengths = jnp.array([8, 5], dtype=jnp.int32)   # pack_padded convention

    out = jax.block_until_ready(
        encoder_text_forward(params, token_ids, lengths, use_abs=False))
    ref = jax.block_until_ready(reference_forward(params, token_ids, lengths))

    assert out.shape == (B, embed_size), out.shape
    assert bool(jnp.all(jnp.isfinite(out)))
    assert bool(jnp.allclose(out, ref, rtol=1e-4, atol=1e-4)), (
        f"max err {float(jnp.max(jnp.abs(out - ref)))}")
    assert bool(jnp.allclose(jnp.sum(out * out, axis=1), 1.0, atol=1e-4))

    print("KERNEL_OK")
</pallas_src>

<mosaic_0001>
module attributes {stable_mosaic.version = 11 : i64} {
  func.func @fused_gru_kernel(%arg0: i32, %arg1: memref<8x8x384xf32, #tpu.memory_space<vmem>>, %arg2: memref<8x1xi32, #tpu.memory_space<vmem>>, %arg3: memref<128x384xf32, #tpu.memory_space<vmem>>, %arg4: memref<1x384xf32, #tpu.memory_space<vmem>>, %arg5: memref<128x384xf32, #tpu.memory_space<vmem>>, %arg6: memref<1x384xf32, #tpu.memory_space<vmem>>, %arg7: memref<128x384xf32, #tpu.memory_space<vmem>>, %arg8: memref<1x384xf32, #tpu.memory_space<vmem>>, %arg9: memref<8x128xf32, #tpu.memory_space<vmem>>, %arg10: memref<2x8x128xf32, #tpu.memory_space<vmem>>) attributes {dimension_semantics = [#tpu.dimension_semantics<arbitrary>], iteration_bounds = array<i64: 1>, scalar_prefetch = 0 : i64, scratch_operands = 1 : i64, tpu.core_type = #tpu.core_type<tc>, window_params = [{transform_indices = @transform_0, window_bounds = array<i64: 8, 8, 384>}, {pipeline_mode = #tpu.pipeline_mode<synchronous>, transform_indices = @transform_1, window_bounds = array<i64: 8, 1>}, {pipeline_mode = #tpu.pipeline_mode<synchronous>, transform_indices = @transform_2, window_bounds = array<i64: 128, 384>}, {pipeline_mode = #tpu.pipeline_mode<synchronous>, transform_indices = @transform_3, window_bounds = array<i64: 1, 384>}, {pipeline_mode = #tpu.pipeline_mode<synchronous>, transform_indices = @transform_4, window_bounds = array<i64: 128, 384>}, {pipeline_mode = #tpu.pipeline_mode<synchronous>, transform_indices = @transform_5, window_bounds = array<i64: 1, 384>}, {pipeline_mode = #tpu.pipeline_mode<synchronous>, transform_indices = @transform_6, window_bounds = array<i64: 128, 384>}, {pipeline_mode = #tpu.pipeline_mode<synchronous>, transform_indices = @transform_7, window_bounds = array<i64: 1, 384>}, {pipeline_mode = #tpu.pipeline_mode<synchronous>, transform_indices = @transform_8, window_bounds = array<i64: 8, 128>}]} {
    %c0_i32 = arith.constant 0 : i32
    %0 = arith.cmpi eq, %arg0, %c0_i32 : i32
    %1 = arith.extui %0 : i1 to i32
    %c0_i32_0 = arith.constant 0 : i32
    %2 = arith.cmpi ne, %1, %c0_i32_0 : i32
    scf.if %2 {
      %cst_116 = arith.constant 0.000000e+00 : f32
      %608 = vector.broadcast %cst_116 : f32 to vector<2x8x128xf32>
      %c0_117 = arith.constant 0 : index
      %c0_118 = arith.constant 0 : index
      %c0_119 = arith.constant 0 : index
      %609 = vector.load %arg10[%c0_117, %c0_118, %c0_119] : memref<2x8x128xf32, #tpu.memory_space<vmem>>, vector<2x8x128xf32>
      tpu.vector_store %arg10[%c0_117, %c0_118, %c0_119], %608 {strides = array<i32>} : memref<2x8x128xf32, #tpu.memory_space<vmem>>, vector<2x8x128xf32>,
    } else {
    }
    %c0 = arith.constant 0 : index
    %c0_1 = arith.constant 0 : index
    %3 = vector.load %arg2[%c0, %c0_1] : memref<8x1xi32, #tpu.memory_space<vmem>>, vector<8x1xi32>
    %c8_i32 = arith.constant 8 : i32
    %4 = arith.muli %arg0, %c8_i32 : i32
    %c0_2 = arith.constant 0 : index
    %c0_3 = arith.constant 0 : index
    %5 = vector.load %arg3[%c0_2, %c0_3] : memref<128x384xf32, #tpu.memory_space<vmem>>, vector<128x384xf32>
    %c0_4 = arith.constant 0 : index
    %c0_5 = arith.constant 0 : index
    %6 = vector.load %arg4[%c0_4, %c0_5] : memref<1x384xf32, #tpu.memory_space<vmem>>, vector<1x384xf32>
    %c0_6 = arith.constant 0 : index
    %c0_7 = arith.constant 0 : index
    %7 = vector.load %arg5[%c0_6, %c0_7] : memref<128x384xf32, #tpu.memory_space<vmem>>, vector<128x384xf32>
    %c0_8 = arith.constant 0 : index
    %c0_9 = arith.constant 0 : index
    %8 = vector.load %arg6[%c0_8, %c0_9] : memref<1x384xf32, #tpu.memory_space<vmem>>, vector<1x384xf32>
    %c0_10 = arith.constant 0 : index
    %c0_11 = arith.constant 0 : index
    %9 = vector.load %arg7[%c0_10, %c0_11] : memref<128x384xf32, #tpu.memory_space<vmem>>, vector<128x384xf32>
    %c0_12 = arith.constant 0 : index
    %c0_13 = arith.constant 0 : index
    %10 = vector.load %arg8[%c0_12, %c0_13] : memref<1x384xf32, #tpu.memory_space<vmem>>, vector<1x384xf32>
    %c0_14 = arith.constant 0 : index
    %c0_15 = arith.constant 0 : index
    %c0_16 = arith.constant 0 : index
    %11 = vector.load %arg10[%c0_14, %c0_15, %c0_16] : memref<2x8x128xf32, #tpu.memory_space<vmem>>, vector<1x8x128xf32>
    %12 = vector.shape_cast %11 : vector<1x8x128xf32> to vector<8x128xf32>
    %c1 = arith.constant 1 : index
    %c0_17 = arith.constant 0 : index
    %c0_18 = arith.constant 0 : index
    %13 = vector.load %arg10[%c1, %c0_17, %c0_18] : memref<2x8x128xf32, #tpu.memory_space<vmem>>, vector<1x8x128xf32>
    %14 = vector.shape_cast %13 : vector<1x8x128xf32> to vector<8x128xf32>
    %c0_i32_19 = arith.constant 0 : i32
    %15 = arith.addi %4, %c0_i32_19 : i32
    %16 = vector.broadcast %15 : i32 to vector<8x1xi32>
    %17 = arith.cmpi slt, %16, %3 : vector<8x1xi32>
    %18 = arith.index_cast %c0_i32_19 : i32 to index
    %c0_20 = arith.constant 0 : index
    %c0_21 = arith.constant 0 : index
    %19 = vector.load %arg1[%18, %c0_20, %c0_21] : memref<8x8x384xf32, #tpu.memory_space<vmem>>, vector<1x8x384xf32>
    %20 = vector.shape_cast %19 : vector<1x8x384xf32> to vector<8x384xf32>
    %cst = arith.constant dense<0.000000e+00> : vector<8x384xf32>
    %21 = tpu.matmul %12, %5, %cst {dimension_numbers = #tpu.dot_dimension_numbers<[1], [0], [0], [1], [0, 0, 1, 1], [], []>} : vector<8x128xf32>, vector<128x384xf32>, vector<8x384xf32> -> vector<8x384xf32>
    %22 = vector.broadcast %6 : vector<1x384xf32> to vector<8x384xf32>
    %23 = arith.addf %21, %22 : vector<8x384xf32>
    %24 = vector.extract_strided_slice %20 {offsets = [0, 0], sizes = [8, 128], strides = [1, 1]} : vector<8x384xf32> to vector<8x128xf32>
    %25 = vector.extract_strided_slice %23 {offsets = [0, 0], sizes = [8, 128], strides = [1, 1]} : vector<8x384xf32> to vector<8x128xf32>
    %26 = arith.addf %24, %25 : vector<8x128xf32>
    %27 = arith.negf %26 : vector<8x128xf32>
    %28 = math.exp %27 : vector<8x128xf32>
    %cst_22 = arith.constant 1.000000e+00 : f32
    %29 = vector.broadcast %cst_22 : f32 to vector<8x128xf32>
    %30 = arith.addf %29, %28 : vector<8x128xf32>
    %31 = arith.divf %29, %30 : vector<8x128xf32>
    %32 = vector.extract_strided_slice %20 {offsets = [0, 128], sizes = [8, 128], strides = [1, 1]} : vector<8x384xf32> to vector<8x128xf32>
    %33 = vector.extract_strided_slice %23 {offsets = [0, 128], sizes = [8, 128], strides = [1, 1]} : vector<8x384xf32> to vector<8x128xf32>
    %34 = arith.addf %32, %33 : vector<8x128xf32>
    %35 = arith.negf %34 : vector<8x128xf32>
    %36 = math.exp %35 : vector<8x128xf32>
    %cst_23 = arith.constant 1.000000e+00 : f32
    %37 = vector.broadcast %cst_23 : f32 to vector<8x128xf32>
    %38 = arith.addf %37, %36 : vector<8x128xf32>
    %39 = arith.divf %37, %38 : vector<8x128xf32>
    %40 = vector.extract_strided_slice %20 {offsets = [0, 256], sizes = [8, 128], strides = [1, 1]} : vector<8x384xf32> to vector<8x128xf32>
    %41 = vector.extract_strided_slice %23 {offsets = [0, 256], sizes = [8, 128], strides = [1, 1]} : vector<8x384xf32> to vector<8x128xf32>
    %42 = arith.mulf %31, %41 : vector<8x128xf32>
    %43 = arith.addf %40, %42 : vector<8x128xf32>
    %44 = math.tanh %43 : vector<8x128xf32>
    %cst_24 = arith.constant 1.000000e+00 : f32
    %45 = vector.broadcast %cst_24 : f32 to vector<8x128xf32>
    %46 = arith.subf %45, %39 : vector<8x128xf32>
    %47 = arith.mulf %46, %44 : vector<8x128xf32>
    %48 = arith.mulf %39, %12 : vector<8x128xf32>
    %49 = arith.addf %47, %48 : vector<8x128xf32>
    %50 = vector.shape_cast %17 : vector<8x1xi1> to vector<8x1xi1>
    %51 = vector.broadcast %50 : vector<8x1xi1> to vector<8x128xi1>
    %52 = arith.select %51, %49, %12 : vector<8x128xi1>, vector<8x128xf32>
    %cst_25 = arith.constant dense<0.000000e+00> : vector<8x384xf32>
    %53 = tpu.matmul %49, %7, %cst_25 {dimension_numbers = #tpu.dot_dimension_numbers<[1], [0], [0], [1], [0, 0, 1, 1], [], []>} : vector<8x128xf32>, vector<128x384xf32>, vector<8x384xf32> -> vector<8x384xf32>
    %54 = vector.broadcast %8 : vector<1x384xf32> to vector<8x384xf32>
    %55 = arith.addf %53, %54 : vector<8x384xf32>
    %cst_26 = arith.constant dense<0.000000e+00> : vector<8x384xf32>
    %56 = tpu.matmul %14, %9, %cst_26 {dimension_numbers = #tpu.dot_dimension_numbers<[1], [0], [0], [1], [0, 0, 1, 1], [], []>} : vector<8x128xf32>, vector<128x384xf32>, vector<8x384xf32> -> vector<8x384xf32>
    %57 = vector.broadcast %10 : vector<1x384xf32> to vector<8x384xf32>
    %58 = arith.addf %56, %57 : vector<8x384xf32>
    %59 = vector.extract_strided_slice %55 {offsets = [0, 0], sizes = [8, 128], strides = [1, 1]} : vector<8x384xf32> to vector<8x128xf32>
    %60 = vector.extract_strided_slice %58 {offsets = [0, 0], sizes = [8, 128], strides = [1, 1]} : vector<8x384xf32> to vector<8x128xf32>
    %61 = arith.addf %59, %60 : vector<8x128xf32>
    %62 = arith.negf %61 : vector<8x128xf32>
    %63 = math.exp %62 : vector<8x128xf32>
    %cst_27 = arith.constant 1.000000e+00 : f32
    %64 = vector.broadcast %cst_27 : f32 to vector<8x128xf32>
    %65 = arith.addf %64, %63 : vector<8x128xf32>
    %66 = arith.divf %64, %65 : vector<8x128xf32>
    %67 = vector.extract_strided_slice %55 {offsets = [0, 128], sizes = [8, 128], strides = [1, 1]} : vector<8x384xf32> to vector<8x128xf32>
    %68 = vector.extract_strided_slice %58 {offsets = [0, 128], sizes = [8, 128], strides = [1, 1]} : vector<8x384xf32> to vector<8x128xf32>
    %69 = arith.addf %67, %68 : vector<8x128xf32>
    %70 = arith.negf %69 : vector<8x128xf32>
    %71 = math.exp %70 : vector<8x128xf32>
    %cst_28 = arith.constant 1.000000e+00 : f32
    %72 = vector.broadcast %cst_28 : f32 to vector<8x128xf32>
    %73 = arith.addf %72, %71 : vector<8x128xf32>
    %74 = arith.divf %72, %73 : vector<8x128xf32>
    %75 = vector.extract_strided_slice %55 {offsets = [0, 256], sizes = [8, 128], strides = [1, 1]} : vector<8x384xf32> to vector<8x128xf32>
    %76 = vector.extract_strided_slice %58 {offsets = [0, 256], sizes = [8, 128], strides = [1, 1]} : vector<8x384xf32> to vector<8x128xf32>
    %77 = arith.mulf %66, %76 : vector<8x128xf32>
    %78 = arith.addf %75, %77 : vector<8x128xf32>
    %79 = math.tanh %78 : vector<8x128xf32>
    %cst_29 = arith.constant 1.000000e+00 : f32
    %80 = vector.broadcast %cst_29 : f32 to vector<8x128xf32>
    %81 = arith.subf %80, %74 : vector<8x128xf32>
    %82 = arith.mulf %81, %79 : vector<8x128xf32>
    %83 = arith.mulf %74, %14 : vector<8x128xf32>
    %84 = arith.addf %82, %83 : vector<8x128xf32>
    %85 = vector.shape_cast %17 : vector<8x1xi1> to vector<8x1xi1>
    %86 = vector.broadcast %85 : vector<8x1xi1> to vector<8x128xi1>
    %87 = arith.select %86, %84, %14 : vector<8x128xi1>, vector<8x128xf32>
    %c1_i32 = arith.constant 1 : i32
    %88 = arith.addi %4, %c1_i32 : i32
    %89 = vector.broadcast %88 : i32 to vector<8x1xi32>
    %90 = arith.cmpi slt, %89, %3 : vector<8x1xi32>
    %91 = arith.index_cast %c1_i32 : i32 to index
    %c0_30 = arith.constant 0 : index
    %c0_31 = arith.constant 0 : index
    %92 = vector.load %arg1[%91, %c0_30, %c0_31] : memref<8x8x384xf32, #tpu.memory_space<vmem>>, vector<1x8x384xf32>
    %93 = vector.shape_cast %92 : vector<1x8x384xf32> to vector<8x384xf32>
    %cst_32 = arith.constant dense<0.000000e+00> : vector<8x384xf32>
    %94 = tpu.matmul %52, %5, %cst_32 {dimension_numbers = #tpu.dot_dimension_numbers<[1], [0], [0], [1], [0, 0, 1, 1], [], []>} : vector<8x128xf32>, vector<128x384xf32>, vector<8x384xf32> -> vector<8x384xf32>
    %95 = vector.broadcast %6 : vector<1x384xf32> to vector<8x384xf32>
    %96 = arith.addf %94, %95 : vector<8x384xf32>
    %97 = vector.extract_strided_slice %93 {offsets = [0, 0], sizes = [8, 128], strides = [1, 1]} : vector<8x384xf32> to vector<8x128xf32>
    %98 = vector.extract_strided_slice %96 {offsets = [0, 0], sizes = [8, 128], strides = [1, 1]} : vector<8x384xf32> to vector<8x128xf32>
    %99 = arith.addf %97, %98 : vector<8x128xf32>
    %100 = arith.negf %99 : vector<8x128xf32>
    %101 = math.exp %100 : vector<8x128xf32>
    %cst_33 = arith.constant 1.000000e+00 : f32
    %102 = vector.broadcast %cst_33 : f32 to vector<8x128xf32>
    %103 = arith.addf %102, %101 : vector<8x128xf32>
    %104 = arith.divf %102, %103 : vector<8x128xf32>
    %105 = vector.extract_strided_slice %93 {offsets = [0, 128], sizes = [8, 128], strides = [1, 1]} : vector<8x384xf32> to vector<8x128xf32>
    %106 = vector.extract_strided_slice %96 {offsets = [0, 128], sizes = [8, 128], strides = [1, 1]} : vector<8x384xf32> to vector<8x128xf32>
    %107 = arith.addf %105, %106 : vector<8x128xf32>
    %108 = arith.negf %107 : vector<8x128xf32>
    %109 = math.exp %108 : vector<8x128xf32>
    %cst_34 = arith.constant 1.000000e+00 : f32
    %110 = vector.broadcast %cst_34 : f32 to vector<8x128xf32>
    %111 = arith.addf %110, %109 : vector<8x128xf32>
    %112 = arith.divf %110, %111 : vector<8x128xf32>
    %113 = vector.extract_strided_slice %93 {offsets = [0, 256], sizes = [8, 128], strides = [1, 1]} : vector<8x384xf32> to vector<8x128xf32>
    %114 = vector.extract_strided_slice %96 {offsets = [0, 256], sizes = [8, 128], strides = [1, 1]} : vector<8x384xf32> to vector<8x128xf32>
    %115 = arith.mulf %104, %114 : vector<8x128xf32>
    %116 = arith.addf %113, %115 : vector<8x128xf32>
    %117 = math.tanh %116 : vector<8x128xf32>
    %cst_35 = arith.constant 1.000000e+00 : f32
    %118 = vector.broadcast %cst_35 : f32 to vector<8x128xf32>
    %119 = arith.subf %118, %112 : vector<8x128xf32>
    %120 = arith.mulf %119, %117 : vector<8x128xf32>
    %121 = arith.mulf %112, %52 : vector<8x128xf32>
    %122 = arith.addf %120, %121 : vector<8x128xf32>
    %123 = vector.shape_cast %90 : vector<8x1xi1> to vector<8x1xi1>
    %124 = vector.broadcast %123 : vector<8x1xi1> to vector<8x128xi1>
    %125 = arith.select %124, %122, %52 : vector<8x128xi1>, vector<8x128xf32>
    %cst_36 = arith.constant dense<0.000000e+00> : vector<8x384xf32>
    %126 = tpu.matmul %122, %7, %cst_36 {dimension_numbers = #tpu.dot_dimension_numbers<[1], [0], [0], [1], [0, 0, 1, 1], [], []>} : vector<8x128xf32>, vector<128x384xf32>, vector<8x384xf32> -> vector<8x384xf32>
    %127 = vector.broadcast %8 : vector<1x384xf32> to vector<8x384xf32>
    %128 = arith.addf %126, %127 : vector<8x384xf32>
    %cst_37 = arith.constant dense<0.000000e+00> : vector<8x384xf32>
    %129 = tpu.matmul %87, %9, %cst_37 {dimension_numbers = #tpu.dot_dimension_numbers<[1], [0], [0], [1], [0, 0, 1, 1], [], []>} : vector<8x128xf32>, vector<128x384xf32>, vector<8x384xf32> -> vector<8x384xf32>
    %130 = vector.broadcast %10 : vector<1x384xf32> to vector<8x384xf32>
    %131 = arith.addf %129, %130 : vector<8x384xf32>
    %132 = vector.extract_strided_slice %128 {offsets = [0, 0], sizes = [8, 128], strides = [1, 1]} : vector<8x384xf32> to vector<8x128xf32>
    %133 = vector.extract_strided_slice %131 {offsets = [0, 0], sizes = [8, 128], strides = [1, 1]} : vector<8x384xf32> to vector<8x128xf32>
    %134 = arith.addf %132, %133 : vector<8x128xf32>
    %135 = arith.negf %134 : vector<8x128xf32>
    %136 = math.exp %135 : vector<8x128xf32>
    %cst_38 = arith.constant 1.000000e+00 : f32
    %137 = vector.broadcast %cst_38 : f32 to vector<8x128xf32>
    %138 = arith.addf %137, %136 : vector<8x128xf32>
    %139 = arith.divf %137, %138 : vector<8x128xf32>
    %140 = vector.extract_strided_slice %128 {offsets = [0, 128], sizes = [8, 128], strides = [1, 1]} : vector<8x384xf32> to vector<8x128xf32>
    %141 = vector.extract_strided_slice %131 {offsets = [0, 128], sizes = [8, 128], strides = [1, 1]} : vector<8x384xf32> to vector<8x128xf32>
    %142 = arith.addf %140, %141 : vector<8x128xf32>
    %143 = arith.negf %142 : vector<8x128xf32>
    %144 = math.exp %143 : vector<8x128xf32>
    %cst_39 = arith.constant 1.000000e+00 : f32
    %145 = vector.broadcast %cst_39 : f32 to vector<8x128xf32>
    %146 = arith.addf %145, %144 : vector<8x128xf32>
    %147 = arith.divf %145, %146 : vector<8x128xf32>
    %148 = vector.extract_strided_slice %128 {offsets = [0, 256], sizes = [8, 128], strides = [1, 1]} : vector<8x384xf32> to vector<8x128xf32>
    %149 = vector.extract_strided_slice %131 {offsets = [0, 256], sizes = [8, 128], strides = [1, 1]} : vector<8x384xf32> to vector<8x128xf32>
    %150 = arith.mulf %139, %149 : vector<8x128xf32>
    %151 = arith.addf %148, %150 : vector<8x128xf32>
    %152 = math.tanh %151 : vector<8x128xf32>
    %cst_40 = arith.constant 1.000000e+00 : f32
    %153 = vector.broadcast %cst_40 : f32 to vector<8x128xf32>
    %154 = arith.subf %153, %147 : vector<8x128xf32>
    %155 = arith.mulf %154, %152 : vector<8x128xf32>
    %156 = arith.mulf %147, %87 : vector<8x128xf32>
    %157 = arith.addf %155, %156 : vector<8x128xf32>
    %158 = vector.shape_cast %90 : vector<8x1xi1> to vector<8x1xi1>
    %159 = vector.broadcast %158 : vector<8x1xi1> to vector<8x128xi1>
    %160 = arith.select %159, %157, %87 : vector<8x128xi1>, vector<8x128xf32>
    %c2_i32 = arith.constant 2 : i32
    %161 = arith.addi %4, %c2_i32 : i32
    %162 = vector.broadcast %161 : i32 to vector<8x1xi32>
    %163 = arith.cmpi slt, %162, %3 : vector<8x1xi32>
    %164 = arith.index_cast %c2_i32 : i32 to index
    %c0_41 = arith.constant 0 : index
    %c0_42 = arith.constant 0 : index
    %165 = vector.load %arg1[%164, %c0_41, %c0_42] : memref<8x8x384xf32, #tpu.memory_space<vmem>>, vector<1x8x384xf32>
    %166 = vector.shape_cast %165 : vector<1x8x384xf32> to vector<8x384xf32>
    %cst_43 = arith.constant dense<0.000000e+00> : vector<8x384xf32>
    %167 = tpu.matmul %125, %5, %cst_43 {dimension_numbers = #tpu.dot_dimension_numbers<[1], [0], [0], [1], [0, 0, 1, 1], [], []>} : vector<8x128xf32>, vector<128x384xf32>, vector<8x384xf32> -> vector<8x384xf32>
    %168 = vector.broadcast %6 : vector<1x384xf32> to vector<8x384xf32>
    %169 = arith.addf %167, %168 : vector<8x384xf32>
    %170 = vector.extract_strided_slice %166 {offsets = [0, 0], sizes = [8, 128], strides = [1, 1]} : vector<8x384xf32> to vector<8x128xf32>
    %171 = vector.extract_strided_slice %169 {offsets = [0, 0], sizes = [8, 128], strides = [1, 1]} : vector<8x384xf32> to vector<8x128xf32>
    %172 = arith.addf %170, %171 : vector<8x128xf32>
    %173 = arith.negf %172 : vector<8x128xf32>
    %174 = math.exp %173 : vector<8x128xf32>
    %cst_44 = arith.constant 1.000000e+00 : f32
    %175 = vector.broadcast %cst_44 : f32 to vector<8x128xf32>
    %176 = arith.addf %175, %174 : vector<8x128xf32>
    %177 = arith.divf %175, %176 : vector<8x128xf32>
    %178 = vector.extract_strided_slice %166 {offsets = [0, 128], sizes = [8, 128], strides = [1, 1]} : vector<8x384xf32> to vector<8x128xf32>
    %179 = vector.extract_strided_slice %169 {offsets = [0, 128], sizes = [8, 128], strides = [1, 1]} : vector<8x384xf32> to vector<8x128xf32>
    %180 = arith.addf %178, %179 : vector<8x128xf32>
    %181 = arith.negf %180 : vector<8x128xf32>
    %182 = math.exp %181 : vector<8x128xf32>
    %cst_45 = arith.constant 1.000000e+00 : f32
    %183 = vector.broadcast %cst_45 : f32 to vector<8x128xf32>
    %184 = arith.addf %183, %182 : vector<8x128xf32>
    %185 = arith.divf %183, %184 : vector<8x128xf32>
    %186 = vector.extract_strided_slice %166 {offsets = [0, 256], sizes = [8, 128], strides = [1, 1]} : vector<8x384xf32> to vector<8x128xf32>
    %187 = vector.extract_strided_slice %169 {offsets = [0, 256], sizes = [8, 128], strides = [1, 1]} : vector<8x384xf32> to vector<8x128xf32>
    %188 = arith.mulf %177, %187 : vector<8x128xf32>
    %189 = arith.addf %186, %188 : vector<8x128xf32>
    %190 = math.tanh %189 : vector<8x128xf32>
    %cst_46 = arith.constant 1.000000e+00 : f32
    %191 = vector.broadcast %cst_46 : f32 to vector<8x128xf32>
    %192 = arith.subf %191, %185 : vector<8x128xf32>
    %193 = arith.mulf %192, %190 : vector<8x128xf32>
    %194 = arith.mulf %185, %125 : vector<8x128xf32>
    %195 = arith.addf %193, %194 : vector<8x128xf32>
    %196 = vector.shape_cast %163 : vector<8x1xi1> to vector<8x1xi1>
    %197 = vector.broadcast %196 : vector<8x1xi1> to vector<8x128xi1>
    %198 = arith.select %197, %195, %125 : vector<8x128xi1>, vector<8x128xf32>
    %cst_47 = arith.constant dense<0.000000e+00> : vector<8x384xf32>
    %199 = tpu.matmul %195, %7, %cst_47 {dimension_numbers = #tpu.dot_dimension_numbers<[1], [0], [0], [1], [0, 0, 1, 1], [], []>} : vector<8x128xf32>, vector<128x384xf32>, vector<8x384xf32> -> vector<8x384xf32>
    %200 = vector.broadcast %8 : vector<1x384xf32> to vector<8x384xf32>
    %201 = arith.addf %199, %200 : vector<8x384xf32>
    %cst_48 = arith.constant dense<0.000000e+00> : vector<8x384xf32>
    %202 = tpu.matmul %160, %9, %cst_48 {dimension_numbers = #tpu.dot_dimension_numbers<[1], [0], [0], [1], [0, 0, 1, 1], [], []>} : vector<8x128xf32>, vector<128x384xf32>, vector<8x384xf32> -> vector<8x384xf32>
    %203 = vector.broadcast %10 : vector<1x384xf32> to vector<8x384xf32>
    %204 = arith.addf %202, %203 : vector<8x384xf32>
    %205 = vector.extract_strided_slice %201 {offsets = [0, 0], sizes = [8, 128], strides = [1, 1]} : vector<8x384xf32> to vector<8x128xf32>
    %206 = vector.extract_strided_slice %204 {offsets = [0, 0], sizes = [8, 128], strides = [1, 1]} : vector<8x384xf32> to vector<8x128xf32>
    %207 = arith.addf %205, %206 : vector<8x128xf32>
    %208 = arith.negf %207 : vector<8x128xf32>
    %209 = math.exp %208 : vector<8x128xf32>
    %cst_49 = arith.constant 1.000000e+00 : f32
    %210 = vector.broadcast %cst_49 : f32 to vector<8x128xf32>
    %211 = arith.addf %210, %209 : vector<8x128xf32>
    %212 = arith.divf %210, %211 : vector<8x128xf32>
    %213 = vector.extract_strided_slice %201 {offsets = [0, 128], sizes = [8, 128], strides = [1, 1]} : vector<8x384xf32> to vector<8x128xf32>
    %214 = vector.extract_strided_slice %204 {offsets = [0, 128], sizes = [8, 128], strides = [1, 1]} : vector<8x384xf32> to vector<8x128xf32>
    %215 = arith.addf %213, %214 : vector<8x128xf32>
    %216 = arith.negf %215 : vector<8x128xf32>
    %217 = math.exp %216 : vector<8x128xf32>
    %cst_50 = arith.constant 1.000000e+00 : f32
    %218 = vector.broadcast %cst_50 : f32 to vector<8x128xf32>
    %219 = arith.addf %218, %217 : vector<8x128xf32>
    %220 = arith.divf %218, %219 : vector<8x128xf32>
    %221 = vector.extract_strided_slice %201 {offsets = [0, 256], sizes = [8, 128], strides = [1, 1]} : vector<8x384xf32> to vector<8x128xf32>
    %222 = vector.extract_strided_slice %204 {offsets = [0, 256], sizes = [8, 128], strides = [1, 1]} : vector<8x384xf32> to vector<8x128xf32>
    %223 = arith.mulf %212, %222 : vector<8x128xf32>
    %224 = arith.addf %221, %223 : vector<8x128xf32>
    %225 = math.tanh %224 : vector<8x128xf32>
    %cst_51 = arith.constant 1.000000e+00 : f32
    %226 = vector.broadcast %cst_51 : f32 to vector<8x128xf32>
    %227 = arith.subf %226, %220 : vector<8x128xf32>
    %228 = arith.mulf %227, %225 : vector<8x128xf32>
    %229 = arith.mulf %220, %160 : vector<8x128xf32>
    %230 = arith.addf %228, %229 : vector<8x128xf32>
    %231 = vector.shape_cast %163 : vector<8x1xi1> to vector<8x1xi1>
    %232 = vector.broadcast %231 : vector<8x1xi1> to vector<8x128xi1>
    %233 = arith.select %232, %230, %160 : vector<8x128xi1>, vector<8x128xf32>
    %c3_i32 = arith.constant 3 : i32
    %234 = arith.addi %4, %c3_i32 : i32
    %235 = vector.broadcast %234 : i32 to vector<8x1xi32>
    %236 = arith.cmpi slt, %235, %3 : vector<8x1xi32>
    %237 = arith.index_cast %c3_i32 : i32 to index
    %c0_52 = arith.constant 0 : index
    %c0_53 = arith.constant 0 : index
    %238 = vector.load %arg1[%237, %c0_52, %c0_53] : memref<8x8x384xf32, #tpu.memory_space<vmem>>, vector<1x8x384xf32>
    %239 = vector.shape_cast %238 : vector<1x8x384xf32> to vector<8x384xf32>
    %cst_54 = arith.constant dense<0.000000e+00> : vector<8x384xf32>
    %240 = tpu.matmul %198, %5, %cst_54 {dimension_numbers = #tpu.dot_dimension_numbers<[1], [0], [0], [1], [0, 0, 1, 1], [], []>} : vector<8x128xf32>, vector<128x384xf32>, vector<8x384xf32> -> vector<8x384xf32>
    %241 = vector.broadcast %6 : vector<1x384xf32> to vector<8x384xf32>
    %242 = arith.addf %240, %241 : vector<8x384xf32>
    %243 = vector.extract_strided_slice %239 {offsets = [0, 0], sizes = [8, 128], strides = [1, 1]} : vector<8x384xf32> to vector<8x128xf32>
    %244 = vector.extract_strided_slice %242 {offsets = [0, 0], sizes = [8, 128], strides = [1, 1]} : vector<8x384xf32> to vector<8x128xf32>
    %245 = arith.addf %243, %244 : vector<8x128xf32>
    %246 = arith.negf %245 : vector<8x128xf32>
    %247 = math.exp %246 : vector<8x128xf32>
    %cst_55 = arith.constant 1.000000e+00 : f32
    %248 = vector.broadcast %cst_55 : f32 to vector<8x128xf32>
    %249 = arith.addf %248, %247 : vector<8x128xf32>
    %250 = arith.divf %248, %249 : vector<8x128xf32>
    %251 = vector.extract_strided_slice %239 {offsets = [0, 128], sizes = [8, 128], strides = [1, 1]} : vector<8x384xf32> to vector<8x128xf32>
    %252 = vector.extract_strided_slice %242 {offsets = [0, 128], sizes = [8, 128], strides = [1, 1]} : vector<8x384xf32> to vector<8x128xf32>
    %253 = arith.addf %251, %252 : vector<8x128xf32>
    %254 = arith.negf %253 : vector<8x128xf32>
    %255 = math.exp %254 : vector<8x128xf32>
    %cst_56 = arith.constant 1.000000e+00 : f32
    %256 = vector.broadcast %cst_56 : f32 to vector<8x128xf32>
    %257 = arith.addf %256, %255 : vector<8x128xf32>
    %258 = arith.divf %256, %257 : vector<8x128xf32>
    %259 = vector.extract_strided_slice %239 {offsets = [0, 256], sizes = [8, 128], strides = [1, 1]} : vector<8x384xf32> to vector<8x128xf32>
    %260 = vector.extract_strided_slice %242 {offsets = [0, 256], sizes = [8, 128], strides = [1, 1]} : vector<8x384xf32> to vector<8x128xf32>
    %261 = arith.mulf %250, %260 : vector<8x128xf32>
    %262 = arith.addf %259, %261 : vector<8x128xf32>
    %263 = math.tanh %262 : vector<8x128xf32>
    %cst_57 = arith.constant 1.000000e+00 : f32
    %264 = vector.broadcast %cst_57 : f32 to vector<8x128xf32>
    %265 = arith.subf %264, %258 : vector<8x128xf32>
    %266 = arith.mulf %265, %263 : vector<8x128xf32>
    %267 = arith.mulf %258, %198 : vector<8x128xf32>
    %268 = arith.addf %266, %267 : vector<8x128xf32>
    %269 = vector.shape_cast %236 : vector<8x1xi1> to vector<8x1xi1>
    %270 = vector.broadcast %269 : vector<8x1xi1> to vector<8x128xi1>
    %271 = arith.select %270, %268, %198 : vector<8x128xi1>, vector<8x128xf32>
    %cst_58 = arith.constant dense<0.000000e+00> : vector<8x384xf32>
    %272 = tpu.matmul %268, %7, %cst_58 {dimension_numbers = #tpu.dot_dimension_numbers<[1], [0], [0], [1], [0, 0, 1, 1], [], []>} : vector<8x128xf32>, vector<128x384xf32>, vector<8x384xf32> -> vector<8x384xf32>
    %273 = vector.broadcast %8 : vector<1x384xf32> to vector<8x384xf32>
    %274 = arith.addf %272, %273 : vector<8x384xf32>
    %cst_59 = arith.constant dense<0.000000e+00> : vector<8x384xf32>
    %275 = tpu.matmul %233, %9, %cst_59 {dimension_numbers = #tpu.dot_dimension_numbers<[1], [0], [0], [1], [0, 0, 1, 1], [], []>} : vector<8x128xf32>, vector<128x384xf32>, vector<8x384xf32> -> vector<8x384xf32>
    %276 = vector.broadcast %10 : vector<1x384xf32> to vector<8x384xf32>
    %277 = arith.addf %275, %276 : vector<8x384xf32>
    %278 = vector.extract_strided_slice %274 {offsets = [0, 0], sizes = [8, 128], strides = [1, 1]} : vector<8x384xf32> to vector<8x128xf32>
    %279 = vector.extract_strided_slice %277 {offsets = [0, 0], sizes = [8, 128], strides = [1, 1]} : vector<8x384xf32> to vector<8x128xf32>
    %280 = arith.addf %278, %279 : vector<8x128xf32>
    %281 = arith.negf %280 : vector<8x128xf32>
    %282 = math.exp %281 : vector<8x128xf32>
    %cst_60 = arith.constant 1.000000e+00 : f32
    %283 = vector.broadcast %cst_60 : f32 to vector<8x128xf32>
    %284 = arith.addf %283, %282 : vector<8x128xf32>
    %285 = arith.divf %283, %284 : vector<8x128xf32>
    %286 = vector.extract_strided_slice %274 {offsets = [0, 128], sizes = [8, 128], strides = [1, 1]} : vector<8x384xf32> to vector<8x128xf32>
    %287 = vector.extract_strided_slice %277 {offsets = [0, 128], sizes = [8, 128], strides = [1, 1]} : vector<8x384xf32> to vector<8x128xf32>
    %288 = arith.addf %286, %287 : vector<8x128xf32>
    %289 = arith.negf %288 : vector<8x128xf32>
    %290 = math.exp %289 : vector<8x128xf32>
    %cst_61 = arith.constant 1.000000e+00 : f32
    %291 = vector.broadcast %cst_61 : f32 to vector<8x128xf32>
    %292 = arith.addf %291, %290 : vector<8x128xf32>
    %293 = arith.divf %291, %292 : vector<8x128xf32>
    %294 = vector.extract_strided_slice %274 {offsets = [0, 256], sizes = [8, 128], strides = [1, 1]} : vector<8x384xf32> to vector<8x128xf32>
    %295 = vector.extract_strided_slice %277 {offsets = [0, 256], sizes = [8, 128], strides = [1, 1]} : vector<8x384xf32> to vector<8x128xf32>
    %296 = arith.mulf %285, %295 : vector<8x128xf32>
    %297 = arith.addf %294, %296 : vector<8x128xf32>
    %298 = math.tanh %297 : vector<8x128xf32>
    %cst_62 = arith.constant 1.000000e+00 : f32
    %299 = vector.broadcast %cst_62 : f32 to vector<8x128xf32>
    %300 = arith.subf %299, %293 : vector<8x128xf32>
    %301 = arith.mulf %300, %298 : vector<8x128xf32>
    %302 = arith.mulf %293, %233 : vector<8x128xf32>
    %303 = arith.addf %301, %302 : vector<8x128xf32>
    %304 = vector.shape_cast %236 : vector<8x1xi1> to vector<8x1xi1>
    %305 = vector.broadcast %304 : vector<8x1xi1> to vector<8x128xi1>
    %306 = arith.select %305, %303, %233 : vector<8x128xi1>, vector<8x128xf32>
    %c4_i32 = arith.constant 4 : i32
    %307 = arith.addi %4, %c4_i32 : i32
    %308 = vector.broadcast %307 : i32 to vector<8x1xi32>
    %309 = arith.cmpi slt, %308, %3 : vector<8x1xi32>
    %310 = arith.index_cast %c4_i32 : i32 to index
    %c0_63 = arith.constant 0 : index
    %c0_64 = arith.constant 0 : index
    %311 = vector.load %arg1[%310, %c0_63, %c0_64] : memref<8x8x384xf32, #tpu.memory_space<vmem>>, vector<1x8x384xf32>
    %312 = vector.shape_cast %311 : vector<1x8x384xf32> to vector<8x384xf32>
    %cst_65 = arith.constant dense<0.000000e+00> : vector<8x384xf32>
    %313 = tpu.matmul %271, %5, %cst_65 {dimension_numbers = #tpu.dot_dimension_numbers<[1], [0], [0], [1], [0, 0, 1, 1], [], []>} : vector<8x128xf32>, vector<128x384xf32>, vector<8x384xf32> -> vector<8x384xf32>
    %314 = vector.broadcast %6 : vector<1x384xf32> to vector<8x384xf32>
    %315 = arith.addf %313, %314 : vector<8x384xf32>
    %316 = vector.extract_strided_slice %312 {offsets = [0, 0], sizes = [8, 128], strides = [1, 1]} : vector<8x384xf32> to vector<8x128xf32>
    %317 = vector.extract_strided_slice %315 {offsets = [0, 0], sizes = [8, 128], strides = [1, 1]} : vector<8x384xf32> to vector<8x128xf32>
    %318 = arith.addf %316, %317 : vector<8x128xf32>
    %319 = arith.negf %318 : vector<8x128xf32>
    %320 = math.exp %319 : vector<8x128xf32>
    %cst_66 = arith.constant 1.000000e+00 : f32
    %321 = vector.broadcast %cst_66 : f32 to vector<8x128xf32>
    %322 = arith.addf %321, %320 : vector<8x128xf32>
    %323 = arith.divf %321, %322 : vector<8x128xf32>
    %324 = vector.extract_strided_slice %312 {offsets = [0, 128], sizes = [8, 128], strides = [1, 1]} : vector<8x384xf32> to vector<8x128xf32>
    %325 = vector.extract_strided_slice %315 {offsets = [0, 128], sizes = [8, 128], strides = [1, 1]} : vector<8x384xf32> to vector<8x128xf32>
    %326 = arith.addf %324, %325 : vector<8x128xf32>
    %327 = arith.negf %326 : vector<8x128xf32>
    %328 = math.exp %327 : vector<8x128xf32>
    %cst_67 = arith.constant 1.000000e+00 : f32
    %329 = vector.broadcast %cst_67 : f32 to vector<8x128xf32>
    %330 = arith.addf %329, %328 : vector<8x128xf32>
    %331 = arith.divf %329, %330 : vector<8x128xf32>
    %332 = vector.extract_strided_slice %312 {offsets = [0, 256], sizes = [8, 128], strides = [1, 1]} : vector<8x384xf32> to vector<8x128xf32>
    %333 = vector.extract_strided_slice %315 {offsets = [0, 256], sizes = [8, 128], strides = [1, 1]} : vector<8x384xf32> to vector<8x128xf32>
    %334 = arith.mulf %323, %333 : vector<8x128xf32>
    %335 = arith.addf %332, %334 : vector<8x128xf32>
    %336 = math.tanh %335 : vector<8x128xf32>
    %cst_68 = arith.constant 1.000000e+00 : f32
    %337 = vector.broadcast %cst_68 : f32 to vector<8x128xf32>
    %338 = arith.subf %337, %331 : vector<8x128xf32>
    %339 = arith.mulf %338, %336 : vector<8x128xf32>
    %340 = arith.mulf %331, %271 : vector<8x128xf32>
    %341 = arith.addf %339, %340 : vector<8x128xf32>
    %342 = vector.shape_cast %309 : vector<8x1xi1> to vector<8x1xi1>
    %343 = vector.broadcast %342 : vector<8x1xi1> to vector<8x128xi1>
    %344 = arith.select %343, %341, %271 : vector<8x128xi1>, vector<8x128xf32>
    %cst_69 = arith.constant dense<0.000000e+00> : vector<8x384xf32>
    %345 = tpu.matmul %341, %7, %cst_69 {dimension_numbers = #tpu.dot_dimension_numbers<[1], [0], [0], [1], [0, 0, 1, 1], [], []>} : vector<8x128xf32>, vector<128x384xf32>, vector<8x384xf32> -> vector<8x384xf32>
    %346 = vector.broadcast %8 : vector<1x384xf32> to vector<8x384xf32>
    %347 = arith.addf %345, %346 : vector<8x384xf32>
    %cst_70 = arith.constant dense<0.000000e+00> : vector<8x384xf32>
    %348 = tpu.matmul %306, %9, %cst_70 {dimension_numbers = #tpu.dot_dimension_numbers<[1], [0], [0], [1], [0, 0, 1, 1], [], []>} : vector<8x128xf32>, vector<128x384xf32>, vector<8x384xf32> -> vector<8x384xf32>
    %349 = vector.broadcast %10 : vector<1x384xf32> to vector<8x384xf32>
    %350 = arith.addf %348, %349 : vector<8x384xf32>
    %351 = vector.extract_strided_slice %347 {offsets = [0, 0], sizes = [8, 128], strides = [1, 1]} : vector<8x384xf32> to vector<8x128xf32>
    %352 = vector.extract_strided_slice %350 {offsets = [0, 0], sizes = [8, 128], strides = [1, 1]} : vector<8x384xf32> to vector<8x128xf32>
    %353 = arith.addf %351, %352 : vector<8x128xf32>
    %354 = arith.negf %353 : vector<8x128xf32>
    %355 = math.exp %354 : vector<8x128xf32>
    %cst_71 = arith.constant 1.000000e+00 : f32
    %356 = vector.broadcast %cst_71 : f32 to vector<8x128xf32>
    %357 = arith.addf %356, %355 : vector<8x128xf32>
    %358 = arith.divf %356, %357 : vector<8x128xf32>
    %359 = vector.extract_strided_slice %347 {offsets = [0, 128], sizes = [8, 128], strides = [1, 1]} : vector<8x384xf32> to vector<8x128xf32>
    %360 = vector.extract_strided_slice %350 {offsets = [0, 128], sizes = [8, 128], strides = [1, 1]} : vector<8x384xf32> to vector<8x128xf32>
    %361 = arith.addf %359, %360 : vector<8x128xf32>
    %362 = arith.negf %361 : vector<8x128xf32>
    %363 = math.exp %362 : vector<8x128xf32>
    %cst_72 = arith.constant 1.000000e+00 : f32
    %364 = vector.broadcast %cst_72 : f32 to vector<8x128xf32>
    %365 = arith.addf %364, %363 : vector<8x128xf32>
    %366 = arith.divf %364, %365 : vector<8x128xf32>
    %367 = vector.extract_strided_slice %347 {offsets = [0, 256], sizes = [8, 128], strides = [1, 1]} : vector<8x384xf32> to vector<8x128xf32>
    %368 = vector.extract_strided_slice %350 {offsets = [0, 256], sizes = [8, 128], strides = [1, 1]} : vector<8x384xf32> to vector<8x128xf32>
    %369 = arith.mulf %358, %368 : vector<8x128xf32>
    %370 = arith.addf %367, %369 : vector<8x128xf32>
    %371 = math.tanh %370 : vector<8x128xf32>
    %cst_73 = arith.constant 1.000000e+00 : f32
    %372 = vector.broadcast %cst_73 : f32 to vector<8x128xf32>
    %373 = arith.subf %372, %366 : vector<8x128xf32>
    %374 = arith.mulf %373, %371 : vector<8x128xf32>
    %375 = arith.mulf %366, %306 : vector<8x128xf32>
    %376 = arith.addf %374, %375 : vector<8x128xf32>
    %377 = vector.shape_cast %309 : vector<8x1xi1> to vector<8x1xi1>
    %378 = vector.broadcast %377 : vector<8x1xi1> to vector<8x128xi1>
    %379 = arith.select %378, %376, %306 : vector<8x128xi1>, vector<8x128xf32>
    %c5_i32 = arith.constant 5 : i32
    %380 = arith.addi %4, %c5_i32 : i32
    %381 = vector.broadcast %380 : i32 to vector<8x1xi32>
    %382 = arith.cmpi slt, %381, %3 : vector<8x1xi32>
    %383 = arith.index_cast %c5_i32 : i32 to index
    %c0_74 = arith.constant 0 : index
    %c0_75 = arith.constant 0 : index
    %384 = vector.load %arg1[%383, %c0_74, %c0_75] : memref<8x8x384xf32, #tpu.memory_space<vmem>>, vector<1x8x384xf32>
    %385 = vector.shape_cast %384 : vector<1x8x384xf32> to vector<8x384xf32>
    %cst_76 = arith.constant dense<0.000000e+00> : vector<8x384xf32>
    %386 = tpu.matmul %344, %5, %cst_76 {dimension_numbers = #tpu.dot_dimension_numbers<[1], [0], [0], [1], [0, 0, 1, 1], [], []>} : vector<8x128xf32>, vector<128x384xf32>, vector<8x384xf32> -> vector<8x384xf32>
    %387 = vector.broadcast %6 : vector<1x384xf32> to vector<8x384xf32>
    %388 = arith.addf %386, %387 : vector<8x384xf32>
    %389 = vector.extract_strided_slice %385 {offsets = [0, 0], sizes = [8, 128], strides = [1, 1]} : vector<8x384xf32> to vector<8x128xf32>
    %390 = vector.extract_strided_slice %388 {offsets = [0, 0], sizes = [8, 128], strides = [1, 1]} : vector<8x384xf32> to vector<8x128xf32>
    %391 = arith.addf %389, %390 : vector<8x128xf32>
    %392 = arith.negf %391 : vector<8x128xf32>
    %393 = math.exp %392 : vector<8x128xf32>
    %cst_77 = arith.constant 1.000000e+00 : f32
    %394 = vector.broadcast %cst_77 : f32 to vector<8x128xf32>
    %395 = arith.addf %394, %393 : vector<8x128xf32>
    %396 = arith.divf %394, %395 : vector<8x128xf32>
    %397 = vector.extract_strided_slice %385 {offsets = [0, 128], sizes = [8, 128], strides = [1, 1]} : vector<8x384xf32> to vector<8x128xf32>
    %398 = vector.extract_strided_slice %388 {offsets = [0, 128], sizes = [8, 128], strides = [1, 1]} : vector<8x384xf32> to vector<8x128xf32>
    %399 = arith.addf %397, %398 : vector<8x128xf32>
    %400 = arith.negf %399 : vector<8x128xf32>
    %401 = math.exp %400 : vector<8x128xf32>
    %cst_78 = arith.constant 1.000000e+00 : f32
    %402 = vector.broadcast %cst_78 : f32 to vector<8x128xf32>
    %403 = arith.addf %402, %401 : vector<8x128xf32>
    %404 = arith.divf %402, %403 : vector<8x128xf32>
    %405 = vector.extract_strided_slice %385 {offsets = [0, 256], sizes = [8, 128], strides = [1, 1]} : vector<8x384xf32> to vector<8x128xf32>
    %406 = vector.extract_strided_slice %388 {offsets = [0, 256], sizes = [8, 128], strides = [1, 1]} : vector<8x384xf32> to vector<8x128xf32>
    %407 = arith.mulf %396, %406 : vector<8x128xf32>
    %408 = arith.addf %405, %407 : vector<8x128xf32>
    %409 = math.tanh %408 : vector<8x128xf32>
    %cst_79 = arith.constant 1.000000e+00 : f32
    %410 = vector.broadcast %cst_79 : f32 to vector<8x128xf32>
    %411 = arith.subf %410, %404 : vector<8x128xf32>
    %412 = arith.mulf %411, %409 : vector<8x128xf32>
    %413 = arith.mulf %404, %344 : vector<8x128xf32>
    %414 = arith.addf %412, %413 : vector<8x128xf32>
    %415 = vector.shape_cast %382 : vector<8x1xi1> to vector<8x1xi1>
    %416 = vector.broadcast %415 : vector<8x1xi1> to vector<8x128xi1>
    %417 = arith.select %416, %414, %344 : vector<8x128xi1>, vector<8x128xf32>
    %cst_80 = arith.constant dense<0.000000e+00> : vector<8x384xf32>
    %418 = tpu.matmul %414, %7, %cst_80 {dimension_numbers = #tpu.dot_dimension_numbers<[1], [0], [0], [1], [0, 0, 1, 1], [], []>} : vector<8x128xf32>, vector<128x384xf32>, vector<8x384xf32> -> vector<8x384xf32>
    %419 = vector.broadcast %8 : vector<1x384xf32> to vector<8x384xf32>
    %420 = arith.addf %418, %419 : vector<8x384xf32>
    %cst_81 = arith.constant dense<0.000000e+00> : vector<8x384xf32>
    %421 = tpu.matmul %379, %9, %cst_81 {dimension_numbers = #tpu.dot_dimension_numbers<[1], [0], [0], [1], [0, 0, 1, 1], [], []>} : vector<8x128xf32>, vector<128x384xf32>, vector<8x384xf32> -> vector<8x384xf32>
    %422 = vector.broadcast %10 : vector<1x384xf32> to vector<8x384xf32>
    %423 = arith.addf %421, %422 : vector<8x384xf32>
    %424 = vector.extract_strided_slice %420 {offsets = [0, 0], sizes = [8, 128], strides = [1, 1]} : vector<8x384xf32> to vector<8x128xf32>
    %425 = vector.extract_strided_slice %423 {offsets = [0, 0], sizes = [8, 128], strides = [1, 1]} : vector<8x384xf32> to vector<8x128xf32>
    %426 = arith.addf %424, %425 : vector<8x128xf32>
    %427 = arith.negf %426 : vector<8x128xf32>
    %428 = math.exp %427 : vector<8x128xf32>
    %cst_82 = arith.constant 1.000000e+00 : f32
    %429 = vector.broadcast %cst_82 : f32 to vector<8x128xf32>
    %430 = arith.addf %429, %428 : vector<8x128xf32>
    %431 = arith.divf %429, %430 : vector<8x128xf32>
    %432 = vector.extract_strided_slice %420 {offsets = [0, 128], sizes = [8, 128], strides = [1, 1]} : vector<8x384xf32> to vector<8x128xf32>
    %433 = vector.extract_strided_slice %423 {offsets = [0, 128], sizes = [8, 128], strides = [1, 1]} : vector<8x384xf32> to vector<8x128xf32>
    %434 = arith.addf %432, %433 : vector<8x128xf32>
    %435 = arith.negf %434 : vector<8x128xf32>
    %436 = math.exp %435 : vector<8x128xf32>
    %cst_83 = arith.constant 1.000000e+00 : f32
    %437 = vector.broadcast %cst_83 : f32 to vector<8x128xf32>
    %438 = arith.addf %437, %436 : vector<8x128xf32>
    %439 = arith.divf %437, %438 : vector<8x128xf32>
    %440 = vector.extract_strided_slice %420 {offsets = [0, 256], sizes = [8, 128], strides = [1, 1]} : vector<8x384xf32> to vector<8x128xf32>
    %441 = vector.extract_strided_slice %423 {offsets = [0, 256], sizes = [8, 128], strides = [1, 1]} : vector<8x384xf32> to vector<8x128xf32>
    %442 = arith.mulf %431, %441 : vector<8x128xf32>
    %443 = arith.addf %440, %442 : vector<8x128xf32>
    %444 = math.tanh %443 : vector<8x128xf32>
    %cst_84 = arith.constant 1.000000e+00 : f32
    %445 = vector.broadcast %cst_84 : f32 to vector<8x128xf32>
    %446 = arith.subf %445, %439 : vector<8x128xf32>
    %447 = arith.mulf %446, %444 : vector<8x128xf32>
    %448 = arith.mulf %439, %379 : vector<8x128xf32>
    %449 = arith.addf %447, %448 : vector<8x128xf32>
    %450 = vector.shape_cast %382 : vector<8x1xi1> to vector<8x1xi1>
    %451 = vector.broadcast %450 : vector<8x1xi1> to vector<8x128xi1>
    %452 = arith.select %451, %449, %379 : vector<8x128xi1>, vector<8x128xf32>
    %c6_i32 = arith.constant 6 : i32
    %453 = arith.addi %4, %c6_i32 : i32
    %454 = vector.broadcast %453 : i32 to vector<8x1xi32>
    %455 = arith.cmpi slt, %454, %3 : vector<8x1xi32>
    %456 = arith.index_cast %c6_i32 : i32 to index
    %c0_85 = arith.constant 0 : index
    %c0_86 = arith.constant 0 : index
    %457 = vector.load %arg1[%456, %c0_85, %c0_86] : memref<8x8x384xf32, #tpu.memory_space<vmem>>, vector<1x8x384xf32>
    %458 = vector.shape_cast %457 : vector<1x8x384xf32> to vector<8x384xf32>
    %cst_87 = arith.constant dense<0.000000e+00> : vector<8x384xf32>
    %459 = tpu.matmul %417, %5, %cst_87 {dimension_numbers = #tpu.dot_dimension_numbers<[1], [0], [0], [1], [0, 0, 1, 1], [], []>} : vector<8x128xf32>, vector<128x384xf32>, vector<8x384xf32> -> vector<8x384xf32>
    %460 = vector.broadcast %6 : vector<1x384xf32> to vector<8x384xf32>
    %461 = arith.addf %459, %460 : vector<8x384xf32>
    %462 = vector.extract_strided_slice %458 {offsets = [0, 0], sizes = [8, 128], strides = [1, 1]} : vector<8x384xf32> to vector<8x128xf32>
    %463 = vector.extract_strided_slice %461 {offsets = [0, 0], sizes = [8, 128], strides = [1, 1]} : vector<8x384xf32> to vector<8x128xf32>
    %464 = arith.addf %462, %463 : vector<8x128xf32>
    %465 = arith.negf %464 : vector<8x128xf32>
    %466 = math.exp %465 : vector<8x128xf32>
    %cst_88 = arith.constant 1.000000e+00 : f32
    %467 = vector.broadcast %cst_88 : f32 to vector<8x128xf32>
    %468 = arith.addf %467, %466 : vector<8x128xf32>
    %469 = arith.divf %467, %468 : vector<8x128xf32>
    %470 = vector.extract_strided_slice %458 {offsets = [0, 128], sizes = [8, 128], strides = [1, 1]} : vector<8x384xf32> to vector<8x128xf32>
    %471 = vector.extract_strided_slice %461 {offsets = [0, 128], sizes = [8, 128], strides = [1, 1]} : vector<8x384xf32> to vector<8x128xf32>
    %472 = arith.addf %470, %471 : vector<8x128xf32>
    %473 = arith.negf %472 : vector<8x128xf32>
    %474 = math.exp %473 : vector<8x128xf32>
    %cst_89 = arith.constant 1.000000e+00 : f32
    %475 = vector.broadcast %cst_89 : f32 to vector<8x128xf32>
    %476 = arith.addf %475, %474 : vector<8x128xf32>
    %477 = arith.divf %475, %476 : vector<8x128xf32>
    %478 = vector.extract_strided_slice %458 {offsets = [0, 256], sizes = [8, 128], strides = [1, 1]} : vector<8x384xf32> to vector<8x128xf32>
    %479 = vector.extract_strided_slice %461 {offsets = [0, 256], sizes = [8, 128], strides = [1, 1]} : vector<8x384xf32> to vector<8x128xf32>
    %480 = arith.mulf %469, %479 : vector<8x128xf32>
    %481 = arith.addf %478, %480 : vector<8x128xf32>
    %482 = math.tanh %481 : vector<8x128xf32>
    %cst_90 = arith.constant 1.000000e+00 : f32
    %483 = vector.broadcast %cst_90 : f32 to vector<8x128xf32>
    %484 = arith.subf %483, %477 : vector<8x128xf32>
    %485 = arith.mulf %484, %482 : vector<8x128xf32>
    %486 = arith.mulf %477, %417 : vector<8x128xf32>
    %487 = arith.addf %485, %486 : vector<8x128xf32>
    %488 = vector.shape_cast %455 : vector<8x1xi1> to vector<8x1xi1>
    %489 = vector.broadcast %488 : vector<8x1xi1> to vector<8x128xi1>
    %490 = arith.select %489, %487, %417 : vector<8x128xi1>, vector<8x128xf32>
    %cst_91 = arith.constant dense<0.000000e+00> : vector<8x384xf32>
    %491 = tpu.matmul %487, %7, %cst_91 {dimension_numbers = #tpu.dot_dimension_numbers<[1], [0], [0], [1], [0, 0, 1, 1], [], []>} : vector<8x128xf32>, vector<128x384xf32>, vector<8x384xf32> -> vector<8x384xf32>
    %492 = vector.broadcast %8 : vector<1x384xf32> to vector<8x384xf32>
    %493 = arith.addf %491, %492 : vector<8x384xf32>
    %cst_92 = arith.constant dense<0.000000e+00> : vector<8x384xf32>
    %494 = tpu.matmul %452, %9, %cst_92 {dimension_numbers = #tpu.dot_dimension_numbers<[1], [0], [0], [1], [0, 0, 1, 1], [], []>} : vector<8x128xf32>, vector<128x384xf32>, vector<8x384xf32> -> vector<8x384xf32>
    %495 = vector.broadcast %10 : vector<1x384xf32> to vector<8x384xf32>
    %496 = arith.addf %494, %495 : vector<8x384xf32>
    %497 = vector.extract_strided_slice %493 {offsets = [0, 0], sizes = [8, 128], strides = [1, 1]} : vector<8x384xf32> to vector<8x128xf32>
    %498 = vector.extract_strided_slice %496 {offsets = [0, 0], sizes = [8, 128], strides = [1, 1]} : vector<8x384xf32> to vector<8x128xf32>
    %499 = arith.addf %497, %498 : vector<8x128xf32>
    %500 = arith.negf %499 : vector<8x128xf32>
    %501 = math.exp %500 : vector<8x128xf32>
    %cst_93 = arith.constant 1.000000e+00 : f32
    %502 = vector.broadcast %cst_93 : f32 to vector<8x128xf32>
    %503 = arith.addf %502, %501 : vector<8x128xf32>
    %504 = arith.divf %502, %503 : vector<8x128xf32>
    %505 = vector.extract_strided_slice %493 {offsets = [0, 128], sizes = [8, 128], strides = [1, 1]} : vector<8x384xf32> to vector<8x128xf32>
    %506 = vector.extract_strided_slice %496 {offsets = [0, 128], sizes = [8, 128], strides = [1, 1]} : vector<8x384xf32> to vector<8x128xf32>
    %507 = arith.addf %505, %506 : vector<8x128xf32>
    %508 = arith.negf %507 : vector<8x128xf32>
    %509 = math.exp %508 : vector<8x128xf32>
    %cst_94 = arith.constant 1.000000e+00 : f32
    %510 = vector.broadcast %cst_94 : f32 to vector<8x128xf32>
    %511 = arith.addf %510, %509 : vector<8x128xf32>
    %512 = arith.divf %510, %511 : vector<8x128xf32>
    %513 = vector.extract_strided_slice %493 {offsets = [0, 256], sizes = [8, 128], strides = [1, 1]} : vector<8x384xf32> to vector<8x128xf32>
    %514 = vector.extract_strided_slice %496 {offsets = [0, 256], sizes = [8, 128], strides = [1, 1]} : vector<8x384xf32> to vector<8x128xf32>
    %515 = arith.mulf %504, %514 : vector<8x128xf32>
    %516 = arith.addf %513, %515 : vector<8x128xf32>
    %517 = math.tanh %516 : vector<8x128xf32>
    %cst_95 = arith.constant 1.000000e+00 : f32
    %518 = vector.broadcast %cst_95 : f32 to vector<8x128xf32>
    %519 = arith.subf %518, %512 : vector<8x128xf32>
    %520 = arith.mulf %519, %517 : vector<8x128xf32>
    %521 = arith.mulf %512, %452 : vector<8x128xf32>
    %522 = arith.addf %520, %521 : vector<8x128xf32>
    %523 = vector.shape_cast %455 : vector<8x1xi1> to vector<8x1xi1>
    %524 = vector.broadcast %523 : vector<8x1xi1> to vector<8x128xi1>
    %525 = arith.select %524, %522, %452 : vector<8x128xi1>, vector<8x128xf32>
    %c7_i32 = arith.constant 7 : i32
    %526 = arith.addi %4, %c7_i32 : i32
    %527 = vector.broadcast %526 : i32 to vector<8x1xi32>
    %528 = arith.cmpi slt, %527, %3 : vector<8x1xi32>
    %529 = arith.index_cast %c7_i32 : i32 to index
    %c0_96 = arith.constant 0 : index
    %c0_97 = arith.constant 0 : index
    %530 = vector.load %arg1[%529, %c0_96, %c0_97] : memref<8x8x384xf32, #tpu.memory_space<vmem>>, vector<1x8x384xf32>
    %531 = vector.shape_cast %530 : vector<1x8x384xf32> to vector<8x384xf32>
    %cst_98 = arith.constant dense<0.000000e+00> : vector<8x384xf32>
    %532 = tpu.matmul %490, %5, %cst_98 {dimension_numbers = #tpu.dot_dimension_numbers<[1], [0], [0], [1], [0, 0, 1, 1], [], []>} : vector<8x128xf32>, vector<128x384xf32>, vector<8x384xf32> -> vector<8x384xf32>
    %533 = vector.broadcast %6 : vector<1x384xf32> to vector<8x384xf32>
    %534 = arith.addf %532, %533 : vector<8x384xf32>
    %535 = vector.extract_strided_slice %531 {offsets = [0, 0], sizes = [8, 128], strides = [1, 1]} : vector<8x384xf32> to vector<8x128xf32>
    %536 = vector.extract_strided_slice %534 {offsets = [0, 0], sizes = [8, 128], strides = [1, 1]} : vector<8x384xf32> to vector<8x128xf32>
    %537 = arith.addf %535, %536 : vector<8x128xf32>
    %538 = arith.negf %537 : vector<8x128xf32>
    %539 = math.exp %538 : vector<8x128xf32>
    %cst_99 = arith.constant 1.000000e+00 : f32
    %540 = vector.broadcast %cst_99 : f32 to vector<8x128xf32>
    %541 = arith.addf %540, %539 : vector<8x128xf32>
    %542 = arith.divf %540, %541 : vector<8x128xf32>
    %543 = vector.extract_strided_slice %531 {offsets = [0, 128], sizes = [8, 128], strides = [1, 1]} : vector<8x384xf32> to vector<8x128xf32>
    %544 = vector.extract_strided_slice %534 {offsets = [0, 128], sizes = [8, 128], strides = [1, 1]} : vector<8x384xf32> to vector<8x128xf32>
    %545 = arith.addf %543, %544 : vector<8x128xf32>
    %546 = arith.negf %545 : vector<8x128xf32>
    %547 = math.exp %546 : vector<8x128xf32>
    %cst_100 = arith.constant 1.000000e+00 : f32
    %548 = vector.broadcast %cst_100 : f32 to vector<8x128xf32>
    %549 = arith.addf %548, %547 : vector<8x128xf32>
    %550 = arith.divf %548, %549 : vector<8x128xf32>
    %551 = vector.extract_strided_slice %531 {offsets = [0, 256], sizes = [8, 128], strides = [1, 1]} : vector<8x384xf32> to vector<8x128xf32>
    %552 = vector.extract_strided_slice %534 {offsets = [0, 256], sizes = [8, 128], strides = [1, 1]} : vector<8x384xf32> to vector<8x128xf32>
    %553 = arith.mulf %542, %552 : vector<8x128xf32>
    %554 = arith.addf %551, %553 : vector<8x128xf32>
    %555 = math.tanh %554 : vector<8x128xf32>
    %cst_101 = arith.constant 1.000000e+00 : f32
    %556 = vector.broadcast %cst_101 : f32 to vector<8x128xf32>
    %557 = arith.subf %556, %550 : vector<8x128xf32>
    %558 = arith.mulf %557, %555 : vector<8x128xf32>
    %559 = arith.mulf %550, %490 : vector<8x128xf32>
    %560 = arith.addf %558, %559 : vector<8x128xf32>
    %561 = vector.shape_cast %528 : vector<8x1xi1> to vector<8x1xi1>
    %562 = vector.broadcast %561 : vector<8x1xi1> to vector<8x128xi1>
    %563 = arith.select %562, %560, %490 : vector<8x128xi1>, vector<8x128xf32>
    %cst_102 = arith.constant dense<0.000000e+00> : vector<8x384xf32>
    %564 = tpu.matmul %560, %7, %cst_102 {dimension_numbers = #tpu.dot_dimension_numbers<[1], [0], [0], [1], [0, 0, 1, 1], [], []>} : vector<8x128xf32>, vector<128x384xf32>, vector<8x384xf32> -> vector<8x384xf32>
    %565 = vector.broadcast %8 : vector<1x384xf32> to vector<8x384xf32>
    %566 = arith.addf %564, %565 : vector<8x384xf32>
    %cst_103 = arith.constant dense<0.000000e+00> : vector<8x384xf32>
    %567 = tpu.matmul %525, %9, %cst_103 {dimension_numbers = #tpu.dot_dimension_numbers<[1], [0], [0], [1], [0, 0, 1, 1], [], []>} : vector<8x128xf32>, vector<128x384xf32>, vector<8x384xf32> -> vector<8x384xf32>
    %568 = vector.broadcast %10 : vector<1x384xf32> to vector<8x384xf32>
    %569 = arith.addf %567, %568 : vector<8x384xf32>
    %570 = vector.extract_strided_slice %566 {offsets = [0, 0], sizes = [8, 128], strides = [1, 1]} : vector<8x384xf32> to vector<8x128xf32>
    %571 = vector.extract_strided_slice %569 {offsets = [0, 0], sizes = [8, 128], strides = [1, 1]} : vector<8x384xf32> to vector<8x128xf32>
    %572 = arith.addf %570, %571 : vector<8x128xf32>
    %573 = arith.negf %572 : vector<8x128xf32>
    %574 = math.exp %573 : vector<8x128xf32>
    %cst_104 = arith.constant 1.000000e+00 : f32
    %575 = vector.broadcast %cst_104 : f32 to vector<8x128xf32>
    %576 = arith.addf %575, %574 : vector<8x128xf32>
    %577 = arith.divf %575, %576 : vector<8x128xf32>
    %578 = vector.extract_strided_slice %566 {offsets = [0, 128], sizes = [8, 128], strides = [1, 1]} : vector<8x384xf32> to vector<8x128xf32>
    %579 = vector.extract_strided_slice %569 {offsets = [0, 128], sizes = [8, 128], strides = [1, 1]} : vector<8x384xf32> to vector<8x128xf32>
    %580 = arith.addf %578, %579 : vector<8x128xf32>
    %581 = arith.negf %580 : vector<8x128xf32>
    %582 = math.exp %581 : vector<8x128xf32>
    %cst_105 = arith.constant 1.000000e+00 : f32
    %583 = vector.broadcast %cst_105 : f32 to vector<8x128xf32>
    %584 = arith.addf %583, %582 : vector<8x128xf32>
    %585 = arith.divf %583, %584 : vector<8x128xf32>
    %586 = vector.extract_strided_slice %566 {offsets = [0, 256], sizes = [8, 128], strides = [1, 1]} : vector<8x384xf32> to vector<8x128xf32>
    %587 = vector.extract_strided_slice %569 {offsets = [0, 256], sizes = [8, 128], strides = [1, 1]} : vector<8x384xf32> to vector<8x128xf32>
    %588 = arith.mulf %577, %587 : vector<8x128xf32>
    %589 = arith.addf %586, %588 : vector<8x128xf32>
    %590 = math.tanh %589 : vector<8x128xf32>
    %cst_106 = arith.constant 1.000000e+00 : f32
    %591 = vector.broadcast %cst_106 : f32 to vector<8x128xf32>
    %592 = arith.subf %591, %585 : vector<8x128xf32>
    %593 = arith.mulf %592, %590 : vector<8x128xf32>
    %594 = arith.mulf %585, %525 : vector<8x128xf32>
    %595 = arith.addf %593, %594 : vector<8x128xf32>
    %596 = vector.shape_cast %528 : vector<8x1xi1> to vector<8x1xi1>
    %597 = vector.broadcast %596 : vector<8x1xi1> to vector<8x128xi1>
    %598 = arith.select %597, %595, %525 : vector<8x128xi1>, vector<8x128xf32>
    %c8_i32_107 = arith.constant 8 : i32
    %c0_108 = arith.constant 0 : index
    %c0_109 = arith.constant 0 : index
    %c0_110 = arith.constant 0 : index
    %599 = vector.load %arg10[%c0_108, %c0_109, %c0_110] : memref<2x8x128xf32, #tpu.memory_space<vmem>>, vector<1x8x128xf32>
    %600 = vector.shape_cast %599 : vector<1x8x128xf32> to vector<8x128xf32>
    %601 = vector.shape_cast %563 : vector<8x128xf32> to vector<1x8x128xf32>
    tpu.vector_store %arg10[%c0_108, %c0_109, %c0_110], %601 {strides = array<i32>} : memref<2x8x128xf32, #tpu.memory_space<vmem>>, vector<1x8x128xf32>,
    %c1_111 = arith.constant 1 : index
    %c0_112 = arith.constant 0 : index
    %c0_113 = arith.constant 0 : index
    %602 = vector.load %arg10[%c1_111, %c0_112, %c0_113] : memref<2x8x128xf32, #tpu.memory_space<vmem>>, vector<1x8x128xf32>
    %603 = vector.shape_cast %602 : vector<1x8x128xf32> to vector<8x128xf32>
    %604 = vector.shape_cast %598 : vector<8x128xf32> to vector<1x8x128xf32>
    tpu.vector_store %arg10[%c1_111, %c0_112, %c0_113], %604 {strides = array<i32>} : memref<2x8x128xf32, #tpu.memory_space<vmem>>, vector<1x8x128xf32>,
    %c0_i32_114 = arith.constant 0 : i32
    %605 = arith.cmpi eq, %arg0, %c0_i32_114 : i32
    %606 = arith.extui %605 : i1 to i32
    %c0_i32_115 = arith.constant 0 : i32
    %607 = arith.cmpi ne, %606, %c0_i32_115 : i32
    scf.if %607 {
      %608 = arith.mulf %598, %598 : vector<8x128xf32>
      %cst_116 = arith.constant dense<0.000000e+00> : vector<8xf32>
      %609 = vector.multi_reduction <add>, %608, %cst_116 [1] : vector<8x128xf32> to vector<8xf32>
      %610 = vector.shape_cast %609 : vector<8xf32> to vector<8x1xf32>
      %611 = math.rsqrt %610 : vector<8x1xf32>
      %612 = vector.broadcast %611 : vector<8x1xf32> to vector<8x128xf32>
      %613 = arith.mulf %598, %612 : vector<8x128xf32>
      %c0_117 = arith.constant 0 : index
      %c0_118 = arith.constant 0 : index
      %614 = vector.load %arg9[%c0_117, %c0_118] : memref<8x128xf32, #tpu.memory_space<vmem>>, vector<8x128xf32>
      tpu.vector_store %arg9[%c0_117, %c0_118], %613 {strides = array<i32>} : memref<8x128xf32, #tpu.memory_space<vmem>>, vector<8x128xf32>,
    } else {
    }
    return
  }
  func.func @transform_0(%arg0: i32) -> (i32, i32, i32) {
    %c0_i32 = arith.constant 0 : i32
    %c0_i32_0 = arith.constant 0 : i32
    %c0_i32_1 = arith.constant 0 : i32
    return %arg0, %c0_i32, %c0_i32_0 : i32, i32, i32
  }
  func.func @transform_1(%arg0: i32) -> (i32, i32) {
    %c0_i32 = arith.constant 0 : i32
    %c0_i32_0 = arith.constant 0 : i32
    %c0_i32_1 = arith.constant 0 : i32
    return %c0_i32, %c0_i32_0 : i32, i32
  }
  func.func @transform_2(%arg0: i32) -> (i32, i32) {
    %c0_i32 = arith.constant 0 : i32
    %c0_i32_0 = arith.constant 0 : i32
    %c0_i32_1 = arith.constant 0 : i32
    return %c0_i32, %c0_i32_0 : i32, i32
  }
  func.func @transform_3(%arg0: i32) -> (i32, i32) {
    %c0_i32 = arith.constant 0 : i32
    %c0_i32_0 = arith.constant 0 : i32
    %c0_i32_1 = arith.constant 0 : i32
    return %c0_i32, %c0_i32_0 : i32, i32
  }
  func.func @transform_4(%arg0: i32) -> (i32, i32) {
    %c0_i32 = arith.constant 0 : i32
    %c0_i32_0 = arith.constant 0 : i32
    %c0_i32_1 = arith.constant 0 : i32
    return %c0_i32, %c0_i32_0 : i32, i32
  }
  func.func @transform_5(%arg0: i32) -> (i32, i32) {
    %c0_i32 = arith.constant 0 : i32
    %c0_i32_0 = arith.constant 0 : i32
    %c0_i32_1 = arith.constant 0 : i32
    return %c0_i32, %c0_i32_0 : i32, i32
  }
  func.func @transform_6(%arg0: i32) -> (i32, i32) {
    %c0_i32 = arith.constant 0 : i32
    %c0_i32_0 = arith.constant 0 : i32
    %c0_i32_1 = arith.constant 0 : i32
    return %c0_i32, %c0_i32_0 : i32, i32
  }
  func.func @transform_7(%arg0: i32) -> (i32, i32) {
    %c0_i32 = arith.constant 0 : i32
    %c0_i32_0 = arith.constant 0 : i32
    %c0_i32_1 = arith.constant 0 : i32
    return %c0_i32, %c0_i32_0 : i32, i32
  }
  func.func @transform_8(%arg0: i32) -> (i32, i32) {
    %c0_i32 = arith.constant 0 : i32
    %c0_i32_0 = arith.constant 0 : i32
    %c0_i32_1 = arith.constant 0 : i32
    return %c0_i32, %c0_i32_0 : i32, i32
  }
}

</mosaic_0001>

<llo_original>
// kernel: tpu_custom_call.1
$region0: #{tpu_custom_call.1}
  #allocation0 [shape = 'u32[]', space=smem, size = 0x4, offset = 0x4, fixed_abs, tag = 'smem constant byte address 0x4 - core index']
  #allocation1 [shape = 'u32[72,128]{1,0:T(1,128)}', space=vmem, size = 0x9000, scoped, tag = 'internal scratch']
  #allocation2 [shape = 'f32[2,8,128]{2,1,0:T(8,128)}', space=vmem, size = 0x2000, scoped, tag = 'scratch operand']
  %s0 = inlined_call_operand.hbm [shape: f32[8,8,384], index: 0, kind: input, shape index: {}]
  %s1 = inlined_call_operand.vmem [shape: s32[8,1], index: 1, kind: input, shape index: {}]
  %s2 = inlined_call_operand.hbm [shape: f32[128,384], index: 2, kind: input, shape index: {}]
  %s3 = inlined_call_operand.vmem [shape: f32[1,384], index: 3, kind: input, shape index: {}]
  %s4 = inlined_call_operand.hbm [shape: f32[128,384], index: 4, kind: input, shape index: {}]
  %s5 = inlined_call_operand.vmem [shape: f32[1,384], index: 5, kind: input, shape index: {}]
  %s6 = inlined_call_operand.hbm [shape: f32[128,384], index: 6, kind: input, shape index: {}]
  %s7 = inlined_call_operand.vmem [shape: f32[1,384], index: 7, kind: input, shape index: {}]
  %s8 = inlined_call_operand.hbm [shape: f32[8,128], index: 8, kind: output, shape index: {}]
  %s9 = sld [smem:[#allocation0]]
  $region66: #{tpu_custom_call.1} parent=0
    _
  %s11 = ssub.s32 1, %s9
  %s12 = scalar_select 0, %s11, %s9
  $region1: #{tpu_custom_call.1} parent=0
    #allocation3 [shape = 'u8[98304]{0}', space=vmem, size = 0x18000, scoped, tag = 'input window, operand 0, single buffered']
    #allocation4 [shape = 's32[1]{0}', space=sflag, size = 0x4, scoped, tag = 'scoped memory for tpu_custom_call.1']
    #allocation5 [shape = 's32[1]{0}', space=sflag, size = 0x4, scoped, tag = 'scoped memory for tpu_custom_call.1']
    #allocation6 [shape = 'u8[196608]{0}', space=vmem, size = 0x30000, scoped, tag = 'input window, operand 2, single buffered']
    #allocation7 [shape = 's32[1]{0}', space=sflag, size = 0x4, scoped, tag = 'scoped memory for tpu_custom_call.1']
    #allocation8 [shape = 'u8[196608]{0}', space=vmem, size = 0x30000, scoped, tag = 'input window, operand 4, single buffered']
    #allocation9 [shape = 'u8[196608]{0}', space=vmem, size = 0x30000, scoped, tag = 'input window, operand 6, single buffered']
    #allocation10 [shape = 's32[1]{0}', space=sflag, size = 0x4, scoped, tag = 'scoped memory for tpu_custom_call.1']
    #allocation11 [shape = 'u8[4096]{0}', space=vmem, size = 0x1000, scoped, tag = 'output window, operand 0, single buffered']
    %13 = vsyncpa [#allocation4], 0
    %14 = vsyncpa [#allocation7], 0
    %15 = vsyncpa [#allocation10], 0
    %16 = vsyncpa [#allocation5], 0
    // Predicated region
    $region2: #{tpu_custom_call.1} parent=1 // pred_check
      _
    $region3: #{tpu_custom_call.1} parent=1 // pred_check_branch
      %18 = sbr.rel (0) target = $region5
    $region4: #{tpu_custom_call.1} parent=1 // pred_region
      %20 = vsyncadd [#allocation4], 0
      %s21 = sshll.u32 %s0, 4
      %s22 = int_to_ptr.hbm [resolvable:$true] %s21
      %s23 = sshll.u32 [#allocation3], 4
      %s24 = int_to_ptr.vmem [resolvable:$true] %s23
      %29 = dma.hbm_to_vmem [thread:$0]  %s22, 3072, %s24, [#allocation4], 384, 384, 24
    $region5: #{tpu_custom_call.1} parent=1 // pred_fallthru
      _
    // Predicated region
    $region6: #{tpu_custom_call.1} parent=1 // pred_check
      _
    $region7: #{tpu_custom_call.1} parent=1 // pred_check_branch
      %31 = sbr.rel (0) target = $region9
    $region8: #{tpu_custom_call.1} parent=1 // pred_region
      _
    $region9: #{tpu_custom_call.1} parent=1 // pred_fallthru
      _
    // Predicated region
    $region10: #{tpu_custom_call.1} parent=1 // pred_check
      _
    $region11: #{tpu_custom_call.1} parent=1 // pred_check_branch
      %33 = sbr.rel (0) target = $region13
    $region12: #{tpu_custom_call.1} parent=1 // pred_region
      %35 = vsyncadd [#allocation7], 0
      %s36 = sshll.u32 %s2, 4
      %s37 = int_to_ptr.hbm [resolvable:$true] %s36
      %s38 = sshll.u32 [#allocation6], 4
      %s39 = int_to_ptr.vmem [resolvable:$true] %s38
      %44 = dma.hbm_to_vmem [thread:$0]  %s37, 6144, %s39, [#allocation7], 384, 384, 24
    $region13: #{tpu_custom_call.1} parent=1 // pred_fallthru
      _
    // Predicated region
    $region14: #{tpu_custom_call.1} parent=1 // pred_check
      _
    $region15: #{tpu_custom_call.1} parent=1 // pred_check_branch
      %46 = sbr.rel (0) target = $region17
    $region16: #{tpu_custom_call.1} parent=1 // pred_region
      _
    $region17: #{tpu_custom_call.1} parent=1 // pred_fallthru
      _
    // Predicated region
    $region18: #{tpu_custom_call.1} parent=1 // pred_check
      _
    $region19: #{tpu_custom_call.1} parent=1 // pred_check_branch
      %48 = sbr.rel (0) target = $region21
    $region20: #{tpu_custom_call.1} parent=1 // pred_region
      %50 = vsyncadd [#allocation7], 0
      %s51 = sshll.u32 %s4, 4
      %s52 = int_to_ptr.hbm [resolvable:$true] %s51
      %s53 = sshll.u32 [#allocation8], 4
      %s54 = int_to_ptr.vmem [resolvable:$true] %s53
      %59 = dma.hbm_to_vmem [thread:$0]  %s52, 6144, %s54, [#allocation7], 384, 384, 24
    $region21: #{tpu_custom_call.1} parent=1 // pred_fallthru
      _
    // Predicated region
    $region22: #{tpu_custom_call.1} parent=1 // pred_check
      _
    $region23: #{tpu_custom_call.1} parent=1 // pred_check_branch
      %61 = sbr.rel (0) target = $region25
    $region24: #{tpu_custom_call.1} parent=1 // pred_region
      _
    $region25: #{tpu_custom_call.1} parent=1 // pred_fallthru
      _
    // Predicated region
    $region26: #{tpu_custom_call.1} parent=1 // pred_check
      _
    $region27: #{tpu_custom_call.1} parent=1 // pred_check_branch
      %63 = sbr.rel (0) target = $region29
    $region28: #{tpu_custom_call.1} parent=1 // pred_region
      %65 = vsyncadd [#allocation10], 0
      %s66 = sshll.u32 %s6, 4
      %s67 = int_to_ptr.hbm [resolvable:$true] %s66
      %s68 = sshll.u32 [#allocation9], 4
      %s69 = int_to_ptr.vmem [resolvable:$true] %s68
      %74 = dma.hbm_to_vmem [thread:$0]  %s67, 6144, %s69, [#allocation10], 384, 384, 24
    $region29: #{tpu_custom_call.1} parent=1 // pred_fallthru
      _
    // Predicated region
    $region30: #{tpu_custom_call.1} parent=1 // pred_check
      _
    $region31: #{tpu_custom_call.1} parent=1 // pred_check_branch
      %76 = sbr.rel (0) target = $region33
    $region32: #{tpu_custom_call.1} parent=1 // pred_region
      _
    $region33: #{tpu_custom_call.1} parent=1 // pred_fallthru
      _
    // Predicated region
    $region34: #{tpu_custom_call.1} parent=1 // pred_check
      _
    $region35: #{tpu_custom_call.1} parent=1 // pred_check_branch
      %78 = sbr.rel (0) target = $region37
    $region36: #{tpu_custom_call.1} parent=1 // pred_region
      %80 = dma.done [#allocation4], 3072
    $region37: #{tpu_custom_call.1} parent=1 // pred_fallthru
      _
    // Predicated region
    $region38: #{tpu_custom_call.1} parent=1 // pred_check
      _
    $region39: #{tpu_custom_call.1} parent=1 // pred_check_branch
      %82 = sbr.rel (0) target = $region41
    $region40: #{tpu_custom_call.1} parent=1 // pred_region
      %84 = dma.done [#allocation7], 6144
    $region41: #{tpu_custom_call.1} parent=1 // pred_fallthru
      _
    // Predicated region
    $region42: #{tpu_custom_call.1} parent=1 // pred_check
      _
    $region43: #{tpu_custom_call.1} parent=1 // pred_check_branch
      %86 = sbr.rel (0) target = $region45
    $region44: #{tpu_custom_call.1} parent=1 // pred_region
      %88 = dma.done [#allocation7], 6144
    $region45: #{tpu_custom_call.1} parent=1 // pred_fallthru
      _
    // Predicated region
    $region46: #{tpu_custom_call.1} parent=1 // pred_check
      _
    $region47: #{tpu_custom_call.1} parent=1 // pred_check_branch
      %90 = sbr.rel (0) target = $region49
    $region48: #{tpu_custom_call.1} parent=1 // pred_region
      %92 = dma.done [#allocation10], 6144
    $region49: #{tpu_custom_call.1} parent=1 // pred_fallthru
      _
    %p93 = scmp.eq.s32.totalorder 0, 0
    // Predicated region
    $region50: #{tpu_custom_call.1} parent=1 // pred_check
      %p94 = pneg %p93
    $region51: #{tpu_custom_call.1} parent=1 // pred_check_branch
      %96 = sbr.rel (%p94) target = $region53
    $region52: #{tpu_custom_call.1} parent=1 // pred_region
      %97 = vst [vmem:[#allocation2] sm:$0xff] 0.0
      %98 = vst [vmem:[#allocation2 + $0x8] sm:$0xff] 0.0
    $region53: #{tpu_custom_call.1} parent=1 // pred_fallthru
      _
    %v99 = vld [vmem:[%s1] sm:$0xff]
    %s100 = smul.u32 0, 8
    %v101 = vld [vmem:[#allocation6] sm:$0xff]
    %v102 = vld [vmem:[#allocation6 + $0x8] sm:$0xff]
    %v103 = vld [vmem:[#allocation6 + $0x10] sm:$0xff]
    %v104 = vld [vmem:[#allocation6 + $0x18] sm:$0xff]
    %v105 = vld [vmem:[#allocation6 + $0x20] sm:$0xff]
    %v106 = vld [vmem:[#allocation6 + $0x28] sm:$0xff]
    %v107 = vld [vmem:[#allocation6 + $0x30] sm:$0xff]
    %v108 = vld [vmem:[#allocation6 + $0x38] sm:$0xff]
    %v109 = vld [vmem:[#allocation6 + $0x40] sm:$0xff]
    %v110 = vld [vmem:[#allocation6 + $0x48] sm:$0xff]
    %v111 = vld [vmem:[#allocation6 + $0x50] sm:$0xff]
    %v112 = vld [vmem:[#allocation6 + $0x58] sm:$0xff]
    %v113 = vld [vmem:[#allocation6 + $0x60] sm:$0xff]
    %v114 = vld [vmem:[#allocation6 + $0x68] sm:$0xff]
    %v115 = vld [vmem:[#allocation6 + $0x70] sm:$0xff]
    %v116 = vld [vmem:[#allocation6 + $0x78] sm:$0xff]
    %v117 = vld [vmem:[#allocation6 + $0x80] sm:$0xff]
    %v118 = vld [vmem:[#allocation6 + $0x88] sm:$0xff]
    %v119 = vld [vmem:[#allocation6 + $0x90] sm:$0xff]
    %v120 = vld [vmem:[#allocation6 + $0x98] sm:$0xff]
    %v121 = vld [vmem:[#allocation6 + $0xa0] sm:$0xff]
    %v122 = vld [vmem:[#allocation6 + $0xa8] sm:$0xff]
    %v123 = vld [vmem:[#allocation6 + $0xb0] sm:$0xff]
    %v124 = vld [vmem:[#allocation6 + $0xb8] sm:$0xff]
    %v125 = vld [vmem:[#allocation6 + $0xc0] sm:$0xff]
    %v126 = vld [vmem:[#allocation6 + $0xc8] sm:$0xff]
    %v127 = vld [vmem:[#allocation6 + $0xd0] sm:$0xff]
    %v128 = vld [vmem:[#allocation6 + $0xd8] sm:$0xff]
    %v129 = vld [vmem:[#allocation6 + $0xe0] sm:$0xff]
    %v130 = vld [vmem:[#allocation6 + $0xe8] sm:$0xff]
    %v131 = vld [vmem:[#allocation6 + $0xf0] sm:$0xff]
    %v132 = vld [vmem:[#allocation6 + $0xf8] sm:$0xff]
    %v133 = vld [vmem:[#allocation6 + $0x100] sm:$0xff]
    %v134 = vld [vmem:[#allocation6 + $0x108] sm:$0xff]
    %v135 = vld [vmem:[#allocation6 + $0x110] sm:$0xff]
    %v136 = vld [vmem:[#allocation6 + $0x118] sm:$0xff]
    %v137 = vld [vmem:[#allocation6 + $0x120] sm:$0xff]
    %v138 = vld [vmem:[#allocation6 + $0x128] sm:$0xff]
    %v139 = vld [vmem:[#allocation6 + $0x130] sm:$0xff]
    %v140 = vld [vmem:[#allocation6 + $0x138] sm:$0xff]
    %v141 = vld [vmem:[#allocation6 + $0x140] sm:$0xff]
    %v142 = vld [vmem:[#allocation6 + $0x148] sm:$0xff]
    %v143 = vld [vmem:[#allocation6 + $0x150] sm:$0xff]
    %v144 = vld [vmem:[#allocation6 + $0x158] sm:$0xff]
    %v145 = vld [vmem:[#allocation6 + $0x160] sm:$0xff]
    %v146 = vld [vmem:[#allocation6 + $0x168] sm:$0xff]
    %v147 = vld [vmem:[#allocation6 + $0x170] sm:$0xff]
    %v148 = vld [vmem:[#allocation6 + $0x178] sm:$0xff]
    %v149 = vld [vmem:[%s3] sm:$0x7]
    %v150 = vld [vmem:[#allocation8] sm:$0xff]
    %v151 = vld [vmem:[#allocation8 + $0x8] sm:$0xff]
    %v152 = vld [vmem:[#allocation8 + $0x10] sm:$0xff]
    %v153 = vld [vmem:[#allocation8 + $0x18] sm:$0xff]
    %v154 = vld [vmem:[#allocation8 + $0x20] sm:$0xff]
    %v155 = vld [vmem:[#allocation8 + $0x28] sm:$0xff]
    %v156 = vld [vmem:[#allocation8 + $0x30] sm:$0xff]
    %v157 = vld [vmem:[#allocation8 + $0x38] sm:$0xff]
    %v158 = vld [vmem:[#allocation8 + $0x40] sm:$0xff]
    %v159 = vld [vmem:[#allocation8 + $0x48] sm:$0xff]
    %v160 = vld [vmem:[#allocation8 + $0x50] sm:$0xff]
    %v161 = vld [vmem:[#allocation8 + $0x58] sm:$0xff]
    %v162 = vld [vmem:[#allocation8 + $0x60] sm:$0xff]
    %v163 = vld [vmem:[#allocation8 + $0x68] sm:$0xff]
    %v164 = vld [vmem:[#allocation8 + $0x70] sm:$0xff]
    %v165 = vld [vmem:[#allocation8 + $0x78] sm:$0xff]
    %v166 = vld [vmem:[#allocation8 + $0x80] sm:$0xff]
    %v167 = vld [vmem:[#allocation8 + $0x88] sm:$0xff]
    %v168 = vld [vmem:[#allocation8 + $0x90] sm:$0xff]
    %v169 = vld [vmem:[#allocation8 + $0x98] sm:$0xff]
    %v170 = vld [vmem:[#allocation8 + $0xa0] sm:$0xff]
    %v171 = vld [vmem:[#allocation8 + $0xa8] sm:$0xff]
    %v172 = vld [vmem:[#allocation8 + $0xb0] sm:$0xff]
    %v173 = vld [vmem:[#allocation8 + $0xb8] sm:$0xff]
    %v174 = vld [vmem:[#allocation8 + $0xc0] sm:$0xff]
    %v175 = vld [vmem:[#allocation8 + $0xc8] sm:$0xff]
    %v176 = vld [vmem:[#allocation8 + $0xd0] sm:$0xff]
    %v177 = vld [vmem:[#allocation8 + $0xd8] sm:$0xff]
    %v178 = vld [vmem:[#allocation8 + $0xe0] sm:$0xff]
    %v179 = vld [vmem:[#allocation8 + $0xe8] sm:$0xff]
    %v180 = vld [vmem:[#allocation8 + $0xf0] sm:$0xff]
    %v181 = vld [vmem:[#allocation8 + $0xf8] sm:$0xff]
    %v182 = vld [vmem:[#allocation8 + $0x100] sm:$0xff]
    %v183 = vld [vmem:[#allocation8 + $0x108] sm:$0xff]
    %v184 = vld [vmem:[#allocation8 + $0x110] sm:$0xff]
    %v185 = vld [vmem:[#allocation8 + $0x118] sm:$0xff]
    %v186 = vld [vmem:[#allocation8 + $0x120] sm:$0xff]
    %v187 = vld [vmem:[#allocation8 + $0x128] sm:$0xff]
    %v188 = vld [vmem:[#allocation8 + $0x130] sm:$0xff]
    %v189 = vld [vmem:[#allocation8 + $0x138] sm:$0xff]
    %v190 = vld [vmem:[#allocation8 + $0x140] sm:$0xff]
    %v191 = vld [vmem:[#allocation8 + $0x148] sm:$0xff]
    %v192 = vld [vmem:[#allocation8 + $0x150] sm:$0xff]
    %v193 = vld [vmem:[#allocation8 + $0x158] sm:$0xff]
    %v194 = vld [vmem:[#allocation8 + $0x160] sm:$0xff]
    %v195 = vld [vmem:[#allocation8 + $0x168] sm:$0xff]
    %v196 = vld [vmem:[#allocation8 + $0x170] sm:$0xff]
    %v197 = vld [vmem:[#allocation8 + $0x178] sm:$0xff]
    %v198 = vld [vmem:[%s5] sm:$0x7]
    %v199 = vld [vmem:[#allocation9] sm:$0xff]
    %v200 = vld [vmem:[#allocation9 + $0x8] sm:$0xff]
    %v201 = vld [vmem:[#allocation9 + $0x10] sm:$0xff]
    %v202 = vld [vmem:[#allocation9 + $0x18] sm:$0xff]
    %v203 = vld [vmem:[#allocation9 + $0x20] sm:$0xff]
    %v204 = vld [vmem:[#allocation9 + $0x28] sm:$0xff]
    %v205 = vld [vmem:[#allocation9 + $0x30] sm:$0xff]
    %v206 = vld [vmem:[#allocation9 + $0x38] sm:$0xff]
    %v207 = vld [vmem:[#allocation9 + $0x40] sm:$0xff]
    %v208 = vld [vmem:[#allocation9 + $0x48] sm:$0xff]
    %v209 = vld [vmem:[#allocation9 + $0x50] sm:$0xff]
    %v210 = vld [vmem:[#allocation9 + $0x58] sm:$0xff]
    %v211 = vld [vmem:[#allocation9 + $0x60] sm:$0xff]
    %v212 = vld [vmem:[#allocation9 + $0x68] sm:$0xff]
    %v213 = vld [vmem:[#allocation9 + $0x70] sm:$0xff]
    %v214 = vld [vmem:[#allocation9 + $0x78] sm:$0xff]
    %v215 = vld [vmem:[#allocation9 + $0x80] sm:$0xff]
    %v216 = vld [vmem:[#allocation9 + $0x88] sm:$0xff]
    %v217 = vld [vmem:[#allocation9 + $0x90] sm:$0xff]
    %v218 = vld [vmem:[#allocation9 + $0x98] sm:$0xff]
    %v219 = vld [vmem:[#allocation9 + $0xa0] sm:$0xff]
    %v220 = vld [vmem:[#allocation9 + $0xa8] sm:$0xff]
    %v221 = vld [vmem:[#allocation9 + $0xb0] sm:$0xff]
    %v222 = vld [vmem:[#allocation9 + $0xb8] sm:$0xff]
    %v223 = vld [vmem:[#allocation9 + $0xc0] sm:$0xff]
    %v224 = vld [vmem:[#allocation9 + $0xc8] sm:$0xff]
    %v225 = vld [vmem:[#allocation9 + $0xd0] sm:$0xff]
    %v226 = vld [vmem:[#allocation9 + $0xd8] sm:$0xff]
    %v227 = vld [vmem:[#allocation9 + $0xe0] sm:$0xff]
    %v228 = vld [vmem:[#allocation9 + $0xe8] sm:$0xff]
    %v229 = vld [vmem:[#allocation9 + $0xf0] sm:$0xff]
    %v230 = vld [vmem:[#allocation9 + $0xf8] sm:$0xff]
    %v231 = vld [vmem:[#allocation9 + $0x100] sm:$0xff]
    %v232 = vld [vmem:[#allocation9 + $0x108] sm:$0xff]
    %v233 = vld [vmem:[#allocation9 + $0x110] sm:$0xff]
    %v234 = vld [vmem:[#allocation9 + $0x118] sm:$0xff]
    %v235 = vld [vmem:[#allocation9 + $0x120] sm:$0xff]
    %v236 = vld [vmem:[#allocation9 + $0x128] sm:$0xff]
    %v237 = vld [vmem:[#allocation9 + $0x130] sm:$0xff]
    %v238 = vld [vmem:[#allocation9 + $0x138] sm:$0xff]
    %v239 = vld [vmem:[#allocation9 + $0x140] sm:$0xff]
    %v240 = vld [vmem:[#allocation9 + $0x148] sm:$0xff]
    %v241 = vld [vmem:[#allocation9 + $0x150] sm:$0xff]
    %v242 = vld [vmem:[#allocation9 + $0x158] sm:$0xff]
    %v243 = vld [vmem:[#allocation9 + $0x160] sm:$0xff]
    %v244 = vld [vmem:[#allocation9 + $0x168] sm:$0xff]
    %v245 = vld [vmem:[#allocation9 + $0x170] sm:$0xff]
    %v246 = vld [vmem:[#allocation9 + $0x178] sm:$0xff]
    %v247 = vld [vmem:[%s7] sm:$0x7]
    %v248 = vld [vmem:[#allocation2] sm:$0xff]
    %s249 = scalar_lea.vmem [#allocation2], 8
    %v250 = vld [vmem:[%s249] sm:$0xff]
    %v251 = vstv %s100
    %vm252 = vcmp.lt.s32.totalorder %v251, %v99
    %v253 = vld [vmem:[#allocation3] sm:$0xff]
    %v254 = vld [vmem:[#allocation3 + $0x8] sm:$0xff]
    %v255 = vld [vmem:[#allocation3 + $0x10] sm:$0xff]
    %v257 = vperm.slane %v149, 0
    %v258 = vperm.slane %v149, 1
    %v259 = vperm.slane %v149, 2
    %263 = vmatpush.msra.mxu0 %v146
    %264 = vmatpush.msra.mxu0 %v143
    %265 = vmatpush.msra.mxu0 %v140
    %266 = vmatpush.msra.mxu0 %v137
    %267 = vmatpush.msra.mxu0 %v134
    %268 = vmatpush.msra.mxu0 %v131
    %269 = vmatpush.msra.mxu0 %v128
    %270 = vmatpush.msra.mxu0 %v125
    %271 = vmatpush.msra.mxu0 %v122
    %272 = vmatpush.msra.mxu0 %v119
    %273 = vmatpush.msra.mxu0 %v116
    %274 = vmatpush.msra.mxu0 %v113
    %275 = vmatpush.msra.mxu0 %v110
    %276 = vmatpush.msra.mxu0 %v107
    %277 = vmatpush.msra.mxu0 %v104
    %278 = vmatpush.msra.mxu0 %v101
    %279 = vmatmul.f32.gmra.mxu0 %v248
    %v280 = vpop.f32.mrf.mxu0
    %v281 = vadd.f32 %v257, %v280
    %282 = vdwg.mxu0
    %283 = vmatpush.msra.mxu0 %v147
    %284 = vmatpush.msra.mxu0 %v144
    %285 = vmatpush.msra.mxu0 %v141
    %286 = vmatpush.msra.mxu0 %v138
    %287 = vmatpush.msra.mxu0 %v135
    %288 = vmatpush.msra.mxu0 %v132
    %289 = vmatpush.msra.mxu0 %v129
    %290 = vmatpush.msra.mxu0 %v126
    %291 = vmatpush.msra.mxu0 %v123
    %292 = vmatpush.msra.mxu0 %v120
    %293 = vmatpush.msra.mxu0 %v117
    %294 = vmatpush.msra.mxu0 %v114
    %295 = vmatpush.msra.mxu0 %v111
    %296 = vmatpush.msra.mxu0 %v108
    %297 = vmatpush.msra.mxu0 %v105
    %298 = vmatpush.msra.mxu0 %v102
    %299 = vmatmul.f32.gmra.mxu0 %v248
    %v300 = vpop.f32.mrf.mxu0
    %v301 = vadd.f32 %v258, %v300
    %302 = vdwg.mxu0
    %303 = vmatpush.msra.mxu0 %v148
    %304 = vmatpush.msra.mxu0 %v145
    %305 = vmatpush.msra.mxu0 %v142
    %306 = vmatpush.msra.mxu0 %v139
    %307 = vmatpush.msra.mxu0 %v136
    %308 = vmatpush.msra.mxu0 %v133
    %309 = vmatpush.msra.mxu0 %v130
    %310 = vmatpush.msra.mxu0 %v127
    %311 = vmatpush.msra.mxu0 %v124
    %312 = vmatpush.msra.mxu0 %v121
    %313 = vmatpush.msra.mxu0 %v118
    %314 = vmatpush.msra.mxu0 %v115
    %315 = vmatpush.msra.mxu0 %v112
    %316 = vmatpush.msra.mxu0 %v109
    %317 = vmatpush.msra.mxu0 %v106
    %318 = vmatpush.msra.mxu0 %v103
    %319 = vmatmul.f32.gmra.mxu0 %v248
    %v320 = vpop.f32.mrf.mxu0
    %v321 = vadd.f32 %v259, %v320
    %322 = vdwg.mxu0
    %v323 = vadd.f32 %v253, %v281
    %v324 = vxor.u32 %v323, 2147483648
    %v325 = vmul.f32 %v324, 1.442695
    %v326 = vpow.pop %v325
    %v327 = vadd.f32 %v326, 1.0
    %v328 = vrcp.pop %v327
    %v329 = vmul.f32 %v327, %v328
    %v330 = vsub.f32 1.0, %v329
    %v331 = vmul.f32 %v328, %v330
    %v332 = vadd.f32 %v328, %v331
    %vm333 = vweird.f32 %v327
    %vm334 = vweird.f32 %v328
    %vm335 = vmor %vm333, %vm334
    %v336 = vsel %vm335, %v328, %v332
    %v337 = vand.u32 2147483647, %v327
    %vm338 = vcmp.eq.f32.partialorder %v337, 8.507059e+37
    %v339 = vand.u32 %v327, 2147483648
    %v340 = vor.u32 1.1754944e-38, %v339
    %v341 = vsel %vm338, %v340, %v336
    %v342 = vmul.f32 1.0, %v341
    %v343 = vadd.f32 %v254, %v301
    %v344 = vxor.u32 %v343, 2147483648
    %v345 = vmul.f32 %v344, 1.442695
    %v346 = vpow.pop %v345
    %v347 = vadd.f32 %v346, 1.0
    %v348 = vrcp.pop %v347
    %v349 = vmul.f32 %v347, %v348
    %v350 = vsub.f32 1.0, %v349
    %v351 = vmul.f32 %v348, %v350
    %v352 = vadd.f32 %v348, %v351
    %vm353 = vweird.f32 %v347
    %vm354 = vweird.f32 %v348
    %vm355 = vmor %vm353, %vm354
    %v356 = vsel %vm355, %v348, %v352
    %v357 = vand.u32 2147483647, %v347
    %vm358 = vcmp.eq.f32.partialorder %v357, 8.507059e+37
    %v359 = vand.u32 %v347, 2147483648
    %v360 = vor.u32 1.1754944e-38, %v359
    %v361 = vsel %vm358, %v360, %v356
    %v362 = vmul.f32 1.0, %v361
    %v363 = vmul.f32 %v342, %v321
    %v364 = vadd.f32 %v255, %v363
    %v365 = vtanh.pop %v364
    %v366 = vsub.f32 1.0, %v362
    %v367 = vmul.f32 %v366, %v365
    %v368 = vmul.f32 %v362, %v248
    %v369 = vadd.f32 %v367, %v368
    %v370 = vsel %vm252, 1, 0
    %371 = vset.pattern.permute.xlu0 0
    %372 = vperm.xlu0 %371, %v370
    %v373 = vpop.permute.xlu0 %372
    %vm374 = vcmp.eq.s32.totalorder %v373, 1
    %v375 = vsel %vm374, %v369, %v248
    %v377 = vperm.slane %v198, 0
    %v378 = vperm.slane %v198, 1
    %v379 = vperm.slane %v198, 2
    %383 = vmatpush.msra.mxu0 %v195
    %384 = vmatpush.msra.mxu0 %v192
    %385 = vmatpush.msra.mxu0 %v189
    %386 = vmatpush.msra.mxu0 %v186
    %387 = vmatpush.msra.mxu0 %v183
    %388 = vmatpush.msra.mxu0 %v180
    %389 = vmatpush.msra.mxu0 %v177
    %390 = vmatpush.msra.mxu0 %v174
    %391 = vmatpush.msra.mxu0 %v171
    %392 = vmatpush.msra.mxu0 %v168
    %393 = vmatpush.msra.mxu0 %v165
    %394 = vmatpush.msra.mxu0 %v162
    %395 = vmatpush.msra.mxu0 %v159
    %396 = vmatpush.msra.mxu0 %v156
    %397 = vmatpush.msra.mxu0 %v153
    %398 = vmatpush.msra.mxu0 %v150
    %399 = vmatmul.f32.gmra.mxu0 %v369
    %v400 = vpop.f32.mrf.mxu0
    %v401 = vadd.f32 %v377, %v400
    %402 = vdwg.mxu0
    %403 = vmatpush.msra.mxu0 %v196
    %404 = vmatpush.msra.mxu0 %v193
    %405 = vmatpush.msra.mxu0 %v190
    %406 = vmatpush.msra.mxu0 %v187
    %407 = vmatpush.msra.mxu0 %v184
    %408 = vmatpush.msra.mxu0 %v181
    %409 = vmatpush.msra.mxu0 %v178
    %410 = vmatpush.msra.mxu0 %v175
    %411 = vmatpush.msra.mxu0 %v172
    %412 = vmatpush.msra.mxu0 %v169
    %413 = vmatpush.msra.mxu0 %v166
    %414 = vmatpush.msra.mxu0 %v163
    %415 = vmatpush.msra.mxu0 %v160
    %416 = vmatpush.msra.mxu0 %v157
    %417 = vmatpush.msra.mxu0 %v154
    %418 = vmatpush.msra.mxu0 %v151
    %419 = vmatmul.f32.gmra.mxu0 %v369
    %v420 = vpop.f32.mrf.mxu0
    %v421 = vadd.f32 %v378, %v420
    %422 = vdwg.mxu0
    %423 = vmatpush.msra.mxu0 %v197
    %424 = vmatpush.msra.mxu0 %v194
    %425 = vmatpush.msra.mxu0 %v191
    %426 = vmatpush.msra.mxu0 %v188
    %427 = vmatpush.msra.mxu0 %v185
    %428 = vmatpush.msra.mxu0 %v182
    %429 = vmatpush.msra.mxu0 %v179
    %430 = vmatpush.msra.mxu0 %v176
    %431 = vmatpush.msra.mxu0 %v173
    %432 = vmatpush.msra.mxu0 %v170
    %433 = vmatpush.msra.mxu0 %v167
    %434 = vmatpush.msra.mxu0 %v164
    %435 = vmatpush.msra.mxu0 %v161
    %436 = vmatpush.msra.mxu0 %v158
    %437 = vmatpush.msra.mxu0 %v155
    %438 = vmatpush.msra.mxu0 %v152
    %439 = vmatmul.f32.gmra.mxu0 %v369
    %v440 = vpop.f32.mrf.mxu0
    %v441 = vadd.f32 %v379, %v440
    %442 = vdwg.mxu0
    %v444 = vperm.slane %v247, 0
    %v445 = vperm.slane %v247, 1
    %v446 = vperm.slane %v247, 2
    %450 = vmatpush.msra.mxu0 %v244
    %451 = vmatpush.msra.mxu0 %v241
    %452 = vmatpush.msra.mxu0 %v238
    %453 = vmatpush.msra.mxu0 %v235
    %454 = vmatpush.msra.mxu0 %v232
    %455 = vmatpush.msra.mxu0 %v229
    %456 = vmatpush.msra.mxu0 %v226
    %457 = vmatpush.msra.mxu0 %v223
    %458 = vmatpush.msra.mxu0 %v220
    %459 = vmatpush.msra.mxu0 %v217
    %460 = vmatpush.msra.mxu0 %v214
    %461 = vmatpush.msra.mxu0 %v211
    %462 = vmatpush.msra.mxu0 %v208
    %463 = vmatpush.msra.mxu0 %v205
    %464 = vmatpush.msra.mxu0 %v202
    %465 = vmatpush.msra.mxu0 %v199
    %466 = vmatmul.f32.gmra.mxu0 %v250
    %v467 = vpop.f32.mrf.mxu0
    %v468 = vadd.f32 %v444, %v467
    %469 = vdwg.mxu0
    %470 = vmatpush.msra.mxu0 %v245
    %471 = vmatpush.msra.mxu0 %v242
    %472 = vmatpush.msra.mxu0 %v239
    %473 = vmatpush.msra.mxu0 %v236
    %474 = vmatpush.msra.mxu0 %v233
    %475 = vmatpush.msra.mxu0 %v230
    %476 = vmatpush.msra.mxu0 %v227
    %477 = vmatpush.msra.mxu0 %v224
    %478 = vmatpush.msra.mxu0 %v221
    %479 = vmatpush.msra.mxu0 %v218
    %480 = vmatpush.msra.mxu0 %v215
    %481 = vmatpush.msra.mxu0 %v212
    %482 = vmatpush.msra.mxu0 %v209
    %483 = vmatpush.msra.mxu0 %v206
    %484 = vmatpush.msra.mxu0 %v203
    %485 = vmatpush.msra.mxu0 %v200
    %486 = vmatmul.f32.gmra.mxu0 %v250
    %v487 = vpop.f32.mrf.mxu0
    %v488 = vadd.f32 %v445, %v487
    %489 = vdwg.mxu0
    %490 = vmatpush.msra.mxu0 %v246
    %491 = vmatpush.msra.mxu0 %v243
    %492 = vmatpush.msra.mxu0 %v240
    %493 = vmatpush.msra.mxu0 %v237
    %494 = vmatpush.msra.mxu0 %v234
    %495 = vmatpush.msra.mxu0 %v231
    %496 = vmatpush.msra.mxu0 %v228
    %497 = vmatpush.msra.mxu0 %v225
    %498 = vmatpush.msra.mxu0 %v222
    %499 = vmatpush.msra.mxu0 %v219
    %500 = vmatpush.msra.mxu0 %v216
    %501 = vmatpush.msra.mxu0 %v213
    %502 = vmatpush.msra.mxu0 %v210
    %503 = vmatpush.msra.mxu0 %v207
    %504 = vmatpush.msra.mxu0 %v204
    %505 = vmatpush.msra.mxu0 %v201
    %506 = vmatmul.f32.gmra.mxu0 %v250
    %v507 = vpop.f32.mrf.mxu0
    %v508 = vadd.f32 %v446, %v507
    %509 = vdwg.mxu0
    %v510 = vadd.f32 %v401, %v468
    %v511 = vxor.u32 %v510, 2147483648
    %v512 = vmul.f32 %v511, 1.442695
    %v513 = vpow.pop %v512
    %v514 = vadd.f32 %v513, 1.0
    %v515 = vrcp.pop %v514
    %v516 = vmul.f32 %v514, %v515
    %v517 = vsub.f32 1.0, %v516
    %v518 = vmul.f32 %v515, %v517
    %v519 = vadd.f32 %v515, %v518
    %vm520 = vweird.f32 %v514
    %vm521 = vweird.f32 %v515
    %vm522 = vmor %vm520, %vm521
    %v523 = vsel %vm522, %v515, %v519
    %v524 = vand.u32 2147483647, %v514
    %vm525 = vcmp.eq.f32.partialorder %v524, 8.507059e+37
    %v526 = vand.u32 %v514, 2147483648
    %v527 = vor.u32 1.1754944e-38, %v526
    %v528 = vsel %vm525, %v527, %v523
    %v529 = vmul.f32 1.0, %v528
    %v530 = vadd.f32 %v421, %v488
    %v531 = vxor.u32 %v530, 2147483648
    %v532 = vmul.f32 %v531, 1.442695
    %v533 = vpow.pop %v532
    %v534 = vadd.f32 %v533, 1.0
    %v535 = vrcp.pop %v534
    %v536 = vmul.f32 %v534, %v535
    %v537 = vsub.f32 1.0, %v536
    %v538 = vmul.f32 %v535, %v537
    %v539 = vadd.f32 %v535, %v538
    %vm540 = vweird.f32 %v534
    %vm541 = vweird.f32 %v535
    %vm542 = vmor %vm540, %vm541
    %v543 = vsel %vm542, %v535, %v539
    %v544 = vand.u32 2147483647, %v534
    %vm545 = vcmp.eq.f32.partialorder %v544, 8.507059e+37
    %v546 = vand.u32 %v534, 2147483648
    %v547 = vor.u32 1.1754944e-38, %v546
    %v548 = vsel %vm545, %v547, %v543
    %v549 = vmul.f32 1.0, %v548
    %v550 = vmul.f32 %v529, %v508
    %v551 = vadd.f32 %v441, %v550
    %v552 = vtanh.pop %v551
    %v553 = vsub.f32 1.0, %v549
    %v554 = vmul.f32 %v553, %v552
    %v555 = vmul.f32 %v549, %v250
    %v556 = vadd.f32 %v554, %v555
    %v557 = vsel %vm374, %v556, %v250
    %s558 = sadd.s32 %s100, 1
    %v559 = vstv %s558
    %vm560 = vcmp.lt.s32.totalorder %v559, %v99
    %s561 = scalar_lea.vmem [#allocation3], 24
    %v562 = vld [vmem:[%s561] sm:$0xff]
    %v563 = vld [vmem:[%s561 + $0x8] sm:$0xff]
    %v564 = vld [vmem:[%s561 + $0x10] sm:$0xff]
    %565 = vmatpush.msra.mxu0 %v146
    %566 = vmatpush.msra.mxu0 %v143
    %567 = vmatpush.msra.mxu0 %v140
    %568 = vmatpush.msra.mxu0 %v137
    %569 = vmatpush.msra.mxu0 %v134
    %570 = vmatpush.msra.mxu0 %v131
    %571 = vmatpush.msra.mxu0 %v128
    %572 = vmatpush.msra.mxu0 %v125
    %573 = vmatpush.msra.mxu0 %v122
    %574 = vmatpush.msra.mxu0 %v119
    %575 = vmatpush.msra.mxu0 %v116
    %576 = vmatpush.msra.mxu0 %v113
    %577 = vmatpush.msra.mxu0 %v110
    %578 = vmatpush.msra.mxu0 %v107
    %579 = vmatpush.msra.mxu0 %v104
    %580 = vmatpush.msra.mxu0 %v101
    %581 = vmatmul.f32.gmra.mxu0 %v375
    %v582 = vpop.f32.mrf.mxu0
    %v583 = vadd.f32 %v257, %v582
    %584 = vdwg.mxu0
    %585 = vmatpush.msra.mxu0 %v147
    %586 = vmatpush.msra.mxu0 %v144
    %587 = vmatpush.msra.mxu0 %v141
    %588 = vmatpush.msra.mxu0 %v138
    %589 = vmatpush.msra.mxu0 %v135
    %590 = vmatpush.msra.mxu0 %v132
    %591 = vmatpush.msra.mxu0 %v129
    %592 = vmatpush.msra.mxu0 %v126
    %593 = vmatpush.msra.mxu0 %v123
    %594 = vmatpush.msra.mxu0 %v120
    %595 = vmatpush.msra.mxu0 %v117
    %596 = vmatpush.msra.mxu0 %v114
    %597 = vmatpush.msra.mxu0 %v111
    %598 = vmatpush.msra.mxu0 %v108
    %599 = vmatpush.msra.mxu0 %v105
    %600 = vmatpush.msra.mxu0 %v102
    %601 = vmatmul.f32.gmra.mxu0 %v375
    %v602 = vpop.f32.mrf.mxu0
    %v603 = vadd.f32 %v258, %v602
    %604 = vdwg.mxu0
    %605 = vmatpush.msra.mxu0 %v148
    %606 = vmatpush.msra.mxu0 %v145
    %607 = vmatpush.msra.mxu0 %v142
    %608 = vmatpush.msra.mxu0 %v139
    %609 = vmatpush.msra.mxu0 %v136
    %610 = vmatpush.msra.mxu0 %v133
    %611 = vmatpush.msra.mxu0 %v130
    %612 = vmatpush.msra.mxu0 %v127
    %613 = vmatpush.msra.mxu0 %v124
    %614 = vmatpush.msra.mxu0 %v121
    %615 = vmatpush.msra.mxu0 %v118
    %616 = vmatpush.msra.mxu0 %v115
    %617 = vmatpush.msra.mxu0 %v112
    %618 = vmatpush.msra.mxu0 %v109
    %619 = vmatpush.msra.mxu0 %v106
    %620 = vmatpush.msra.mxu0 %v103
    %621 = vmatmul.f32.gmra.mxu0 %v375
    %v622 = vpop.f32.mrf.mxu0
    %v623 = vadd.f32 %v259, %v622
    %624 = vdwg.mxu0
    %v625 = vadd.f32 %v562, %v583
    %v626 = vxor.u32 %v625, 2147483648
    %v627 = vmul.f32 %v626, 1.442695
    %v628 = vpow.pop %v627
    %v629 = vadd.f32 %v628, 1.0
    %v630 = vrcp.pop %v629
    %v631 = vmul.f32 %v629, %v630
    %v632 = vsub.f32 1.0, %v631
    %v633 = vmul.f32 %v630, %v632
    %v634 = vadd.f32 %v630, %v633
    %vm635 = vweird.f32 %v629
    %vm636 = vweird.f32 %v630
    %vm637 = vmor %vm635, %vm636
    %v638 = vsel %vm637, %v630, %v634
    %v639 = vand.u32 2147483647, %v629
    %vm640 = vcmp.eq.f32.partialorder %v639, 8.507059e+37
    %v641 = vand.u32 %v629, 2147483648
    %v642 = vor.u32 1.1754944e-38, %v641
    %v643 = vsel %vm640, %v642, %v638
    %v644 = vmul.f32 1.0, %v643
    %v645 = vadd.f32 %v563, %v603
    %v646 = vxor.u32 %v645, 2147483648
    %v647 = vmul.f32 %v646, 1.442695
    %v648 = vpow.pop %v647
    %v649 = vadd.f32 %v648, 1.0
    %v650 = vrcp.pop %v649
    %v651 = vmul.f32 %v649, %v650
    %v652 = vsub.f32 1.0, %v651
    %v653 = vmul.f32 %v650, %v652
    %v654 = vadd.f32 %v650, %v653
    %vm655 = vweird.f32 %v649
    %vm656 = vweird.f32 %v650
    %vm657 = vmor %vm655, %vm656
    %v658 = vsel %vm657, %v650, %v654
    %v659 = vand.u32 2147483647, %v649
    %vm660 = vcmp.eq.f32.partialorder %v659, 8.507059e+37
    %v661 = vand.u32 %v649, 2147483648
    %v662 = vor.u32 1.1754944e-38, %v661
    %v663 = vsel %vm660, %v662, %v658
    %v664 = vmul.f32 1.0, %v663
    %v665 = vmul.f32 %v644, %v623
    %v666 = vadd.f32 %v564, %v665
    %v667 = vtanh.pop %v666
    %v668 = vsub.f32 1.0, %v664
    %v669 = vmul.f32 %v668, %v667
    %v670 = vmul.f32 %v664, %v375
    %v671 = vadd.f32 %v669, %v670
    %v672 = vsel %vm560, 1, 0
    %673 = vset.pattern.permute.xlu0 0
    %674 = vperm.xlu0 %673, %v672
    %v675 = vpop.permute.xlu0 %674
    %vm676 = vcmp.eq.s32.totalorder %v675, 1
    %v677 = vsel %vm676, %v671, %v375
    %678 = vmatpush.msra.mxu0 %v195
    %679 = vmatpush.msra.mxu0 %v192
    %680 = vmatpush.msra.mxu0 %v189
    %681 = vmatpush.msra.mxu0 %v186
    %682 = vmatpush.msra.mxu0 %v183
    %683 = vmatpush.msra.mxu0 %v180
    %684 = vmatpush.msra.mxu0 %v177
    %685 = vmatpush.msra.mxu0 %v174
    %686 = vmatpush.msra.mxu0 %v171
    %687 = vmatpush.msra.mxu0 %v168
    %688 = vmatpush.msra.mxu0 %v165
    %689 = vmatpush.msra.mxu0 %v162
    %690 = vmatpush.msra.mxu0 %v159
    %691 = vmatpush.msra.mxu0 %v156
    %692 = vmatpush.msra.mxu0 %v153
    %693 = vmatpush.msra.mxu0 %v150
    %694 = vmatmul.f32.gmra.mxu0 %v671
    %v695 = vpop.f32.mrf.mxu0
    %v696 = vadd.f32 %v377, %v695
    %697 = vdwg.mxu0
    %698 = vmatpush.msra.mxu0 %v196
    %699 = vmatpush.msra.mxu0 %v193
    %700 = vmatpush.msra.mxu0 %v190
    %701 = vmatpush.msra.mxu0 %v187
    %702 = vmatpush.msra.mxu0 %v184
    %703 = vmatpush.msra.mxu0 %v181
    %704 = vmatpush.msra.mxu0 %v178
    %705 = vmatpush.msra.mxu0 %v175
    %706 = vmatpush.msra.mxu0 %v172
    %707 = vmatpush.msra.mxu0 %v169
    %708 = vmatpush.msra.mxu0 %v166
    %709 = vmatpush.msra.mxu0 %v163
    %710 = vmatpush.msra.mxu0 %v160
    %711 = vmatpush.msra.mxu0 %v157
    %712 = vmatpush.msra.mxu0 %v154
    %713 = vmatpush.msra.mxu0 %v151
    %714 = vmatmul.f32.gmra.mxu0 %v671
    %v715 = vpop.f32.mrf.mxu0
    %v716 = vadd.f32 %v378, %v715
    %717 = vdwg.mxu0
    %718 = vmatpush.msra.mxu0 %v197
    %719 = vmatpush.msra.mxu0 %v194
    %720 = vmatpush.msra.mxu0 %v191
    %721 = vmatpush.msra.mxu0 %v188
    %722 = vmatpush.msra.mxu0 %v185
    %723 = vmatpush.msra.mxu0 %v182
    %724 = vmatpush.msra.mxu0 %v179
    %725 = vmatpush.msra.mxu0 %v176
    %726 = vmatpush.msra.mxu0 %v173
    %727 = vmatpush.msra.mxu0 %v170
    %728 = vmatpush.msra.mxu0 %v167
    %729 = vmatpush.msra.mxu0 %v164
    %730 = vmatpush.msra.mxu0 %v161
    %731 = vmatpush.msra.mxu0 %v158
    %732 = vmatpush.msra.mxu0 %v155
    %733 = vmatpush.msra.mxu0 %v152
    %734 = vmatmul.f32.gmra.mxu0 %v671
    %v735 = vpop.f32.mrf.mxu0
    %v736 = vadd.f32 %v379, %v735
    %737 = vdwg.mxu0
    %738 = vmatpush.msra.mxu0 %v244
    %739 = vmatpush.msra.mxu0 %v241
    %740 = vmatpush.msra.mxu0 %v238
    %741 = vmatpush.msra.mxu0 %v235
    %742 = vmatpush.msra.mxu0 %v232
    %743 = vmatpush.msra.mxu0 %v229
    %744 = vmatpush.msra.mxu0 %v226
    %745 = vmatpush.msra.mxu0 %v223
    %746 = vmatpush.msra.mxu0 %v220
    %747 = vmatpush.msra.mxu0 %v217
    %748 = vmatpush.msra.mxu0 %v214
    %749 = vmatpush.msra.mxu0 %v211
    %750 = vmatpush.msra.mxu0 %v208
    %751 = vmatpush.msra.mxu0 %v205
    %752 = vmatpush.msra.mxu0 %v202
    %753 = vmatpush.msra.mxu0 %v199
    %754 = vmatmul.f32.gmra.mxu0 %v557
    %v755 = vpop.f32.mrf.mxu0
    %v756 = vadd.f32 %v444, %v755
    %757 = vdwg.mxu0
    %758 = vmatpush.msra.mxu0 %v245
    %759 = vmatpush.msra.mxu0 %v242
    %760 = vmatpush.msra.mxu0 %v239
    %761 = vmatpush.msra.mxu0 %v236
    %762 = vmatpush.msra.mxu0 %v233
    %763 = vmatpush.msra.mxu0 %v230
    %764 = vmatpush.msra.mxu0 %v227
    %765 = vmatpush.msra.mxu0 %v224
    %766 = vmatpush.msra.mxu0 %v221
    %767 = vmatpush.msra.mxu0 %v218
    %768 = vmatpush.msra.mxu0 %v215
    %769 = vmatpush.msra.mxu0 %v212
    %770 = vmatpush.msra.mxu0 %v209
    %771 = vmatpush.msra.mxu0 %v206
    %772 = vmatpush.msra.mxu0 %v203
    %773 = vmatpush.msra.mxu0 %v200
    %774 = vmatmul.f32.gmra.mxu0 %v557
    %v775 = vpop.f32.mrf.mxu0
    %v776 = vadd.f32 %v445, %v775
    %777 = vdwg.mxu0
    %778 = vmatpush.msra.mxu0 %v246
    %779 = vmatpush.msra.mxu0 %v243
    %780 = vmatpush.msra.mxu0 %v240
    %781 = vmatpush.msra.mxu0 %v237
    %782 = vmatpush.msra.mxu0 %v234
    %783 = vmatpush.msra.mxu0 %v231
    %784 = vmatpush.msra.mxu0 %v228
    %785 = vmatpush.msra.mxu0 %v225
    %786 = vmatpush.msra.mxu0 %v222
    %787 = vmatpush.msra.mxu0 %v219
    %788 = vmatpush.msra.mxu0 %v216
    %789 = vmatpush.msra.mxu0 %v213
    %790 = vmatpush.msra.mxu0 %v210
    %791 = vmatpush.msra.mxu0 %v207
    %792 = vmatpush.msra.mxu0 %v204
    %793 = vmatpush.msra.mxu0 %v201
    %794 = vmatmul.f32.gmra.mxu0 %v557
    %v795 = vpop.f32.mrf.mxu0
    %v796 = vadd.f32 %v446, %v795
    %797 = vdwg.mxu0
    %v798 = vadd.f32 %v696, %v756
    %v799 = vxor.u32 %v798, 2147483648
    %v800 = vmul.f32 %v799, 1.442695
    %v801 = vpow.pop %v800
    %v802 = vadd.f32 %v801, 1.0
    %v803 = vrcp.pop %v802
    %v804 = vmul.f32 %v802, %v803
    %v805 = vsub.f32 1.0, %v804
    %v806 = vmul.f32 %v803, %v805
    %v807 = vadd.f32 %v803, %v806
    %vm808 = vweird.f32 %v802
    %vm809 = vweird.f32 %v803
    %vm810 = vmor %vm808, %vm809
    %v811 = vsel %vm810, %v803, %v807
    %v812 = vand.u32 2147483647, %v802
    %vm813 = vcmp.eq.f32.partialorder %v812, 8.507059e+37
    %v814 = vand.u32 %v802, 2147483648
    %v815 = vor.u32 1.1754944e-38, %v814
    %v816 = vsel %vm813, %v815, %v811
    %v817 = vmul.f32 1.0, %v816
    %v818 = vadd.f32 %v716, %v776
    %v819 = vxor.u32 %v818, 2147483648
    %v820 = vmul.f32 %v819, 1.442695
    %v821 = vpow.pop %v820
    %v822 = vadd.f32 %v821, 1.0
    %v823 = vrcp.pop %v822
    %v824 = vmul.f32 %v822, %v823
    %v825 = vsub.f32 1.0, %v824
    %v826 = vmul.f32 %v823, %v825
    %v827 = vadd.f32 %v823, %v826
    %vm828 = vweird.f32 %v822
    %vm829 = vweird.f32 %v823
    %vm830 = vmor %vm828, %vm829
    %v831 = vsel %vm830, %v823, %v827
    %v832 = vand.u32 2147483647, %v822
    %vm833 = vcmp.eq.f32.partialorder %v832, 8.507059e+37
    %v834 = vand.u32 %v822, 2147483648
    %v835 = vor.u32 1.1754944e-38, %v834
    %v836 = vsel %vm833, %v835, %v831
    %v837 = vmul.f32 1.0, %v836
    %v838 = vmul.f32 %v817, %v796
    %v839 = vadd.f32 %v736, %v838
    %v840 = vtanh.pop %v839
    %v841 = vsub.f32 1.0, %v837
    %v842 = vmul.f32 %v841, %v840
    %v843 = vmul.f32 %v837, %v557
    %v844 = vadd.f32 %v842, %v843
    %v845 = vsel %vm676, %v844, %v557
    %s846 = sadd.s32 %s100, 2
    %v847 = vstv %s846
    %vm848 = vcmp.lt.s32.totalorder %v847, %v99
    %s849 = scalar_lea.vmem [#allocation3], 48
    %v850 = vld [vmem:[%s849] sm:$0xff]
    %v851 = vld [vmem:[%s849 + $0x8] sm:$0xff]
    %v852 = vld [vmem:[%s849 + $0x10] sm:$0xff]
    %853 = vmatpush.msra.mxu0 %v146
    %854 = vmatpush.msra.mxu0 %v143
    %855 = vmatpush.msra.mxu0 %v140
    %856 = vmatpush.msra.mxu0 %v137
    %857 = vmatpush.msra.mxu0 %v134
    %858 = vmatpush.msra.mxu0 %v131
    %859 = vmatpush.msra.mxu0 %v128
    %860 = vmatpush.msra.mxu0 %v125
    %861 = vmatpush.msra.mxu0 %v122
    %862 = vmatpush.msra.mxu0 %v119
    %863 = vmatpush.msra.mxu0 %v116
    %864 = vmatpush.msra.mxu0 %v113
    %865 = vmatpush.msra.mxu0 %v110
    %866 = vmatpush.msra.mxu0 %v107
    %867 = vmatpush.msra.mxu0 %v104
    %868 = vmatpush.msra.mxu0 %v101
    %869 = vmatmul.f32.gmra.mxu0 %v677
    %v870 = vpop.f32.mrf.mxu0
    %v871 = vadd.f32 %v257, %v870
    %872 = vdwg.mxu0
    %873 = vmatpush.msra.mxu0 %v147
    %874 = vmatpush.msra.mxu0 %v144
    %875 = vmatpush.msra.mxu0 %v141
    %876 = vmatpush.msra.mxu0 %v138
    %877 = vmatpush.msra.mxu0 %v135
    %878 = vmatpush.msra.mxu0 %v132
    %879 = vmatpush.msra.mxu0 %v129
    %880 = vmatpush.msra.mxu0 %v126
    %881 = vmatpush.msra.mxu0 %v123
    %882 = vmatpush.msra.mxu0 %v120
    %883 = vmatpush.msra.mxu0 %v117
    %884 = vmatpush.msra.mxu0 %v114
    %885 = vmatpush.msra.mxu0 %v111
    %886 = vmatpush.msra.mxu0 %v108
    %887 = vmatpush.msra.mxu0 %v105
    %888 = vmatpush.msra.mxu0 %v102
    %889 = vmatmul.f32.gmra.mxu0 %v677
    %v890 = vpop.f32.mrf.mxu0
    %v891 = vadd.f32 %v258, %v890
    %892 = vdwg.mxu0
    %893 = vmatpush.msra.mxu0 %v148
    %894 = vmatpush.msra.mxu0 %v145
    %895 = vmatpush.msra.mxu0 %v142
    %896 = vmatpush.msra.mxu0 %v139
    %897 = vmatpush.msra.mxu0 %v136
    %898 = vmatpush.msra.mxu0 %v133
    %899 = vmatpush.msra.mxu0 %v130
    %900 = vmatpush.msra.mxu0 %v127
    %901 = vmatpush.msra.mxu0 %v124
    %902 = vmatpush.msra.mxu0 %v121
    %903 = vmatpush.msra.mxu0 %v118
    %904 = vmatpush.msra.mxu0 %v115
    %905 = vmatpush.msra.mxu0 %v112
    %906 = vmatpush.msra.mxu0 %v109
    %907 = vmatpush.msra.mxu0 %v106
    %908 = vmatpush.msra.mxu0 %v103
    %909 = vmatmul.f32.gmra.mxu0 %v677
    %v910 = vpop.f32.mrf.mxu0
    %v911 = vadd.f32 %v259, %v910
    %912 = vdwg.mxu0
    %v913 = vadd.f32 %v850, %v871
    %v914 = vxor.u32 %v913, 2147483648
    %v915 = vmul.f32 %v914, 1.442695
    %v916 = vpow.pop %v915
    %v917 = vadd.f32 %v916, 1.0
    %v918 = vrcp.pop %v917
    %v919 = vmul.f32 %v917, %v918
    %v920 = vsub.f32 1.0, %v919
    %v921 = vmul.f32 %v918, %v920
    %v922 = vadd.f32 %v918, %v921
    %vm923 = vweird.f32 %v917
    %vm924 = vweird.f32 %v918
    %vm925 = vmor %vm923, %vm924
    %v926 = vsel %vm925, %v918, %v922
    %v927 = vand.u32 2147483647, %v917
    %vm928 = vcmp.eq.f32.partialorder %v927, 8.507059e+37
    %v929 = vand.u32 %v917, 2147483648
    %v930 = vor.u32 1.1754944e-38, %v929
    %v931 = vsel %vm928, %v930, %v926
    %v932 = vmul.f32 1.0, %v931
    %v933 = vadd.f32 %v851, %v891
    %v934 = vxor.u32 %v933, 2147483648
    %v935 = vmul.f32 %v934, 1.442695
    %v936 = vpow.pop %v935
    %v937 = vadd.f32 %v936, 1.0
    %v938 = vrcp.pop %v937
    %v939 = vmul.f32 %v937, %v938
    %v940 = vsub.f32 1.0, %v939
    %v941 = vmul.f32 %v938, %v940
    %v942 = vadd.f32 %v938, %v941
    %vm943 = vweird.f32 %v937
    %vm944 = vweird.f32 %v938
    %vm945 = vmor %vm943, %vm944
    %v946 = vsel %vm945, %v938, %v942
    %v947 = vand.u32 2147483647, %v937
    %vm948 = vcmp.eq.f32.partialorder %v947, 8.507059e+37
    %v949 = vand.u32 %v937, 2147483648
    %v950 = vor.u32 1.1754944e-38, %v949
    %v951 = vsel %vm948, %v950, %v946
    %v952 = vmul.f32 1.0, %v951
    %v953 = vmul.f32 %v932, %v911
    %v954 = vadd.f32 %v852, %v953
    %v955 = vtanh.pop %v954
    %v956 = vsub.f32 1.0, %v952
    %v957 = vmul.f32 %v956, %v955
    %v958 = vmul.f32 %v952, %v677
    %v959 = vadd.f32 %v957, %v958
    %v960 = vsel %vm848, 1, 0
    %961 = vset.pattern.permute.xlu0 0
    %962 = vperm.xlu0 %961, %v960
    %v963 = vpop.permute.xlu0 %962
    %vm964 = vcmp.eq.s32.totalorder %v963, 1
    %v965 = vsel %vm964, %v959, %v677
    %966 = vmatpush.msra.mxu0 %v195
    %967 = vmatpush.msra.mxu0 %v192
    %968 = vmatpush.msra.mxu0 %v189
    %969 = vmatpush.msra.mxu0 %v186
    %970 = vmatpush.msra.mxu0 %v183
    %971 = vmatpush.msra.mxu0 %v180
    %972 = vmatpush.msra.mxu0 %v177
    %973 = vmatpush.msra.mxu0 %v174
    %974 = vmatpush.msra.mxu0 %v171
    %975 = vmatpush.msra.mxu0 %v168
    %976 = vmatpush.msra.mxu0 %v165
    %977 = vmatpush.msra.mxu0 %v162
    %978 = vmatpush.msra.mxu0 %v159
    %979 = vmatpush.msra.mxu0 %v156
    %980 = vmatpush.msra.mxu0 %v153
    %981 = vmatpush.msra.mxu0 %v150
    %982 = vmatmul.f32.gmra.mxu0 %v959
    %v983 = vpop.f32.mrf.mxu0
    %v984 = vadd.f32 %v377, %v983
    %985 = vdwg.mxu0
    %986 = vmatpush.msra.mxu0 %v196
    %987 = vmatpush.msra.mxu0 %v193
    %988 = vmatpush.msra.mxu0 %v190
    %989 = vmatpush.msra.mxu0 %v187
    %990 = vmatpush.msra.mxu0 %v184
    %991 = vmatpush.msra.mxu0 %v181
    %992 = vmatpush.msra.mxu0 %v178
    %993 = vmatpush.msra.mxu0 %v175
    %994 = vmatpush.msra.mxu0 %v172
    %995 = vmatpush.msra.mxu0 %v169
    %996 = vmatpush.msra.mxu0 %v166
    %997 = vmatpush.msra.mxu0 %v163
    %998 = vmatpush.msra.mxu0 %v160
    %999 = vmatpush.msra.mxu0 %v157
    %1000 = vmatpush.msra.mxu0 %v154
    %1001 = vmatpush.msra.mxu0 %v151
    %1002 = vmatmul.f32.gmra.mxu0 %v959
    %v1003 = vpop.f32.mrf.mxu0
    %v1004 = vadd.f32 %v378, %v1003
    %1005 = vdwg.mxu0
    %1006 = vmatpush.msra.mxu0 %v197
    %1007 = vmatpush.msra.mxu0 %v194
    %1008 = vmatpush.msra.mxu0 %v191
    %1009 = vmatpush.msra.mxu0 %v188
    %1010 = vmatpush.msra.mxu0 %v185
    %1011 = vmatpush.msra.mxu0 %v182
    %1012 = vmatpush.msra.mxu0 %v179
    %1013 = vmatpush.msra.mxu0 %v176
    %1014 = vmatpush.msra.mxu0 %v173
    %1015 = vmatpush.msra.mxu0 %v170
    %1016 = vmatpush.msra.mxu0 %v167
    %1017 = vmatpush.msra.mxu0 %v164
    %1018 = vmatpush.msra.mxu0 %v161
    %1019 = vmatpush.msra.mxu0 %v158
    %1020 = vmatpush.msra.mxu0 %v155
    %1021 = vmatpush.msra.mxu0 %v152
    %1022 = vmatmul.f32.gmra.mxu0 %v959
    %v1023 = vpop.f32.mrf.mxu0
    %v1024 = vadd.f32 %v379, %v1023
    %1025 = vdwg.mxu0
    %1026 = vmatpush.msra.mxu0 %v244
    %1027 = vmatpush.msra.mxu0 %v241
    %1028 = vmatpush.msra.mxu0 %v238
    %1029 = vmatpush.msra.mxu0 %v235
    %1030 = vmatpush.msra.mxu0 %v232
    %1031 = vmatpush.msra.mxu0 %v229
    %1032 = vmatpush.msra.mxu0 %v226
    %1033 = vmatpush.msra.mxu0 %v223
    %1034 = vmatpush.msra.mxu0 %v220
    %1035 = vmatpush.msra.mxu0 %v217
    %1036 = vmatpush.msra.mxu0 %v214
    %1037 = vmatpush.msra.mxu0 %v211
    %1038 = vmatpush.msra.mxu0 %v208
    %1039 = vmatpush.msra.mxu0 %v205
    %1040 = vmatpush.msra.mxu0 %v202
    %1041 = vmatpush.msra.mxu0 %v199
    %1042 = vmatmul.f32.gmra.mxu0 %v845
    %v1043 = vpop.f32.mrf.mxu0
    %v1044 = vadd.f32 %v444, %v1043
    %1045 = vdwg.mxu0
    %1046 = vmatpush.msra.mxu0 %v245
    %1047 = vmatpush.msra.mxu0 %v242
    %1048 = vmatpush.msra.mxu0 %v239
    %1049 = vmatpush.msra.mxu0 %v236
    %1050 = vmatpush.msra.mxu0 %v233
    %1051 = vmatpush.msra.mxu0 %v230
    %1052 = vmatpush.msra.mxu0 %v227
    %1053 = vmatpush.msra.mxu0 %v224
    %1054 = vmatpush.msra.mxu0 %v221
    %1055 = vmatpush.msra.mxu0 %v218
    %1056 = vmatpush.msra.mxu0 %v215
    %1057 = vmatpush.msra.mxu0 %v212
    %1058 = vmatpush.msra.mxu0 %v209
    %1059 = vmatpush.msra.mxu0 %v206
    %1060 = vmatpush.msra.mxu0 %v203
    %1061 = vmatpush.msra.mxu0 %v200
    %1062 = vmatmul.f32.gmra.mxu0 %v845
    %v1063 = vpop.f32.mrf.mxu0
    %v1064 = vadd.f32 %v445, %v1063
    %1065 = vdwg.mxu0
    %1066 = vmatpush.msra.mxu0 %v246
    %1067 = vmatpush.msra.mxu0 %v243
    %1068 = vmatpush.msra.mxu0 %v240
    %1069 = vmatpush.msra.mxu0 %v237
    %1070 = vmatpush.msra.mxu0 %v234
    %1071 = vmatpush.msra.mxu0 %v231
    %1072 = vmatpush.msra.mxu0 %v228
    %1073 = vmatpush.msra.mxu0 %v225
    %1074 = vmatpush.msra.mxu0 %v222
    %1075 = vmatpush.msra.mxu0 %v219
    %1076 = vmatpush.msra.mxu0 %v216
    %1077 = vmatpush.msra.mxu0 %v213
    %1078 = vmatpush.msra.mxu0 %v210
    %1079 = vmatpush.msra.mxu0 %v207
    %1080 = vmatpush.msra.mxu0 %v204
    %1081 = vmatpush.msra.mxu0 %v201
    %1082 = vmatmul.f32.gmra.mxu0 %v845
    %v1083 = vpop.f32.mrf.mxu0
    %v1084 = vadd.f32 %v446, %v1083
    %1085 = vdwg.mxu0
    %v1086 = vadd.f32 %v984, %v1044
    %v1087 = vxor.u32 %v1086, 2147483648
    %v1088 = vmul.f32 %v1087, 1.442695
    %v1089 = vpow.pop %v1088
    %v1090 = vadd.f32 %v1089, 1.0
    %v1091 = vrcp.pop %v1090
    %v1092 = vmul.f32 %v1090, %v1091
    %v1093 = vsub.f32 1.0, %v1092
    %v1094 = vmul.f32 %v1091, %v1093
    %v1095 = vadd.f32 %v1091, %v1094
    %vm1096 = vweird.f32 %v1090
    %vm1097 = vweird.f32 %v1091
    %vm1098 = vmor %vm1096, %vm1097
    %v1099 = vsel %vm1098, %v1091, %v1095
    %v1100 = vand.u32 2147483647, %v1090
    %vm1101 = vcmp.eq.f32.partialorder %v1100, 8.507059e+37
    %v1102 = vand.u32 %v1090, 2147483648
    %v1103 = vor.u32 1.1754944e-38, %v1102
    %v1104 = vsel %vm1101, %v1103, %v1099
    %v1105 = vmul.f32 1.0, %v1104
    %v1106 = vadd.f32 %v1004, %v1064
    %v1107 = vxor.u32 %v1106, 2147483648
    %v1108 = vmul.f32 %v1107, 1.442695
    %v1109 = vpow.pop %v1108
    %v1110 = vadd.f32 %v1109, 1.0
    %v1111 = vrcp.pop %v1110
    %v1112 = vmul.f32 %v1110, %v1111
    %v1113 = vsub.f32 1.0, %v1112
    %v1114 = vmul.f32 %v1111, %v1113
    %v1115 = vadd.f32 %v1111, %v1114
    %vm1116 = vweird.f32 %v1110
    %vm1117 = vweird.f32 %v1111
    %vm1118 = vmor %vm1116, %vm1117
    %v1119 = vsel %vm1118, %v1111, %v1115
    %v1120 = vand.u32 2147483647, %v1110
    %vm1121 = vcmp.eq.f32.partialorder %v1120, 8.507059e+37
    %v1122 = vand.u32 %v1110, 2147483648
    %v1123 = vor.u32 1.1754944e-38, %v1122
    %v1124 = vsel %vm1121, %v1123, %v1119
    %v1125 = vmul.f32 1.0, %v1124
    %v1126 = vmul.f32 %v1105, %v1084
    %v1127 = vadd.f32 %v1024, %v1126
    %v1128 = vtanh.pop %v1127
    %v1129 = vsub.f32 1.0, %v1125
    %v1130 = vmul.f32 %v1129, %v1128
    %v1131 = vmul.f32 %v1125, %v845
    %v1132 = vadd.f32 %v1130, %v1131
    %v1133 = vsel %vm964, %v1132, %v845
    %s1134 = sadd.s32 %s100, 3
    %v1135 = vstv %s1134
    %vm1136 = vcmp.lt.s32.totalorder %v1135, %v99
    %s1137 = scalar_lea.vmem [#allocation3], 72
    %v1138 = vld [vmem:[%s1137] sm:$0xff]
    %v1139 = vld [vmem:[%s1137 + $0x8] sm:$0xff]
    %v1140 = vld [vmem:[%s1137 + $0x10] sm:$0xff]
    %1141 = vmatpush.msra.mxu0 %v146
    %1142 = vmatpush.msra.mxu0 %v143
    %1143 = vmatpush.msra.mxu0 %v140
    %1144 = vmatpush.msra.mxu0 %v137
    %1145 = vmatpush.msra.mxu0 %v134
    %1146 = vmatpush.msra.mxu0 %v131
    %1147 = vmatpush.msra.mxu0 %v128
    %1148 = vmatpush.msra.mxu0 %v125
    %1149 = vmatpush.msra.mxu0 %v122
    %1150 = vmatpush.msra.mxu0 %v119
    %1151 = vmatpush.msra.mxu0 %v116
    %1152 = vmatpush.msra.mxu0 %v113
    %1153 = vmatpush.msra.mxu0 %v110
    %1154 = vmatpush.msra.mxu0 %v107
    %1155 = vmatpush.msra.mxu0 %v104
    %1156 = vmatpush.msra.mxu0 %v101
    %1157 = vmatmul.f32.gmra.mxu0 %v965
    %v1158 = vpop.f32.mrf.mxu0
    %v1159 = vadd.f32 %v257, %v1158
    %1160 = vdwg.mxu0
    %1161 = vmatpush.msra.mxu0 %v147
    %1162 = vmatpush.msra.mxu0 %v144
    %1163 = vmatpush.msra.mxu0 %v141
    %1164 = vmatpush.msra.mxu0 %v138
    %1165 = vmatpush.msra.mxu0 %v135
    %1166 = vmatpush.msra.mxu0 %v132
    %1167 = vmatpush.msra.mxu0 %v129
    %1168 = vmatpush.msra.mxu0 %v126
    %1169 = vmatpush.msra.mxu0 %v123
    %1170 = vmatpush.msra.mxu0 %v120
    %1171 = vmatpush.msra.mxu0 %v117
    %1172 = vmatpush.msra.mxu0 %v114
    %1173 = vmatpush.msra.mxu0 %v111
    %1174 = vmatpush.msra.mxu0 %v108
    %1175 = vmatpush.msra.mxu0 %v105
    %1176 = vmatpush.msra.mxu0 %v102
    %1177 = vmatmul.f32.gmra.mxu0 %v965
    %v1178 = vpop.f32.mrf.mxu0
    %v1179 = vadd.f32 %v258, %v1178
    %1180 = vdwg.mxu0
    %1181 = vmatpush.msra.mxu0 %v148
    %1182 = vmatpush.msra.mxu0 %v145
    %1183 = vmatpush.msra.mxu0 %v142
    %1184 = vmatpush.msra.mxu0 %v139
    %1185 = vmatpush.msra.mxu0 %v136
    %1186 = vmatpush.msra.mxu0 %v133
    %1187 = vmatpush.msra.mxu0 %v130
    %1188 = vmatpush.msra.mxu0 %v127
    %1189 = vmatpush.msra.mxu0 %v124
    %1190 = vmatpush.msra.mxu0 %v121
    %1191 = vmatpush.msra.mxu0 %v118
    %1192 = vmatpush.msra.mxu0 %v115
    %1193 = vmatpush.msra.mxu0 %v112
    %1194 = vmatpush.msra.mxu0 %v109
    %1195 = vmatpush.msra.mxu0 %v106
    %1196 = vmatpush.msra.mxu0 %v103
    %1197 = vmatmul.f32.gmra.mxu0 %v965
    %v1198 = vpop.f32.mrf.mxu0
    %v1199 = vadd.f32 %v259, %v1198
    %1200 = vdwg.mxu0
    %v1201 = vadd.f32 %v1138, %v1159
    %v1202 = vxor.u32 %v1201, 2147483648
    %v1203 = vmul.f32 %v1202, 1.442695
    %v1204 = vpow.pop %v1203
    %v1205 = vadd.f32 %v1204, 1.0
    %v1206 = vrcp.pop %v1205
    %v1207 = vmul.f32 %v1205, %v1206
    %v1208 = vsub.f32 1.0, %v1207
    %v1209 = vmul.f32 %v1206, %v1208
    %v1210 = vadd.f32 %v1206, %v1209
    %vm1211 = vweird.f32 %v1205
    %vm1212 = vweird.f32 %v1206
    %vm1213 = vmor %vm1211, %vm1212
    %v1214 = vsel %vm1213, %v1206, %v1210
    %v1215 = vand.u32 2147483647, %v1205
    %vm1216 = vcmp.eq.f32.partialorder %v1215, 8.507059e+37
    %v1217 = vand.u32 %v1205, 2147483648
    %v1218 = vor.u32 1.1754944e-38, %v1217
    %v1219 = vsel %vm1216, %v1218, %v1214
    %v1220 = vmul.f32 1.0, %v1219
    %v1221 = vadd.f32 %v1139, %v1179
    %v1222 = vxor.u32 %v1221, 2147483648
    %v1223 = vmul.f32 %v1222, 1.442695
    %v1224 = vpow.pop %v1223
    %v1225 = vadd.f32 %v1224, 1.0
    %v1226 = vrcp.pop %v1225
    %v1227 = vmul.f32 %v1225, %v1226
    %v1228 = vsub.f32 1.0, %v1227
    %v1229 = vmul.f32 %v1226, %v1228
    %v1230 = vadd.f32 %v1226, %v1229
    %vm1231 = vweird.f32 %v1225
    %vm1232 = vweird.f32 %v1226
    %vm1233 = vmor %vm1231, %vm1232
    %v1234 = vsel %vm1233, %v1226, %v1230
    %v1235 = vand.u32 2147483647, %v1225
    %vm1236 = vcmp.eq.f32.partialorder %v1235, 8.507059e+37
    %v1237 = vand.u32 %v1225, 2147483648
    %v1238 = vor.u32 1.1754944e-38, %v1237
    %v1239 = vsel %vm1236, %v1238, %v1234
    %v1240 = vmul.f32 1.0, %v1239
    %v1241 = vmul.f32 %v1220, %v1199
    %v1242 = vadd.f32 %v1140, %v1241
    %v1243 = vtanh.pop %v1242
    %v1244 = vsub.f32 1.0, %v1240
    %v1245 = vmul.f32 %v1244, %v1243
    %v1246 = vmul.f32 %v1240, %v965
    %v1247 = vadd.f32 %v1245, %v1246
    %v1248 = vsel %vm1136, 1, 0
    %1249 = vset.pattern.permute.xlu0 0
    %1250 = vperm.xlu0 %1249, %v1248
    %v1251 = vpop.permute.xlu0 %1250
    %vm1252 = vcmp.eq.s32.totalorder %v1251, 1
    %v1253 = vsel %vm1252, %v1247, %v965
    %1254 = vmatpush.msra.mxu0 %v195
    %1255 = vmatpush.msra.mxu0 %v192
    %1256 = vmatpush.msra.mxu0 %v189
    %1257 = vmatpush.msra.mxu0 %v186
    %1258 = vmatpush.msra.mxu0 %v183
    %1259 = vmatpush.msra.mxu0 %v180
    %1260 = vmatpush.msra.mxu0 %v177
    %1261 = vmatpush.msra.mxu0 %v174
    %1262 = vmatpush.msra.mxu0 %v171
    %1263 = vmatpush.msra.mxu0 %v168
    %1264 = vmatpush.msra.mxu0 %v165
    %1265 = vmatpush.msra.mxu0 %v162
    %1266 = vmatpush.msra.mxu0 %v159
    %1267 = vmatpush.msra.mxu0 %v156
    %1268 = vmatpush.msra.mxu0 %v153
    %1269 = vmatpush.msra.mxu0 %v150
    %1270 = vmatmul.f32.gmra.mxu0 %v1247
    %v1271 = vpop.f32.mrf.mxu0
    %v1272 = vadd.f32 %v377, %v1271
    %1273 = vdwg.mxu0
    %1274 = vmatpush.msra.mxu0 %v196
    %1275 = vmatpush.msra.mxu0 %v193
    %1276 = vmatpush.msra.mxu0 %v190
    %1277 = vmatpush.msra.mxu0 %v187
    %1278 = vmatpush.msra.mxu0 %v184
    %1279 = vmatpush.msra.mxu0 %v181
    %1280 = vmatpush.msra.mxu0 %v178
    %1281 = vmatpush.msra.mxu0 %v175
    %1282 = vmatpush.msra.mxu0 %v172
    %1283 = vmatpush.msra.mxu0 %v169
    %1284 = vmatpush.msra.mxu0 %v166
    %1285 = vmatpush.msra.mxu0 %v163
    %1286 = vmatpush.msra.mxu0 %v160
    %1287 = vmatpush.msra.mxu0 %v157
    %1288 = vmatpush.msra.mxu0 %v154
    %1289 = vmatpush.msra.mxu0 %v151
    %1290 = vmatmul.f32.gmra.mxu0 %v1247
    %v1291 = vpop.f32.mrf.mxu0
    %v1292 = vadd.f32 %v378, %v1291
    %1293 = vdwg.mxu0
    %1294 = vmatpush.msra.mxu0 %v197
    %1295 = vmatpush.msra.mxu0 %v194
    %1296 = vmatpush.msra.mxu0 %v191
    %1297 = vmatpush.msra.mxu0 %v188
    %1298 = vmatpush.msra.mxu0 %v185
    %1299 = vmatpush.msra.mxu0 %v182
    %1300 = vmatpush.msra.mxu0 %v179
    %1301 = vmatpush.msra.mxu0 %v176
    %1302 = vmatpush.msra.mxu0 %v173
    %1303 = vmatpush.msra.mxu0 %v170
    %1304 = vmatpush.msra.mxu0 %v167
    %1305 = vmatpush.msra.mxu0 %v164
    %1306 = vmatpush.msra.mxu0 %v161
    %1307 = vmatpush.msra.mxu0 %v158
    %1308 = vmatpush.msra.mxu0 %v155
    %1309 = vmatpush.msra.mxu0 %v152
    %1310 = vmatmul.f32.gmra.mxu0 %v1247
    %v1311 = vpop.f32.mrf.mxu0
    %v1312 = vadd.f32 %v379, %v1311
    %1313 = vdwg.mxu0
    %1314 = vmatpush.msra.mxu0 %v244
    %1315 = vmatpush.msra.mxu0 %v241
    %1316 = vmatpush.msra.mxu0 %v238
    %1317 = vmatpush.msra.mxu0 %v235
    %1318 = vmatpush.msra.mxu0 %v232
    %1319 = vmatpush.msra.mxu0 %v229
    %1320 = vmatpush.msra.mxu0 %v226
    %1321 = vmatpush.msra.mxu0 %v223
    %1322 = vmatpush.msra.mxu0 %v220
    %1323 = vmatpush.msra.mxu0 %v217
    %1324 = vmatpush.msra.mxu0 %v214
    %1325 = vmatpush.msra.mxu0 %v211
    %1326 = vmatpush.msra.mxu0 %v208
    %1327 = vmatpush.msra.mxu0 %v205
    %1328 = vmatpush.msra.mxu0 %v202
    %1329 = vmatpush.msra.mxu0 %v199
    %1330 = vmatmul.f32.gmra.mxu0 %v1133
    %v1331 = vpop.f32.mrf.mxu0
    %v1332 = vadd.f32 %v444, %v1331
    %1333 = vdwg.mxu0
    %1334 = vmatpush.msra.mxu0 %v245
    %1335 = vmatpush.msra.mxu0 %v242
    %1336 = vmatpush.msra.mxu0 %v239
    %1337 = vmatpush.msra.mxu0 %v236
    %1338 = vmatpush.msra.mxu0 %v233
    %1339 = vmatpush.msra.mxu0 %v230
    %1340 = vmatpush.msra.mxu0 %v227
    %1341 = vmatpush.msra.mxu0 %v224
    %1342 = vmatpush.msra.mxu0 %v221
    %1343 = vmatpush.msra.mxu0 %v218
    %1344 = vmatpush.msra.mxu0 %v215
    %1345 = vmatpush.msra.mxu0 %v212
    %1346 = vmatpush.msra.mxu0 %v209
    %1347 = vmatpush.msra.mxu0 %v206
    %1348 = vmatpush.msra.mxu0 %v203
    %1349 = vmatpush.msra.mxu0 %v200
    %1350 = vmatmul.f32.gmra.mxu0 %v1133
    %v1351 = vpop.f32.mrf.mxu0
    %v1352 = vadd.f32 %v445, %v1351
    %1353 = vdwg.mxu0
    %1354 = vmatpush.msra.mxu0 %v246
    %1355 = vmatpush.msra.mxu0 %v243
    %1356 = vmatpush.msra.mxu0 %v240
    %1357 = vmatpush.msra.mxu0 %v237
    %1358 = vmatpush.msra.mxu0 %v234
    %1359 = vmatpush.msra.mxu0 %v231
    %1360 = vmatpush.msra.mxu0 %v228
    %1361 = vmatpush.msra.mxu0 %v225
    %1362 = vmatpush.msra.mxu0 %v222
    %1363 = vmatpush.msra.mxu0 %v219
    %1364 = vmatpush.msra.mxu0 %v216
    %1365 = vmatpush.msra.mxu0 %v213
    %1366 = vmatpush.msra.mxu0 %v210
    %1367 = vmatpush.msra.mxu0 %v207
    %1368 = vmatpush.msra.mxu0 %v204
    %1369 = vmatpush.msra.mxu0 %v201
    %1370 = vmatmul.f32.gmra.mxu0 %v1133
    %v1371 = vpop.f32.mrf.mxu0
    %v1372 = vadd.f32 %v446, %v1371
    %1373 = vdwg.mxu0
    %v1374 = vadd.f32 %v1272, %v1332
    %v1375 = vxor.u32 %v1374, 2147483648
    %v1376 = vmul.f32 %v1375, 1.442695
    %v1377 = vpow.pop %v1376
    %v1378 = vadd.f32 %v1377, 1.0
    %v1379 = vrcp.pop %v1378
    %v1380 = vmul.f32 %v1378, %v1379
    %v1381 = vsub.f32 1.0, %v1380
    %v1382 = vmul.f32 %v1379, %v1381
    %v1383 = vadd.f32 %v1379, %v1382
    %vm1384 = vweird.f32 %v1378
    %vm1385 = vweird.f32 %v1379
    %vm1386 = vmor %vm1384, %vm1385
    %v1387 = vsel %vm1386, %v1379, %v1383
    %v1388 = vand.u32 2147483647, %v1378
    %vm1389 = vcmp.eq.f32.partialorder %v1388, 8.507059e+37
    %v1390 = vand.u32 %v1378, 2147483648
    %v1391 = vor.u32 1.1754944e-38, %v1390
    %v1392 = vsel %vm1389, %v1391, %v1387
    %v1393 = vmul.f32 1.0, %v1392
    %v1394 = vadd.f32 %v1292, %v1352
    %v1395 = vxor.u32 %v1394, 2147483648
    %v1396 = vmul.f32 %v1395, 1.442695
    %v1397 = vpow.pop %v1396
    %v1398 = vadd.f32 %v1397, 1.0
    %v1399 = vrcp.pop %v1398
    %v1400 = vmul.f32 %v1398, %v1399
    %v1401 = vsub.f32 1.0, %v1400
    %v1402 = vmul.f32 %v1399, %v1401
    %v1403 = vadd.f32 %v1399, %v1402
    %vm1404 = vweird.f32 %v1398
    %vm1405 = vweird.f32 %v1399
    %vm1406 = vmor %vm1404, %vm1405
    %v1407 = vsel %vm1406, %v1399, %v1403
    %v1408 = vand.u32 2147483647, %v1398
    %vm1409 = vcmp.eq.f32.partialorder %v1408, 8.507059e+37
    %v1410 = vand.u32 %v1398, 2147483648
    %v1411 = vor.u32 1.1754944e-38, %v1410
    %v1412 = vsel %vm1409, %v1411, %v1407
    %v1413 = vmul.f32 1.0, %v1412
    %v1414 = vmul.f32 %v1393, %v1372
    %v1415 = vadd.f32 %v1312, %v1414
    %v1416 = vtanh.pop %v1415
    %v1417 = vsub.f32 1.0, %v1413
    %v1418 = vmul.f32 %v1417, %v1416
    %v1419 = vmul.f32 %v1413, %v1133
    %v1420 = vadd.f32 %v1418, %v1419
    %v1421 = vsel %vm1252, %v1420, %v1133
    %s1422 = sadd.s32 %s100, 4
    %v1423 = vstv %s1422
    %vm1424 = vcmp.lt.s32.totalorder %v1423, %v99
    %s1425 = scalar_lea.vmem [#allocation3], 96
    %v1426 = vld [vmem:[%s1425] sm:$0xff]
    %v1427 = vld [vmem:[%s1425 + $0x8] sm:$0xff]
    %v1428 = vld [vmem:[%s1425 + $0x10] sm:$0xff]
    %1429 = vmatpush.msra.mxu0 %v146
    %1430 = vmatpush.msra.mxu0 %v143
    %1431 = vmatpush.msra.mxu0 %v140
    %1432 = vmatpush.msra.mxu0 %v137
    %1433 = vmatpush.msra.mxu0 %v134
    %1434 = vmatpush.msra.mxu0 %v131
    %1435 = vmatpush.msra.mxu0 %v128
    %1436 = vmatpush.msra.mxu0 %v125
    %1437 = vmatpush.msra.mxu0 %v122
    %1438 = vmatpush.msra.mxu0 %v119
    %1439 = vmatpush.msra.mxu0 %v116
    %1440 = vmatpush.msra.mxu0 %v113
    %1441 = vmatpush.msra.mxu0 %v110
    %1442 = vmatpush.msra.mxu0 %v107
    %1443 = vmatpush.msra.mxu0 %v104
    %1444 = vmatpush.msra.mxu0 %v101
    %1445 = vmatmul.f32.gmra.mxu0 %v1253
    %v1446 = vpop.f32.mrf.mxu0
    %v1447 = vadd.f32 %v257, %v1446
    %1448 = vdwg.mxu0
    %1449 = vmatpush.msra.mxu0 %v147
    %1450 = vmatpush.msra.mxu0 %v144
    %1451 = vmatpush.msra.mxu0 %v141
    %1452 = vmatpush.msra.mxu0 %v138
    %1453 = vmatpush.msra.mxu0 %v135
    %1454 = vmatpush.msra.mxu0 %v132
    %1455 = vmatpush.msra.mxu0 %v129
    %1456 = vmatpush.msra.mxu0 %v126
    %1457 = vmatpush.msra.mxu0 %v123
    %1458 = vmatpush.msra.mxu0 %v120
    %1459 = vmatpush.msra.mxu0 %v117
    %1460 = vmatpush.msra.mxu0 %v114
    %1461 = vmatpush.msra.mxu0 %v111
    %1462 = vmatpush.msra.mxu0 %v108
    %1463 = vmatpush.msra.mxu0 %v105
    %1464 = vmatpush.msra.mxu0 %v102
    %1465 = vmatmul.f32.gmra.mxu0 %v1253
    %v1466 = vpop.f32.mrf.mxu0
    %v1467 = vadd.f32 %v258, %v1466
    %1468 = vdwg.mxu0
    %1469 = vmatpush.msra.mxu0 %v148
    %1470 = vmatpush.msra.mxu0 %v145
    %1471 = vmatpush.msra.mxu0 %v142
    %1472 = vmatpush.msra.mxu0 %v139
    %1473 = vmatpush.msra.mxu0 %v136
    %1474 = vmatpush.msra.mxu0 %v133
    %1475 = vmatpush.msra.mxu0 %v130
    %1476 = vmatpush.msra.mxu0 %v127
    %1477 = vmatpush.msra.mxu0 %v124
    %1478 = vmatpush.msra.mxu0 %v121
    %1479 = vmatpush.msra.mxu0 %v118
    %1480 = vmatpush.msra.mxu0 %v115
    %1481 = vmatpush.msra.mxu0 %v112
    %1482 = vmatpush.msra.mxu0 %v109
    %1483 = vmatpush.msra.mxu0 %v106
    %1484 = vmatpush.msra.mxu0 %v103
    %1485 = vmatmul.f32.gmra.mxu0 %v1253
    %v1486 = vpop.f32.mrf.mxu0
    %v1487 = vadd.f32 %v259, %v1486
    %1488 = vdwg.mxu0
    %v1489 = vadd.f32 %v1426, %v1447
    %v1490 = vxor.u32 %v1489, 2147483648
    %v1491 = vmul.f32 %v1490, 1.442695
    %v1492 = vpow.pop %v1491
    %v1493 = vadd.f32 %v1492, 1.0
    %v1494 = vrcp.pop %v1493
    %v1495 = vmul.f32 %v1493, %v1494
    %v1496 = vsub.f32 1.0, %v1495
    %v1497 = vmul.f32 %v1494, %v1496
    %v1498 = vadd.f32 %v1494, %v1497
    %vm1499 = vweird.f32 %v1493
    %vm1500 = vweird.f32 %v1494
    %vm1501 = vmor %vm1499, %vm1500
    %v1502 = vsel %vm1501, %v1494, %v1498
    %v1503 = vand.u32 2147483647, %v1493
    %vm1504 = vcmp.eq.f32.partialorder %v1503, 8.507059e+37
    %v1505 = vand.u32 %v1493, 2147483648
    %v1506 = vor.u32 1.1754944e-38, %v1505
    %v1507 = vsel %vm1504, %v1506, %v1502
    %v1508 = vmul.f32 1.0, %v1507
    %v1509 = vadd.f32 %v1427, %v1467
    %v1510 = vxor.u32 %v1509, 2147483648
    %v1511 = vmul.f32 %v1510, 1.442695
    %v1512 = vpow.pop %v1511
    %v1513 = vadd.f32 %v1512, 1.0
    %v1514 = vrcp.pop %v1513
    %v1515 = vmul.f32 %v1513, %v1514
    %v1516 = vsub.f32 1.0, %v1515
    %v1517 = vmul.f32 %v1514, %v1516
    %v1518 = vadd.f32 %v1514, %v1517
    %vm1519 = vweird.f32 %v1513
    %vm1520 = vweird.f32 %v1514
    %vm1521 = vmor %vm1519, %vm1520
    %v1522 = vsel %vm1521, %v1514, %v1518
    %v1523 = vand.u32 2147483647, %v1513
    %vm1524 = vcmp.eq.f32.partialorder %v1523, 8.507059e+37
    %v1525 = vand.u32 %v1513, 2147483648
    %v1526 = vor.u32 1.1754944e-38, %v1525
    %v1527 = vsel %vm1524, %v1526, %v1522
    %v1528 = vmul.f32 1.0, %v1527
    %v1529 = vmul.f32 %v1508, %v1487
    %v1530 = vadd.f32 %v1428, %v1529
    %v1531 = vtanh.pop %v1530
    %v1532 = vsub.f32 1.0, %v1528
    %v1533 = vmul.f32 %v1532, %v1531
    %v1534 = vmul.f32 %v1528, %v1253
    %v1535 = vadd.f32 %v1533, %v1534
    %v1536 = vsel %vm1424, 1, 0
    %1537 = vset.pattern.permute.xlu0 0
    %1538 = vperm.xlu0 %1537, %v1536
    %v1539 = vpop.permute.xlu0 %1538
    %vm1540 = vcmp.eq.s32.totalorder %v1539, 1
    %v1541 = vsel %vm1540, %v1535, %v1253
    %1542 = vmatpush.msra.mxu0 %v195
    %1543 = vmatpush.msra.mxu0 %v192
    %1544 = vmatpush.msra.mxu0 %v189
    %1545 = vmatpush.msra.mxu0 %v186
    %1546 = vmatpush.msra.mxu0 %v183
    %1547 = vmatpush.msra.mxu0 %v180
    %1548 = vmatpush.msra.mxu0 %v177
    %1549 = vmatpush.msra.mxu0 %v174
    %1550 = vmatpush.msra.mxu0 %v171
    %1551 = vmatpush.msra.mxu0 %v168
    %1552 = vmatpush.msra.mxu0 %v165
    %1553 = vmatpush.msra.mxu0 %v162
    %1554 = vmatpush.msra.mxu0 %v159
    %1555 = vmatpush.msra.mxu0 %v156
    %1556 = vmatpush.msra.mxu0 %v153
    %1557 = vmatpush.msra.mxu0 %v150
    %1558 = vmatmul.f32.gmra.mxu0 %v1535
    %v1559 = vpop.f32.mrf.mxu0
    %v1560 = vadd.f32 %v377, %v1559
    %1561 = vdwg.mxu0
    %1562 = vmatpush.msra.mxu0 %v196
    %1563 = vmatpush.msra.mxu0 %v193
    %1564 = vmatpush.msra.mxu0 %v190
    %1565 = vmatpush.msra.mxu0 %v187
    %1566 = vmatpush.msra.mxu0 %v184
    %1567 = vmatpush.msra.mxu0 %v181
    %1568 = vmatpush.msra.mxu0 %v178
    %1569 = vmatpush.msra.mxu0 %v175
    %1570 = vmatpush.msra.mxu0 %v172
    %1571 = vmatpush.msra.mxu0 %v169
    %1572 = vmatpush.msra.mxu0 %v166
    %1573 = vmatpush.msra.mxu0 %v163
    %1574 = vmatpush.msra.mxu0 %v160
    %1575 = vmatpush.msra.mxu0 %v157
    %1576 = vmatpush.msra.mxu0 %v154
    %1577 = vmatpush.msra.mxu0 %v151
    %1578 = vmatmul.f32.gmra.mxu0 %v1535
    %v1579 = vpop.f32.mrf.mxu0
    %v1580 = vadd.f32 %v378, %v1579
    %1581 = vdwg.mxu0
    %1582 = vmatpush.msra.mxu0 %v197
    %1583 = vmatpush.msra.mxu0 %v194
    %1584 = vmatpush.msra.mxu0 %v191
    %1585 = vmatpush.msra.mxu0 %v188
    %1586 = vmatpush.msra.mxu0 %v185
    %1587 = vmatpush.msra.mxu0 %v182
    %1588 = vmatpush.msra.mxu0 %v179
    %1589 = vmatpush.msra.mxu0 %v176
    %1590 = vmatpush.msra.mxu0 %v173
    %1591 = vmatpush.msra.mxu0 %v170
    %1592 = vmatpush.msra.mxu0 %v167
    %1593 = vmatpush.msra.mxu0 %v164
    %1594 = vmatpush.msra.mxu0 %v161
    %1595 = vmatpush.msra.mxu0 %v158
    %1596 = vmatpush.msra.mxu0 %v155
    %1597 = vmatpush.msra.mxu0 %v152
    %1598 = vmatmul.f32.gmra.mxu0 %v1535
    %v1599 = vpop.f32.mrf.mxu0
    %v1600 = vadd.f32 %v379, %v1599
    %1601 = vdwg.mxu0
    %1602 = vmatpush.msra.mxu0 %v244
    %1603 = vmatpush.msra.mxu0 %v241
    %1604 = vmatpush.msra.mxu0 %v238
    %1605 = vmatpush.msra.mxu0 %v235
    %1606 = vmatpush.msra.mxu0 %v232
    %1607 = vmatpush.msra.mxu0 %v229
    %1608 = vmatpush.msra.mxu0 %v226
    %1609 = vmatpush.msra.mxu0 %v223
    %1610 = vmatpush.msra.mxu0 %v220
    %1611 = vmatpush.msra.mxu0 %v217
    %1612 = vmatpush.msra.mxu0 %v214
    %1613 = vmatpush.msra.mxu0 %v211
    %1614 = vmatpush.msra.mxu0 %v208
    %1615 = vmatpush.msra.mxu0 %v205
    %1616 = vmatpush.msra.mxu0 %v202
    %1617 = vmatpush.msra.mxu0 %v199
    %1618 = vmatmul.f32.gmra.mxu0 %v1421
    %v1619 = vpop.f32.mrf.mxu0
    %v1620 = vadd.f32 %v444, %v1619
    %1621 = vdwg.mxu0
    %1622 = vmatpush.msra.mxu0 %v245
    %1623 = vmatpush.msra.mxu0 %v242
    %1624 = vmatpush.msra.mxu0 %v239
    %1625 = vmatpush.msra.mxu0 %v236
    %1626 = vmatpush.msra.mxu0 %v233
    %1627 = vmatpush.msra.mxu0 %v230
    %1628 = vmatpush.msra.mxu0 %v227
    %1629 = vmatpush.msra.mxu0 %v224
    %1630 = vmatpush.msra.mxu0 %v221
    %1631 = vmatpush.msra.mxu0 %v218
    %1632 = vmatpush.msra.mxu0 %v215
    %1633 = vmatpush.msra.mxu0 %v212
    %1634 = vmatpush.msra.mxu0 %v209
    %1635 = vmatpush.msra.mxu0 %v206
    %1636 = vmatpush.msra.mxu0 %v203
    %1637 = vmatpush.msra.mxu0 %v200
    %1638 = vmatmul.f32.gmra.mxu0 %v1421
    %v1639 = vpop.f32.mrf.mxu0
    %v1640 = vadd.f32 %v445, %v1639
    %1641 = vdwg.mxu0
    %1642 = vmatpush.msra.mxu0 %v246
    %1643 = vmatpush.msra.mxu0 %v243
    %1644 = vmatpush.msra.mxu0 %v240
    %1645 = vmatpush.msra.mxu0 %v237
    %1646 = vmatpush.msra.mxu0 %v234
    %1647 = vmatpush.msra.mxu0 %v231
    %1648 = vmatpush.msra.mxu0 %v228
    %1649 = vmatpush.msra.mxu0 %v225
    %1650 = vmatpush.msra.mxu0 %v222
    %1651 = vmatpush.msra.mxu0 %v219
    %1652 = vmatpush.msra.mxu0 %v216
    %1653 = vmatpush.msra.mxu0 %v213
    %1654 = vmatpush.msra.mxu0 %v210
    %1655 = vmatpush.msra.mxu0 %v207
    %1656 = vmatpush.msra.mxu0 %v204
    %1657 = vmatpush.msra.mxu0 %v201
    %1658 = vmatmul.f32.gmra.mxu0 %v1421
    %v1659 = vpop.f32.mrf.mxu0
    %v1660 = vadd.f32 %v446, %v1659
    %1661 = vdwg.mxu0
    %v1662 = vadd.f32 %v1560, %v1620
    %v1663 = vxor.u32 %v1662, 2147483648
    %v1664 = vmul.f32 %v1663, 1.442695
    %v1665 = vpow.pop %v1664
    %v1666 = vadd.f32 %v1665, 1.0
    %v1667 = vrcp.pop %v1666
    %v1668 = vmul.f32 %v1666, %v1667
    %v1669 = vsub.f32 1.0, %v1668
    %v1670 = vmul.f32 %v1667, %v1669
    %v1671 = vadd.f32 %v1667, %v1670
    %vm1672 = vweird.f32 %v1666
    %vm1673 = vweird.f32 %v1667
    %vm1674 = vmor %vm1672, %vm1673
    %v1675 = vsel %vm1674, %v1667, %v1671
    %v1676 = vand.u32 2147483647, %v1666
    %vm1677 = vcmp.eq.f32.partialorder %v1676, 8.507059e+37
    %v1678 = vand.u32 %v1666, 2147483648
    %v1679 = vor.u32 1.1754944e-38, %v1678
    %v1680 = vsel %vm1677, %v1679, %v1675
    %v1681 = vmul.f32 1.0, %v1680
    %v1682 = vadd.f32 %v1580, %v1640
    %v1683 = vxor.u32 %v1682, 2147483648
    %v1684 = vmul.f32 %v1683, 1.442695
    %v1685 = vpow.pop %v1684
    %v1686 = vadd.f32 %v1685, 1.0
    %v1687 = vrcp.pop %v1686
    %v1688 = vmul.f32 %v1686, %v1687
    %v1689 = vsub.f32 1.0, %v1688
    %v1690 = vmul.f32 %v1687, %v1689
    %v1691 = vadd.f32 %v1687, %v1690
    %vm1692 = vweird.f32 %v1686
    %vm1693 = vweird.f32 %v1687
    %vm1694 = vmor %vm1692, %vm1693
    %v1695 = vsel %vm1694, %v1687, %v1691
    %v1696 = vand.u32 2147483647, %v1686
    %vm1697 = vcmp.eq.f32.partialorder %v1696, 8.507059e+37
    %v1698 = vand.u32 %v1686, 2147483648
    %v1699 = vor.u32 1.1754944e-38, %v1698
    %v1700 = vsel %vm1697, %v1699, %v1695
    %v1701 = vmul.f32 1.0, %v1700
    %v1702 = vmul.f32 %v1681, %v1660
    %v1703 = vadd.f32 %v1600, %v1702
    %v1704 = vtanh.pop %v1703
    %v1705 = vsub.f32 1.0, %v1701
    %v1706 = vmul.f32 %v1705, %v1704
    %v1707 = vmul.f32 %v1701, %v1421
    %v1708 = vadd.f32 %v1706, %v1707
    %v1709 = vsel %vm1540, %v1708, %v1421
    %s1710 = sadd.s32 %s100, 5
    %v1711 = vstv %s1710
    %vm1712 = vcmp.lt.s32.totalorder %v1711, %v99
    %s1713 = scalar_lea.vmem [#allocation3], 120
    %v1714 = vld [vmem:[%s1713] sm:$0xff]
    %v1715 = vld [vmem:[%s1713 + $0x8] sm:$0xff]
    %v1716 = vld [vmem:[%s1713 + $0x10] sm:$0xff]
    %1717 = vmatpush.msra.mxu0 %v146
    %1718 = vmatpush.msra.mxu0 %v143
    %1719 = vmatpush.msra.mxu0 %v140
    %1720 = vmatpush.msra.mxu0 %v137
    %1721 = vmatpush.msra.mxu0 %v134
    %1722 = vmatpush.msra.mxu0 %v131
    %1723 = vmatpush.msra.mxu0 %v128
    %1724 = vmatpush.msra.mxu0 %v125
    %1725 = vmatpush.msra.mxu0 %v122
    %1726 = vmatpush.msra.mxu0 %v119
    %1727 = vmatpush.msra.mxu0 %v116
    %1728 = vmatpush.msra.mxu0 %v113
    %1729 = vmatpush.msra.mxu0 %v110
    %1730 = vmatpush.msra.mxu0 %v107
    %1731 = vmatpush.msra.mxu0 %v104
    %1732 = vmatpush.msra.mxu0 %v101
    %1733 = vmatmul.f32.gmra.mxu0 %v1541
    %v1734 = vpop.f32.mrf.mxu0
    %v1735 = vadd.f32 %v257, %v1734
    %1736 = vdwg.mxu0
    %1737 = vmatpush.msra.mxu0 %v147
    %1738 = vmatpush.msra.mxu0 %v144
    %1739 = vmatpush.msra.mxu0 %v141
    %1740 = vmatpush.msra.mxu0 %v138
    %1741 = vmatpush.msra.mxu0 %v135
    %1742 = vmatpush.msra.mxu0 %v132
    %1743 = vmatpush.msra.mxu0 %v129
    %1744 = vmatpush.msra.mxu0 %v126
    %1745 = vmatpush.msra.mxu0 %v123
    %1746 = vmatpush.msra.mxu0 %v120
    %1747 = vmatpush.msra.mxu0 %v117
    %1748 = vmatpush.msra.mxu0 %v114
    %1749 = vmatpush.msra.mxu0 %v111
    %1750 = vmatpush.msra.mxu0 %v108
    %1751 = vmatpush.msra.mxu0 %v105
    %1752 = vmatpush.msra.mxu0 %v102
    %1753 = vmatmul.f32.gmra.mxu0 %v1541
    %v1754 = vpop.f32.mrf.mxu0
    %v1755 = vadd.f32 %v258, %v1754
    %1756 = vdwg.mxu0
    %1757 = vmatpush.msra.mxu0 %v148
    %1758 = vmatpush.msra.mxu0 %v145
    %1759 = vmatpush.msra.mxu0 %v142
    %1760 = vmatpush.msra.mxu0 %v139
    %1761 = vmatpush.msra.mxu0 %v136
    %1762 = vmatpush.msra.mxu0 %v133
    %1763 = vmatpush.msra.mxu0 %v130
    %1764 = vmatpush.msra.mxu0 %v127
    %1765 = vmatpush.msra.mxu0 %v124
    %1766 = vmatpush.msra.mxu0 %v121
    %1767 = vmatpush.msra.mxu0 %v118
    %1768 = vmatpush.msra.mxu0 %v115
    %1769 = vmatpush.msra.mxu0 %v112
    %1770 = vmatpush.msra.mxu0 %v109
    %1771 = vmatpush.msra.mxu0 %v106
    %1772 = vmatpush.msra.mxu0 %v103
    %1773 = vmatmul.f32.gmra.mxu0 %v1541
    %v1774 = vpop.f32.mrf.mxu0
    %v1775 = vadd.f32 %v259, %v1774
    %1776 = vdwg.mxu0
    %v1777 = vadd.f32 %v1714, %v1735
    %v1778 = vxor.u32 %v1777, 2147483648
    %v1779 = vmul.f32 %v1778, 1.442695
    %v1780 = vpow.pop %v1779
    %v1781 = vadd.f32 %v1780, 1.0
    %v1782 = vrcp.pop %v1781
    %v1783 = vmul.f32 %v1781, %v1782
    %v1784 = vsub.f32 1.0, %v1783
    %v1785 = vmul.f32 %v1782, %v1784
    %v1786 = vadd.f32 %v1782, %v1785
    %vm1787 = vweird.f32 %v1781
    %vm1788 = vweird.f32 %v1782
    %vm1789 = vmor %vm1787, %vm1788
    %v1790 = vsel %vm1789, %v1782, %v1786
    %v1791 = vand.u32 2147483647, %v1781
    %vm1792 = vcmp.eq.f32.partialorder %v1791, 8.507059e+37
    %v1793 = vand.u32 %v1781, 2147483648
    %v1794 = vor.u32 1.1754944e-38, %v1793
    %v1795 = vsel %vm1792, %v1794, %v1790
    %v1796 = vmul.f32 1.0, %v1795
    %v1797 = vadd.f32 %v1715, %v1755
    %v1798 = vxor.u32 %v1797, 2147483648
    %v1799 = vmul.f32 %v1798, 1.442695
    %v1800 = vpow.pop %v1799
    %v1801 = vadd.f32 %v1800, 1.0
    %v1802 = vrcp.pop %v1801
    %v1803 = vmul.f32 %v1801, %v1802
    %v1804 = vsub.f32 1.0, %v1803
    %v1805 = vmul.f32 %v1802, %v1804
    %v1806 = vadd.f32 %v1802, %v1805
    %vm1807 = vweird.f32 %v1801
    %vm1808 = vweird.f32 %v1802
    %vm1809 = vmor %vm1807, %vm1808
    %v1810 = vsel %vm1809, %v1802, %v1806
    %v1811 = vand.u32 2147483647, %v1801
    %vm1812 = vcmp.eq.f32.partialorder %v1811, 8.507059e+37
    %v1813 = vand.u32 %v1801, 2147483648
    %v1814 = vor.u32 1.1754944e-38, %v1813
    %v1815 = vsel %vm1812, %v1814, %v1810
    %v1816 = vmul.f32 1.0, %v1815
    %v1817 = vmul.f32 %v1796, %v1775
    %v1818 = vadd.f32 %v1716, %v1817
    %v1819 = vtanh.pop %v1818
    %v1820 = vsub.f32 1.0, %v1816
    %v1821 = vmul.f32 %v1820, %v1819
    %v1822 = vmul.f32 %v1816, %v1541
    %v1823 = vadd.f32 %v1821, %v1822
    %v1824 = vsel %vm1712, 1, 0
    %1825 = vset.pattern.permute.xlu0 0
    %1826 = vperm.xlu0 %1825, %v1824
    %v1827 = vpop.permute.xlu0 %1826
    %vm1828 = vcmp.eq.s32.totalorder %v1827, 1
    %v1829 = vsel %vm1828, %v1823, %v1541
    %1830 = vmatpush.msra.mxu0 %v195
    %1831 = vmatpush.msra.mxu0 %v192
    %1832 = vmatpush.msra.mxu0 %v189
    %1833 = vmatpush.msra.mxu0 %v186
    %1834 = vmatpush.msra.mxu0 %v183
    %1835 = vmatpush.msra.mxu0 %v180
    %1836 = vmatpush.msra.mxu0 %v177
    %1837 = vmatpush.msra.mxu0 %v174
    %1838 = vmatpush.msra.mxu0 %v171
    %1839 = vmatpush.msra.mxu0 %v168
    %1840 = vmatpush.msra.mxu0 %v165
    %1841 = vmatpush.msra.mxu0 %v162
    %1842 = vmatpush.msra.mxu0 %v159
    %1843 = vmatpush.msra.mxu0 %v156
    %1844 = vmatpush.msra.mxu0 %v153
    %1845 = vmatpush.msra.mxu0 %v150
    %1846 = vmatmul.f32.gmra.mxu0 %v1823
    %v1847 = vpop.f32.mrf.mxu0
    %v1848 = vadd.f32 %v377, %v1847
    %1849 = vdwg.mxu0
    %1850 = vmatpush.msra.mxu0 %v196
    %1851 = vmatpush.msra.mxu0 %v193
    %1852 = vmatpush.msra.mxu0 %v190
    %1853 = vmatpush.msra.mxu0 %v187
    %1854 = vmatpush.msra.mxu0 %v184
    %1855 = vmatpush.msra.mxu0 %v181
    %1856 = vmatpush.msra.mxu0 %v178
    %1857 = vmatpush.msra.mxu0 %v175
    %1858 = vmatpush.msra.mxu0 %v172
    %1859 = vmatpush.msra.mxu0 %v169
    %1860 = vmatpush.msra.mxu0 %v166
    %1861 = vmatpush.msra.mxu0 %v163
    %1862 = vmatpush.msra.mxu0 %v160
    %1863 = vmatpush.msra.mxu0 %v157
    %1864 = vmatpush.msra.mxu0 %v154
    %1865 = vmatpush.msra.mxu0 %v151
    %1866 = vmatmul.f32.gmra.mxu0 %v1823
    %v1867 = vpop.f32.mrf.mxu0
    %v1868 = vadd.f32 %v378, %v1867
    %1869 = vdwg.mxu0
    %1870 = vmatpush.msra.mxu0 %v197
    %1871 = vmatpush.msra.mxu0 %v194
    %1872 = vmatpush.msra.mxu0 %v191
    %1873 = vmatpush.msra.mxu0 %v188
    %1874 = vmatpush.msra.mxu0 %v185
    %1875 = vmatpush.msra.mxu0 %v182
    %1876 = vmatpush.msra.mxu0 %v179
    %1877 = vmatpush.msra.mxu0 %v176
    %1878 = vmatpush.msra.mxu0 %v173
    %1879 = vmatpush.msra.mxu0 %v170
    %1880 = vmatpush.msra.mxu0 %v167
    %1881 = vmatpush.msra.mxu0 %v164
    %1882 = vmatpush.msra.mxu0 %v161
    %1883 = vmatpush.msra.mxu0 %v158
    %1884 = vmatpush.msra.mxu0 %v155
    %1885 = vmatpush.msra.mxu0 %v152
    %1886 = vmatmul.f32.gmra.mxu0 %v1823
    %v1887 = vpop.f32.mrf.mxu0
    %v1888 = vadd.f32 %v379, %v1887
    %1889 = vdwg.mxu0
    %1890 = vmatpush.msra.mxu0 %v244
    %1891 = vmatpush.msra.mxu0 %v241
    %1892 = vmatpush.msra.mxu0 %v238
    %1893 = vmatpush.msra.mxu0 %v235
    %1894 = vmatpush.msra.mxu0 %v232
    %1895 = vmatpush.msra.mxu0 %v229
    %1896 = vmatpush.msra.mxu0 %v226
    %1897 = vmatpush.msra.mxu0 %v223
    %1898 = vmatpush.msra.mxu0 %v220
    %1899 = vmatpush.msra.mxu0 %v217
    %1900 = vmatpush.msra.mxu0 %v214
    %1901 = vmatpush.msra.mxu0 %v211
    %1902 = vmatpush.msra.mxu0 %v208
    %1903 = vmatpush.msra.mxu0 %v205
    %1904 = vmatpush.msra.mxu0 %v202
    %1905 = vmatpush.msra.mxu0 %v199
    %1906 = vmatmul.f32.gmra.mxu0 %v1709
    %v1907 = vpop.f32.mrf.mxu0
    %v1908 = vadd.f32 %v444, %v1907
    %1909 = vdwg.mxu0
    %1910 = vmatpush.msra.mxu0 %v245
    %1911 = vmatpush.msra.mxu0 %v242
    %1912 = vmatpush.msra.mxu0 %v239
    %1913 = vmatpush.msra.mxu0 %v236
    %1914 = vmatpush.msra.mxu0 %v233
    %1915 = vmatpush.msra.mxu0 %v230
    %1916 = vmatpush.msra.mxu0 %v227
    %1917 = vmatpush.msra.mxu0 %v224
    %1918 = vmatpush.msra.mxu0 %v221
    %1919 = vmatpush.msra.mxu0 %v218
    %1920 = vmatpush.msra.mxu0 %v215
    %1921 = vmatpush.msra.mxu0 %v212
    %1922 = vmatpush.msra.mxu0 %v209
    %1923 = vmatpush.msra.mxu0 %v206
    %1924 = vmatpush.msra.mxu0 %v203
    %1925 = vmatpush.msra.mxu0 %v200
    %1926 = vmatmul.f32.gmra.mxu0 %v1709
    %v1927 = vpop.f32.mrf.mxu0
    %v1928 = vadd.f32 %v445, %v1927
    %1929 = vdwg.mxu0
    %1930 = vmatpush.msra.mxu0 %v246
    %1931 = vmatpush.msra.mxu0 %v243
    %1932 = vmatpush.msra.mxu0 %v240
    %1933 = vmatpush.msra.mxu0 %v237
    %1934 = vmatpush.msra.mxu0 %v234
    %1935 = vmatpush.msra.mxu0 %v231
    %1936 = vmatpush.msra.mxu0 %v228
    %1937 = vmatpush.msra.mxu0 %v225
    %1938 = vmatpush.msra.mxu0 %v222
    %1939 = vmatpush.msra.mxu0 %v219
    %1940 = vmatpush.msra.mxu0 %v216
    %1941 = vmatpush.msra.mxu0 %v213
    %1942 = vmatpush.msra.mxu0 %v210
    %1943 = vmatpush.msra.mxu0 %v207
    %1944 = vmatpush.msra.mxu0 %v204
    %1945 = vmatpush.msra.mxu0 %v201
    %1946 = vmatmul.f32.gmra.mxu0 %v1709
    %v1947 = vpop.f32.mrf.mxu0
    %v1948 = vadd.f32 %v446, %v1947
    %1949 = vdwg.mxu0
    %v1950 = vadd.f32 %v1848, %v1908
    %v1951 = vxor.u32 %v1950, 2147483648
    %v1952 = vmul.f32 %v1951, 1.442695
    %v1953 = vpow.pop %v1952
    %v1954 = vadd.f32 %v1953, 1.0
    %v1955 = vrcp.pop %v1954
    %v1956 = vmul.f32 %v1954, %v1955
    %v1957 = vsub.f32 1.0, %v1956
    %v1958 = vmul.f32 %v1955, %v1957
    %v1959 = vadd.f32 %v1955, %v1958
    %vm1960 = vweird.f32 %v1954
    %vm1961 = vweird.f32 %v1955
    %vm1962 = vmor %vm1960, %vm1961
    %v1963 = vsel %vm1962, %v1955, %v1959
    %v1964 = vand.u32 2147483647, %v1954
    %vm1965 = vcmp.eq.f32.partialorder %v1964, 8.507059e+37
    %v1966 = vand.u32 %v1954, 2147483648
    %v1967 = vor.u32 1.1754944e-38, %v1966
    %v1968 = vsel %vm1965, %v1967, %v1963
    %v1969 = vmul.f32 1.0, %v1968
    %v1970 = vadd.f32 %v1868, %v1928
    %v1971 = vxor.u32 %v1970, 2147483648
    %v1972 = vmul.f32 %v1971, 1.442695
    %v1973 = vpow.pop %v1972
    %v1974 = vadd.f32 %v1973, 1.0
    %v1975 = vrcp.pop %v1974
    %v1976 = vmul.f32 %v1974, %v1975
    %v1977 = vsub.f32 1.0, %v1976
    %v1978 = vmul.f32 %v1975, %v1977
    %v1979 = vadd.f32 %v1975, %v1978
    %vm1980 = vweird.f32 %v1974
    %vm1981 = vweird.f32 %v1975
    %vm1982 = vmor %vm1980, %vm1981
    %v1983 = vsel %vm1982, %v1975, %v1979
    %v1984 = vand.u32 2147483647, %v1974
    %vm1985 = vcmp.eq.f32.partialorder %v1984, 8.507059e+37
    %v1986 = vand.u32 %v1974, 2147483648
    %v1987 = vor.u32 1.1754944e-38, %v1986
    %v1988 = vsel %vm1985, %v1987, %v1983
    %v1989 = vmul.f32 1.0, %v1988
    %v1990 = vmul.f32 %v1969, %v1948
    %v1991 = vadd.f32 %v1888, %v1990
    %v1992 = vtanh.pop %v1991
    %v1993 = vsub.f32 1.0, %v1989
    %v1994 = vmul.f32 %v1993, %v1992
    %v1995 = vmul.f32 %v1989, %v1709
    %v1996 = vadd.f32 %v1994, %v1995
    %v1997 = vsel %vm1828, %v1996, %v1709
    %s1998 = sadd.s32 %s100, 6
    %v1999 = vstv %s1998
    %vm2000 = vcmp.lt.s32.totalorder %v1999, %v99
    %s2001 = scalar_lea.vmem [#allocation3], 144
    %v2002 = vld [vmem:[%s2001] sm:$0xff]
    %v2003 = vld [vmem:[%s2001 + $0x8] sm:$0xff]
    %v2004 = vld [vmem:[%s2001 + $0x10] sm:$0xff]
    %2005 = vmatpush.msra.mxu0 %v146
    %2006 = vmatpush.msra.mxu0 %v143
    %2007 = vmatpush.msra.mxu0 %v140
    %2008 = vmatpush.msra.mxu0 %v137
    %2009 = vmatpush.msra.mxu0 %v134
    %2010 = vmatpush.msra.mxu0 %v131
    %2011 = vmatpush.msra.mxu0 %v128
    %2012 = vmatpush.msra.mxu0 %v125
    %2013 = vmatpush.msra.mxu0 %v122
    %2014 = vmatpush.msra.mxu0 %v119
    %2015 = vmatpush.msra.mxu0 %v116
    %2016 = vmatpush.msra.mxu0 %v113
    %2017 = vmatpush.msra.mxu0 %v110
    %2018 = vmatpush.msra.mxu0 %v107
    %2019 = vmatpush.msra.mxu0 %v104
    %2020 = vmatpush.msra.mxu0 %v101
    %2021 = vmatmul.f32.gmra.mxu0 %v1829
    %v2022 = vpop.f32.mrf.mxu0
    %v2023 = vadd.f32 %v257, %v2022
    %2024 = vdwg.mxu0
    %2025 = vmatpush.msra.mxu0 %v147
    %2026 = vmatpush.msra.mxu0 %v144
    %2027 = vmatpush.msra.mxu0 %v141
    %2028 = vmatpush.msra.mxu0 %v138
    %2029 = vmatpush.msra.mxu0 %v135
    %2030 = vmatpush.msra.mxu0 %v132
    %2031 = vmatpush.msra.mxu0 %v129
    %2032 = vmatpush.msra.mxu0 %v126
    %2033 = vmatpush.msra.mxu0 %v123
    %2034 = vmatpush.msra.mxu0 %v120
    %2035 = vmatpush.msra.mxu0 %v117
    %2036 = vmatpush.msra.mxu0 %v114
    %2037 = vmatpush.msra.mxu0 %v111
    %2038 = vmatpush.msra.mxu0 %v108
    %2039 = vmatpush.msra.mxu0 %v105
    %2040 = vmatpush.msra.mxu0 %v102
    %2041 = vmatmul.f32.gmra.mxu0 %v1829
    %v2042 = vpop.f32.mrf.mxu0
    %v2043 = vadd.f32 %v258, %v2042
    %2044 = vdwg.mxu0
    %2045 = vmatpush.msra.mxu0 %v148
    %2046 = vmatpush.msra.mxu0 %v145
    %2047 = vmatpush.msra.mxu0 %v142
    %2048 = vmatpush.msra.mxu0 %v139
    %2049 = vmatpush.msra.mxu0 %v136
    %2050 = vmatpush.msra.mxu0 %v133
    %2051 = vmatpush.msra.mxu0 %v130
    %2052 = vmatpush.msra.mxu0 %v127
    %2053 = vmatpush.msra.mxu0 %v124
    %2054 = vmatpush.msra.mxu0 %v121
    %2055 = vmatpush.msra.mxu0 %v118
    %2056 = vmatpush.msra.mxu0 %v115
    %2057 = vmatpush.msra.mxu0 %v112
    %2058 = vmatpush.msra.mxu0 %v109
    %2059 = vmatpush.msra.mxu0 %v106
    %2060 = vmatpush.msra.mxu0 %v103
    %2061 = vmatmul.f32.gmra.mxu0 %v1829
    %v2062 = vpop.f32.mrf.mxu0
    %v2063 = vadd.f32 %v259, %v2062
    %2064 = vdwg.mxu0
    %v2065 = vadd.f32 %v2002, %v2023
    %v2066 = vxor.u32 %v2065, 2147483648
    %v2067 = vmul.f32 %v2066, 1.442695
    %v2068 = vpow.pop %v2067
    %v2069 = vadd.f32 %v2068, 1.0
    %v2070 = vrcp.pop %v2069
    %v2071 = vmul.f32 %v2069, %v2070
    %v2072 = vsub.f32 1.0, %v2071
    %v2073 = vmul.f32 %v2070, %v2072
    %v2074 = vadd.f32 %v2070, %v2073
    %vm2075 = vweird.f32 %v2069
    %vm2076 = vweird.f32 %v2070
    %vm2077 = vmor %vm2075, %vm2076
    %v2078 = vsel %vm2077, %v2070, %v2074
    %v2079 = vand.u32 2147483647, %v2069
    %vm2080 = vcmp.eq.f32.partialorder %v2079, 8.507059e+37
    %v2081 = vand.u32 %v2069, 2147483648
    %v2082 = vor.u32 1.1754944e-38, %v2081
    %v2083 = vsel %vm2080, %v2082, %v2078
    %v2084 = vmul.f32 1.0, %v2083
    %v2085 = vadd.f32 %v2003, %v2043
    %v2086 = vxor.u32 %v2085, 2147483648
    %v2087 = vmul.f32 %v2086, 1.442695
    %v2088 = vpow.pop %v2087
    %v2089 = vadd.f32 %v2088, 1.0
    %v2090 = vrcp.pop %v2089
    %v2091 = vmul.f32 %v2089, %v2090
    %v2092 = vsub.f32 1.0, %v2091
    %v2093 = vmul.f32 %v2090, %v2092
    %v2094 = vadd.f32 %v2090, %v2093
    %vm2095 = vweird.f32 %v2089
    %vm2096 = vweird.f32 %v2090
    %vm2097 = vmor %vm2095, %vm2096
    %v2098 = vsel %vm2097, %v2090, %v2094
    %v2099 = vand.u32 2147483647, %v2089
    %vm2100 = vcmp.eq.f32.partialorder %v2099, 8.507059e+37
    %v2101 = vand.u32 %v2089, 2147483648
    %v2102 = vor.u32 1.1754944e-38, %v2101
    %v2103 = vsel %vm2100, %v2102, %v2098
    %v2104 = vmul.f32 1.0, %v2103
    %v2105 = vmul.f32 %v2084, %v2063
    %v2106 = vadd.f32 %v2004, %v2105
    %v2107 = vtanh.pop %v2106
    %v2108 = vsub.f32 1.0, %v2104
    %v2109 = vmul.f32 %v2108, %v2107
    %v2110 = vmul.f32 %v2104, %v1829
    %v2111 = vadd.f32 %v2109, %v2110
    %v2112 = vsel %vm2000, 1, 0
    %2113 = vset.pattern.permute.xlu0 0
    %2114 = vperm.xlu0 %2113, %v2112
    %v2115 = vpop.permute.xlu0 %2114
    %vm2116 = vcmp.eq.s32.totalorder %v2115, 1
    %v2117 = vsel %vm2116, %v2111, %v1829
    %2118 = vmatpush.msra.mxu0 %v195
    %2119 = vmatpush.msra.mxu0 %v192
    %2120 = vmatpush.msra.mxu0 %v189
    %2121 = vmatpush.msra.mxu0 %v186
    %2122 = vmatpush.msra.mxu0 %v183
    %2123 = vmatpush.msra.mxu0 %v180
    %2124 = vmatpush.msra.mxu0 %v177
    %2125 = vmatpush.msra.mxu0 %v174
    %2126 = vmatpush.msra.mxu0 %v171
    %2127 = vmatpush.msra.mxu0 %v168
    %2128 = vmatpush.msra.mxu0 %v165
    %2129 = vmatpush.msra.mxu0 %v162
    %2130 = vmatpush.msra.mxu0 %v159
    %2131 = vmatpush.msra.mxu0 %v156
    %2132 = vmatpush.msra.mxu0 %v153
    %2133 = vmatpush.msra.mxu0 %v150
    %2134 = vmatmul.f32.gmra.mxu0 %v2111
    %v2135 = vpop.f32.mrf.mxu0
    %v2136 = vadd.f32 %v377, %v2135
    %2137 = vdwg.mxu0
    %2138 = vmatpush.msra.mxu0 %v196
    %2139 = vmatpush.msra.mxu0 %v193
    %2140 = vmatpush.msra.mxu0 %v190
    %2141 = vmatpush.msra.mxu0 %v187
    %2142 = vmatpush.msra.mxu0 %v184
    %2143 = vmatpush.msra.mxu0 %v181
    %2144 = vmatpush.msra.mxu0 %v178
    %2145 = vmatpush.msra.mxu0 %v175
    %2146 = vmatpush.msra.mxu0 %v172
    %2147 = vmatpush.msra.mxu0 %v169
    %2148 = vmatpush.msra.mxu0 %v166
    %2149 = vmatpush.msra.mxu0 %v163
    %2150 = vmatpush.msra.mxu0 %v160
    %2151 = vmatpush.msra.mxu0 %v157
    %2152 = vmatpush.msra.mxu0 %v154
    %2153 = vmatpush.msra.mxu0 %v151
    %2154 = vmatmul.f32.gmra.mxu0 %v2111
    %v2155 = vpop.f32.mrf.mxu0
    %v2156 = vadd.f32 %v378, %v2155
    %2157 = vdwg.mxu0
    %2158 = vmatpush.msra.mxu0 %v197
    %2159 = vmatpush.msra.mxu0 %v194
    %2160 = vmatpush.msra.mxu0 %v191
    %2161 = vmatpush.msra.mxu0 %v188
    %2162 = vmatpush.msra.mxu0 %v185
    %2163 = vmatpush.msra.mxu0 %v182
    %2164 = vmatpush.msra.mxu0 %v179
    %2165 = vmatpush.msra.mxu0 %v176
    %2166 = vmatpush.msra.mxu0 %v173
    %2167 = vmatpush.msra.mxu0 %v170
    %2168 = vmatpush.msra.mxu0 %v167
    %2169 = vmatpush.msra.mxu0 %v164
    %2170 = vmatpush.msra.mxu0 %v161
    %2171 = vmatpush.msra.mxu0 %v158
    %2172 = vmatpush.msra.mxu0 %v155
    %2173 = vmatpush.msra.mxu0 %v152
    %2174 = vmatmul.f32.gmra.mxu0 %v2111
    %v2175 = vpop.f32.mrf.mxu0
    %v2176 = vadd.f32 %v379, %v2175
    %2177 = vdwg.mxu0
    %2178 = vmatpush.msra.mxu0 %v244
    %2179 = vmatpush.msra.mxu0 %v241
    %2180 = vmatpush.msra.mxu0 %v238
    %2181 = vmatpush.msra.mxu0 %v235
    %2182 = vmatpush.msra.mxu0 %v232
    %2183 = vmatpush.msra.mxu0 %v229
    %2184 = vmatpush.msra.mxu0 %v226
    %2185 = vmatpush.msra.mxu0 %v223
    %2186 = vmatpush.msra.mxu0 %v220
    %2187 = vmatpush.msra.mxu0 %v217
    %2188 = vmatpush.msra.mxu0 %v214
    %2189 = vmatpush.msra.mxu0 %v211
    %2190 = vmatpush.msra.mxu0 %v208
    %2191 = vmatpush.msra.mxu0 %v205
    %2192 = vmatpush.msra.mxu0 %v202
    %2193 = vmatpush.msra.mxu0 %v199
    %2194 = vmatmul.f32.gmra.mxu0 %v1997
    %v2195 = vpop.f32.mrf.mxu0
    %v2196 = vadd.f32 %v444, %v2195
    %2197 = vdwg.mxu0
    %2198 = vmatpush.msra.mxu0 %v245
    %2199 = vmatpush.msra.mxu0 %v242
    %2200 = vmatpush.msra.mxu0 %v239
    %2201 = vmatpush.msra.mxu0 %v236
    %2202 = vmatpush.msra.mxu0 %v233
    %2203 = vmatpush.msra.mxu0 %v230
    %2204 = vmatpush.msra.mxu0 %v227
    %2205 = vmatpush.msra.mxu0 %v224
    %2206 = vmatpush.msra.mxu0 %v221
    %2207 = vmatpush.msra.mxu0 %v218
    %2208 = vmatpush.msra.mxu0 %v215
    %2209 = vmatpush.msra.mxu0 %v212
    %2210 = vmatpush.msra.mxu0 %v209
    %2211 = vmatpush.msra.mxu0 %v206
    %2212 = vmatpush.msra.mxu0 %v203
    %2213 = vmatpush.msra.mxu0 %v200
    %2214 = vmatmul.f32.gmra.mxu0 %v1997
    %v2215 = vpop.f32.mrf.mxu0
    %v2216 = vadd.f32 %v445, %v2215
    %2217 = vdwg.mxu0
    %2218 = vmatpush.msra.mxu0 %v246
    %2219 = vmatpush.msra.mxu0 %v243
    %2220 = vmatpush.msra.mxu0 %v240
    %2221 = vmatpush.msra.mxu0 %v237
    %2222 = vmatpush.msra.mxu0 %v234
    %2223 = vmatpush.msra.mxu0 %v231
    %2224 = vmatpush.msra.mxu0 %v228
    %2225 = vmatpush.msra.mxu0 %v225
    %2226 = vmatpush.msra.mxu0 %v222
    %2227 = vmatpush.msra.mxu0 %v219
    %2228 = vmatpush.msra.mxu0 %v216
    %2229 = vmatpush.msra.mxu0 %v213
    %2230 = vmatpush.msra.mxu0 %v210
    %2231 = vmatpush.msra.mxu0 %v207
    %2232 = vmatpush.msra.mxu0 %v204
    %2233 = vmatpush.msra.mxu0 %v201
    %2234 = vmatmul.f32.gmra.mxu0 %v1997
    %v2235 = vpop.f32.mrf.mxu0
    %v2236 = vadd.f32 %v446, %v2235
    %2237 = vdwg.mxu0
    %v2238 = vadd.f32 %v2136, %v2196
    %v2239 = vxor.u32 %v2238, 2147483648
    %v2240 = vmul.f32 %v2239, 1.442695
    %v2241 = vpow.pop %v2240
    %v2242 = vadd.f32 %v2241, 1.0
    %v2243 = vrcp.pop %v2242
    %v2244 = vmul.f32 %v2242, %v2243
    %v2245 = vsub.f32 1.0, %v2244
    %v2246 = vmul.f32 %v2243, %v2245
    %v2247 = vadd.f32 %v2243, %v2246
    %vm2248 = vweird.f32 %v2242
    %vm2249 = vweird.f32 %v2243
    %vm2250 = vmor %vm2248, %vm2249
    %v2251 = vsel %vm2250, %v2243, %v2247
    %v2252 = vand.u32 2147483647, %v2242
    %vm2253 = vcmp.eq.f32.partialorder %v2252, 8.507059e+37
    %v2254 = vand.u32 %v2242, 2147483648
    %v2255 = vor.u32 1.1754944e-38, %v2254
    %v2256 = vsel %vm2253, %v2255, %v2251
    %v2257 = vmul.f32 1.0, %v2256
    %v2258 = vadd.f32 %v2156, %v2216
    %v2259 = vxor.u32 %v2258, 2147483648
    %v2260 = vmul.f32 %v2259, 1.442695
    %v2261 = vpow.pop %v2260
    %v2262 = vadd.f32 %v2261, 1.0
    %v2263 = vrcp.pop %v2262
    %v2264 = vmul.f32 %v2262, %v2263
    %v2265 = vsub.f32 1.0, %v2264
    %v2266 = vmul.f32 %v2263, %v2265
    %v2267 = vadd.f32 %v2263, %v2266
    %vm2268 = vweird.f32 %v2262
    %vm2269 = vweird.f32 %v2263
    %vm2270 = vmor %vm2268, %vm2269
    %v2271 = vsel %vm2270, %v2263, %v2267
    %v2272 = vand.u32 2147483647, %v2262
    %vm2273 = vcmp.eq.f32.partialorder %v2272, 8.507059e+37
    %v2274 = vand.u32 %v2262, 2147483648
    %v2275 = vor.u32 1.1754944e-38, %v2274
    %v2276 = vsel %vm2273, %v2275, %v2271
    %v2277 = vmul.f32 1.0, %v2276
    %v2278 = vmul.f32 %v2257, %v2236
    %v2279 = vadd.f32 %v2176, %v2278
    %v2280 = vtanh.pop %v2279
    %v2281 = vsub.f32 1.0, %v2277
    %v2282 = vmul.f32 %v2281, %v2280
    %v2283 = vmul.f32 %v2277, %v1997
    %v2284 = vadd.f32 %v2282, %v2283
    %v2285 = vsel %vm2116, %v2284, %v1997
    %s2286 = sadd.s32 %s100, 7
    %v2287 = vstv %s2286
    %vm2288 = vcmp.lt.s32.totalorder %v2287, %v99
    %s2289 = scalar_lea.vmem [#allocation3], 168
    %v2290 = vld [vmem:[%s2289] sm:$0xff]
    %v2291 = vld [vmem:[%s2289 + $0x8] sm:$0xff]
    %v2292 = vld [vmem:[%s2289 + $0x10] sm:$0xff]
    %2293 = vmatpush.msra.mxu0 %v146
    %2294 = vmatpush.msra.mxu0 %v143
    %2295 = vmatpush.msra.mxu0 %v140
    %2296 = vmatpush.msra.mxu0 %v137
    %2297 = vmatpush.msra.mxu0 %v134
    %2298 = vmatpush.msra.mxu0 %v131
    %2299 = vmatpush.msra.mxu0 %v128
    %2300 = vmatpush.msra.mxu0 %v125
    %2301 = vmatpush.msra.mxu0 %v122
    %2302 = vmatpush.msra.mxu0 %v119
    %2303 = vmatpush.msra.mxu0 %v116
    %2304 = vmatpush.msra.mxu0 %v113
    %2305 = vmatpush.msra.mxu0 %v110
    %2306 = vmatpush.msra.mxu0 %v107
    %2307 = vmatpush.msra.mxu0 %v104
    %2308 = vmatpush.msra.mxu0 %v101
    %2309 = vmatmul.f32.gmra.mxu0 %v2117
    %v2310 = vpop.f32.mrf.mxu0
    %v2311 = vadd.f32 %v257, %v2310
    %2312 = vdwg.mxu0
    %2313 = vmatpush.msra.mxu0 %v147
    %2314 = vmatpush.msra.mxu0 %v144
    %2315 = vmatpush.msra.mxu0 %v141
    %2316 = vmatpush.msra.mxu0 %v138
    %2317 = vmatpush.msra.mxu0 %v135
    %2318 = vmatpush.msra.mxu0 %v132
    %2319 = vmatpush.msra.mxu0 %v129
    %2320 = vmatpush.msra.mxu0 %v126
    %2321 = vmatpush.msra.mxu0 %v123
    %2322 = vmatpush.msra.mxu0 %v120
    %2323 = vmatpush.msra.mxu0 %v117
    %2324 = vmatpush.msra.mxu0 %v114
    %2325 = vmatpush.msra.mxu0 %v111
    %2326 = vmatpush.msra.mxu0 %v108
    %2327 = vmatpush.msra.mxu0 %v105
    %2328 = vmatpush.msra.mxu0 %v102
    %2329 = vmatmul.f32.gmra.mxu0 %v2117
    %v2330 = vpop.f32.mrf.mxu0
    %v2331 = vadd.f32 %v258, %v2330
    %2332 = vdwg.mxu0
    %2333 = vmatpush.msra.mxu0 %v148
    %2334 = vmatpush.msra.mxu0 %v145
    %2335 = vmatpush.msra.mxu0 %v142
    %2336 = vmatpush.msra.mxu0 %v139
    %2337 = vmatpush.msra.mxu0 %v136
    %2338 = vmatpush.msra.mxu0 %v133
    %2339 = vmatpush.msra.mxu0 %v130
    %2340 = vmatpush.msra.mxu0 %v127
    %2341 = vmatpush.msra.mxu0 %v124
    %2342 = vmatpush.msra.mxu0 %v121
    %2343 = vmatpush.msra.mxu0 %v118
    %2344 = vmatpush.msra.mxu0 %v115
    %2345 = vmatpush.msra.mxu0 %v112
    %2346 = vmatpush.msra.mxu0 %v109
    %2347 = vmatpush.msra.mxu0 %v106
    %2348 = vmatpush.msra.mxu0 %v103
    %2349 = vmatmul.f32.gmra.mxu0 %v2117
    %v2350 = vpop.f32.mrf.mxu0
    %v2351 = vadd.f32 %v259, %v2350
    %2352 = vdwg.mxu0
    %v2353 = vadd.f32 %v2290, %v2311
    %v2354 = vxor.u32 %v2353, 2147483648
    %v2355 = vmul.f32 %v2354, 1.442695
    %v2356 = vpow.pop %v2355
    %v2357 = vadd.f32 %v2356, 1.0
    %v2358 = vrcp.pop %v2357
    %v2359 = vmul.f32 %v2357, %v2358
    %v2360 = vsub.f32 1.0, %v2359
    %v2361 = vmul.f32 %v2358, %v2360
    %v2362 = vadd.f32 %v2358, %v2361
    %vm2363 = vweird.f32 %v2357
    %vm2364 = vweird.f32 %v2358
    %vm2365 = vmor %vm2363, %vm2364
    %v2366 = vsel %vm2365, %v2358, %v2362
    %v2367 = vand.u32 2147483647, %v2357
    %vm2368 = vcmp.eq.f32.partialorder %v2367, 8.507059e+37
    %v2369 = vand.u32 %v2357, 2147483648
    %v2370 = vor.u32 1.1754944e-38, %v2369
    %v2371 = vsel %vm2368, %v2370, %v2366
    %v2372 = vmul.f32 1.0, %v2371
    %v2373 = vadd.f32 %v2291, %v2331
    %v2374 = vxor.u32 %v2373, 2147483648
    %v2375 = vmul.f32 %v2374, 1.442695
    %v2376 = vpow.pop %v2375
    %v2377 = vadd.f32 %v2376, 1.0
    %v2378 = vrcp.pop %v2377
    %v2379 = vmul.f32 %v2377, %v2378
    %v2380 = vsub.f32 1.0, %v2379
    %v2381 = vmul.f32 %v2378, %v2380
    %v2382 = vadd.f32 %v2378, %v2381
    %vm2383 = vweird.f32 %v2377
    %vm2384 = vweird.f32 %v2378
    %vm2385 = vmor %vm2383, %vm2384
    %v2386 = vsel %vm2385, %v2378, %v2382
    %v2387 = vand.u32 2147483647, %v2377
    %vm2388 = vcmp.eq.f32.partialorder %v2387, 8.507059e+37
    %v2389 = vand.u32 %v2377, 2147483648
    %v2390 = vor.u32 1.1754944e-38, %v2389
    %v2391 = vsel %vm2388, %v2390, %v2386
    %v2392 = vmul.f32 1.0, %v2391
    %v2393 = vmul.f32 %v2372, %v2351
    %v2394 = vadd.f32 %v2292, %v2393
    %v2395 = vtanh.pop %v2394
    %v2396 = vsub.f32 1.0, %v2392
    %v2397 = vmul.f32 %v2396, %v2395
    %v2398 = vmul.f32 %v2392, %v2117
    %v2399 = vadd.f32 %v2397, %v2398
    %v2400 = vsel %vm2288, 1, 0
    %2401 = vset.pattern.permute.xlu0 0
    %2402 = vperm.xlu0 %2401, %v2400
    %v2403 = vpop.permute.xlu0 %2402
    %vm2404 = vcmp.eq.s32.totalorder %v2403, 1
    %v2405 = vsel %vm2404, %v2399, %v2117
    %2406 = vmatpush.msra.mxu0 %v195
    %2407 = vmatpush.msra.mxu0 %v192
    %2408 = vmatpush.msra.mxu0 %v189
    %2409 = vmatpush.msra.mxu0 %v186
    %2410 = vmatpush.msra.mxu0 %v183
    %2411 = vmatpush.msra.mxu0 %v180
    %2412 = vmatpush.msra.mxu0 %v177
    %2413 = vmatpush.msra.mxu0 %v174
    %2414 = vmatpush.msra.mxu0 %v171
    %2415 = vmatpush.msra.mxu0 %v168
    %2416 = vmatpush.msra.mxu0 %v165
    %2417 = vmatpush.msra.mxu0 %v162
    %2418 = vmatpush.msra.mxu0 %v159
    %2419 = vmatpush.msra.mxu0 %v156
    %2420 = vmatpush.msra.mxu0 %v153
    %2421 = vmatpush.msra.mxu0 %v150
    %2422 = vmatmul.f32.gmra.mxu0 %v2399
    %v2423 = vpop.f32.mrf.mxu0
    %v2424 = vadd.f32 %v377, %v2423
    %2425 = vdwg.mxu0
    %2426 = vmatpush.msra.mxu0 %v196
    %2427 = vmatpush.msra.mxu0 %v193
    %2428 = vmatpush.msra.mxu0 %v190
    %2429 = vmatpush.msra.mxu0 %v187
    %2430 = vmatpush.msra.mxu0 %v184
    %2431 = vmatpush.msra.mxu0 %v181
    %2432 = vmatpush.msra.mxu0 %v178
    %2433 = vmatpush.msra.mxu0 %v175
    %2434 = vmatpush.msra.mxu0 %v172
    %2435 = vmatpush.msra.mxu0 %v169
    %2436 = vmatpush.msra.mxu0 %v166
    %2437 = vmatpush.msra.mxu0 %v163
    %2438 = vmatpush.msra.mxu0 %v160
    %2439 = vmatpush.msra.mxu0 %v157
    %2440 = vmatpush.msra.mxu0 %v154
    %2441 = vmatpush.msra.mxu0 %v151
    %2442 = vmatmul.f32.gmra.mxu0 %v2399
    %v2443 = vpop.f32.mrf.mxu0
    %v2444 = vadd.f32 %v378, %v2443
    %2445 = vdwg.mxu0
    %2446 = vmatpush.msra.mxu0 %v197
    %2447 = vmatpush.msra.mxu0 %v194
    %2448 = vmatpush.msra.mxu0 %v191
    %2449 = vmatpush.msra.mxu0 %v188
    %2450 = vmatpush.msra.mxu0 %v185
    %2451 = vmatpush.msra.mxu0 %v182
    %2452 = vmatpush.msra.mxu0 %v179
    %2453 = vmatpush.msra.mxu0 %v176
    %2454 = vmatpush.msra.mxu0 %v173
    %2455 = vmatpush.msra.mxu0 %v170
    %2456 = vmatpush.msra.mxu0 %v167
    %2457 = vmatpush.msra.mxu0 %v164
    %2458 = vmatpush.msra.mxu0 %v161
    %2459 = vmatpush.msra.mxu0 %v158
    %2460 = vmatpush.msra.mxu0 %v155
    %2461 = vmatpush.msra.mxu0 %v152
    %2462 = vmatmul.f32.gmra.mxu0 %v2399
    %v2463 = vpop.f32.mrf.mxu0
    %v2464 = vadd.f32 %v379, %v2463
    %2465 = vdwg.mxu0
    %2466 = vmatpush.msra.mxu0 %v244
    %2467 = vmatpush.msra.mxu0 %v241
    %2468 = vmatpush.msra.mxu0 %v238
    %2469 = vmatpush.msra.mxu0 %v235
    %2470 = vmatpush.msra.mxu0 %v232
    %2471 = vmatpush.msra.mxu0 %v229
    %2472 = vmatpush.msra.mxu0 %v226
    %2473 = vmatpush.msra.mxu0 %v223
    %2474 = vmatpush.msra.mxu0 %v220
    %2475 = vmatpush.msra.mxu0 %v217
    %2476 = vmatpush.msra.mxu0 %v214
    %2477 = vmatpush.msra.mxu0 %v211
    %2478 = vmatpush.msra.mxu0 %v208
    %2479 = vmatpush.msra.mxu0 %v205
    %2480 = vmatpush.msra.mxu0 %v202
    %2481 = vmatpush.msra.mxu0 %v199
    %2482 = vmatmul.f32.gmra.mxu0 %v2285
    %v2483 = vpop.f32.mrf.mxu0
    %v2484 = vadd.f32 %v444, %v2483
    %2485 = vdwg.mxu0
    %2486 = vmatpush.msra.mxu0 %v245
    %2487 = vmatpush.msra.mxu0 %v242
    %2488 = vmatpush.msra.mxu0 %v239
    %2489 = vmatpush.msra.mxu0 %v236
    %2490 = vmatpush.msra.mxu0 %v233
    %2491 = vmatpush.msra.mxu0 %v230
    %2492 = vmatpush.msra.mxu0 %v227
    %2493 = vmatpush.msra.mxu0 %v224
    %2494 = vmatpush.msra.mxu0 %v221
    %2495 = vmatpush.msra.mxu0 %v218
    %2496 = vmatpush.msra.mxu0 %v215
    %2497 = vmatpush.msra.mxu0 %v212
    %2498 = vmatpush.msra.mxu0 %v209
    %2499 = vmatpush.msra.mxu0 %v206
    %2500 = vmatpush.msra.mxu0 %v203
    %2501 = vmatpush.msra.mxu0 %v200
    %2502 = vmatmul.f32.gmra.mxu0 %v2285
    %v2503 = vpop.f32.mrf.mxu0
    %v2504 = vadd.f32 %v445, %v2503
    %2505 = vdwg.mxu0
    %2506 = vmatpush.msra.mxu0 %v246
    %2507 = vmatpush.msra.mxu0 %v243
    %2508 = vmatpush.msra.mxu0 %v240
    %2509 = vmatpush.msra.mxu0 %v237
    %2510 = vmatpush.msra.mxu0 %v234
    %2511 = vmatpush.msra.mxu0 %v231
    %2512 = vmatpush.msra.mxu0 %v228
    %2513 = vmatpush.msra.mxu0 %v225
    %2514 = vmatpush.msra.mxu0 %v222
    %2515 = vmatpush.msra.mxu0 %v219
    %2516 = vmatpush.msra.mxu0 %v216
    %2517 = vmatpush.msra.mxu0 %v213
    %2518 = vmatpush.msra.mxu0 %v210
    %2519 = vmatpush.msra.mxu0 %v207
    %2520 = vmatpush.msra.mxu0 %v204
    %2521 = vmatpush.msra.mxu0 %v201
    %2522 = vmatmul.f32.gmra.mxu0 %v2285
    %v2523 = vpop.f32.mrf.mxu0
    %v2524 = vadd.f32 %v446, %v2523
    %2525 = vdwg.mxu0
    %v2526 = vadd.f32 %v2424, %v2484
    %v2527 = vxor.u32 %v2526, 2147483648
    %v2528 = vmul.f32 %v2527, 1.442695
    %v2529 = vpow.pop %v2528
    %v2530 = vadd.f32 %v2529, 1.0
    %v2531 = vrcp.pop %v2530
    %v2532 = vmul.f32 %v2530, %v2531
    %v2533 = vsub.f32 1.0, %v2532
    %v2534 = vmul.f32 %v2531, %v2533
    %v2535 = vadd.f32 %v2531, %v2534
    %vm2536 = vweird.f32 %v2530
    %vm2537 = vweird.f32 %v2531
    %vm2538 = vmor %vm2536, %vm2537
    %v2539 = vsel %vm2538, %v2531, %v2535
    %v2540 = vand.u32 2147483647, %v2530
    %vm2541 = vcmp.eq.f32.partialorder %v2540, 8.507059e+37
    %v2542 = vand.u32 %v2530, 2147483648
    %v2543 = vor.u32 1.1754944e-38, %v2542
    %v2544 = vsel %vm2541, %v2543, %v2539
    %v2545 = vmul.f32 1.0, %v2544
    %v2546 = vadd.f32 %v2444, %v2504
    %v2547 = vxor.u32 %v2546, 2147483648
    %v2548 = vmul.f32 %v2547, 1.442695
    %v2549 = vpow.pop %v2548
    %v2550 = vadd.f32 %v2549, 1.0
    %v2551 = vrcp.pop %v2550
    %v2552 = vmul.f32 %v2550, %v2551
    %v2553 = vsub.f32 1.0, %v2552
    %v2554 = vmul.f32 %v2551, %v2553
    %v2555 = vadd.f32 %v2551, %v2554
    %vm2556 = vweird.f32 %v2550
    %vm2557 = vweird.f32 %v2551
    %vm2558 = vmor %vm2556, %vm2557
    %v2559 = vsel %vm2558, %v2551, %v2555
    %v2560 = vand.u32 2147483647, %v2550
    %vm2561 = vcmp.eq.f32.partialorder %v2560, 8.507059e+37
    %v2562 = vand.u32 %v2550, 2147483648
    %v2563 = vor.u32 1.1754944e-38, %v2562
    %v2564 = vsel %vm2561, %v2563, %v2559
    %v2565 = vmul.f32 1.0, %v2564
    %v2566 = vmul.f32 %v2545, %v2524
    %v2567 = vadd.f32 %v2464, %v2566
    %v2568 = vtanh.pop %v2567
    %v2569 = vsub.f32 1.0, %v2565
    %v2570 = vmul.f32 %v2569, %v2568
    %v2571 = vmul.f32 %v2565, %v2285
    %v2572 = vadd.f32 %v2570, %v2571
    %v2573 = vsel %vm2404, %v2572, %v2285
    %2574 = vst [vmem:[#allocation2] sm:$0xff] %v2405
    %2575 = vst [vmem:[%s249] sm:$0xff] %v2573
    // Predicated region
    $region54: #{tpu_custom_call.1} parent=1 // pred_check
      %p2576 = pneg %p93
    $region55: #{tpu_custom_call.1} parent=1 // pred_check_branch
      %2578 = sbr.rel (%p2576) target = $region57
    $region56: #{tpu_custom_call.1} parent=1 // pred_region
      %v2579 = vmul.f32 %v2573, %v2573
      %2580 = vadd.xlane.f32.xlu0 %v2579
      %v2581 = vpop.xlane.xlu0 %2580
      %v2582 = vrsqrt.pop %v2581
      %v2583 = vmul.f32 %v2582, %v2581
      %v2584 = vmul.f32 %v2583, %v2582
      %v2585 = vmul.f32 0.5, %v2584
      %v2586 = vsub.f32 1.5, %v2585
      %v2587 = vmul.f32 %v2582, %v2586
      %vm2588 = vweird.f32 %v2581
      %vm2589 = vweird.f32 %v2582
      %vm2590 = vmor %vm2588, %vm2589
      %v2591 = vsel %vm2590, %v2582, %v2587
      %v2592 = vmul.f32 %v2573, %v2591
      %2593 = vst [vmem:[#allocation11] sm:$0xff] %v2592
    $region57: #{tpu_custom_call.1} parent=1 // pred_fallthru
      _
    // Predicated region
    $region58: #{tpu_custom_call.1} parent=1 // pred_check
      _
    $region59: #{tpu_custom_call.1} parent=1 // pred_check_branch
      %2595 = sbr.rel (0) target = $region61
    $region60: #{tpu_custom_call.1} parent=1 // pred_region
      %2597 = vsyncadd [#allocation5], 0
      %s2599 = sshll.u32 [#allocation11], 4
      %s2600 = int_to_ptr.vmem [resolvable:$true] %s2599
      %s2601 = sshll.u32 %s8, 4
      %s2602 = int_to_ptr.hbm [resolvable:$true] %s2601
      %2604 = dma.vmem_to_hbm [thread:$0]  %s2600, 128, %s2602, [#allocation5]
    $region61: #{tpu_custom_call.1} parent=1 // pred_fallthru
      _
    // Predicated region
    $region62: #{tpu_custom_call.1} parent=1 // pred_check
      _
    $region63: #{tpu_custom_call.1} parent=1 // pred_check_branch
      %2606 = sbr.rel (0) target = $region65
    $region64: #{tpu_custom_call.1} parent=1 // pred_region
      %2608 = dma.done [#allocation5], 128
    $region65: #{tpu_custom_call.1} parent=1 // pred_fallthru
      _
    %2609 = vsyncpa [#allocation4], 1
    %2610 = vsyncpa [#allocation7], 1
    %2611 = vsyncpa [#allocation10], 1
    %2612 = vsyncpa [#allocation5], 1

</llo_original>
